<compile_context>
chip_gen: v5e
topology: v5e:2x2
jax: 0.10.0
libtpu: 0.0.40
codegen_flags: <defaults>
</compile_context>

<pallas_src>
import jax
import jax.numpy as jnp
from jax.experimental import pallas as pl
from jax.experimental.pallas import tpu as pltpu

N_RES_BLOCKS = 6  # Q5 has rho_0 .. rho_5


# -----------------------------------------------------------------------------
# Kernel: one batch tile.  Full forward pass (h1 -> 6 residual blocks -> head)
# with every weight VMEM-resident; residual blocks fully unrolled.
# -----------------------------------------------------------------------------
def q5_kernel(x_ref, w1_ref, b1_ref, rw_ref, rb_ref, wo_ref, bo_ref, q_ref):
    # _h1: relu(x @ w1 + b1)
    h = jnp.dot(x_ref[...], w1_ref[...], preferred_element_type=jnp.float32)
    h = jnp.maximum(h + b1_ref[...], 0.0)                       # f32 (tb, f_p)

    rb_all = rb_ref[...]                                         # (2*NB, f_p) f32

    # 6 residual blocks, fully unrolled; weights stay resident in VMEM so there
    # is no per-block grid step / DMA boundary draining the MXU.
    for blk in range(N_RES_BLOCKS):
        wa = rw_ref[2 * blk]                                     # (f_p, f_p) bf16
        wb = rw_ref[2 * blk + 1]
        ba = rb_all[2 * blk:2 * blk + 1, :]                      # (1, f_p) f32
        bb = rb_all[2 * blk + 1:2 * blk + 2, :]
        t = jnp.dot(h.astype(jnp.bfloat16), wa,
                    preferred_element_type=jnp.float32)
        t = jnp.maximum(t + ba, 0.0)
        t = jnp.dot(t.astype(jnp.bfloat16), wb,
                    preferred_element_type=jnp.float32) + bb
        h = jnp.maximum(t + h, 0.0)

    # LinearOutput head (plain affine).
    q_ref[...] = (jnp.dot(h.astype(jnp.bfloat16), wo_ref[...],
                          preferred_element_type=jnp.float32) + bo_ref[...])


# -----------------------------------------------------------------------------
# Wrapper: padding, bf16 casting, BlockSpecs / grid, un-padding.
# -----------------------------------------------------------------------------
def _round_up(v, m):
    return (v + m - 1) // m * m


def _vmem_budget_bytes():
    try:
        cap = int(pltpu.get_tpu_info().vmem_capacity_bytes)
    except Exception:
        cap = 64 << 20
    headroom = max(8 << 20, cap // 8)   # ~8 MiB on v7x, ~16 MiB on v5e/v6e
    return max(cap - headroom, 32 << 20)


def q5_forward(state, params, action=None):
    """state: (B, 1, n_input) -> q: (B, n_output) float32
       (or (B,) gathered Q-values if `action` (B, 1) int is given)."""
    w1, b1, rw, rb, wo, bo = params
    x = jnp.squeeze(state, axis=1).astype(jnp.float32)
    B, n_in = x.shape
    n_feat = w1.shape[1]
    n_out = wo.shape[1]

    # --- padded (lane-dense) geometry ----------------------------------------
    n_in_p = _round_up(n_in, 128)
    f_p = _round_up(n_feat, 128)
    out_p = _round_up(n_out, 128)

    # Batch tiling: at least 128 rows to fill the MXU M dimension; if there is
    # only one (large) tile, split it so both v7x TensorCores get work.
    tb = 128 if B <= 128 else 256
    b_p = _round_up(B, tb)
    if b_p // tb == 1 and tb > 128:
        tb //= 2

    # --- pad + cast operands (zeros in padding keep the math exact) ----------
    x_p = jnp.pad(x, ((0, b_p - B), (0, n_in_p - n_in))).astype(jnp.bfloat16)
    w1_p = jnp.pad(w1, ((0, n_in_p - n_in), (0, f_p - n_feat))).astype(jnp.bfloat16)
    b1_p = jnp.pad(b1, (0, f_p - n_feat)).reshape(1, f_p).astype(jnp.float32)
    rw_p = jnp.pad(rw, ((0, 0), (0, 0), (0, f_p - n_feat),
                        (0, f_p - n_feat))).astype(jnp.bfloat16)
    rw_p = rw_p.reshape(2 * N_RES_BLOCKS, f_p, f_p)       # (blk,0/1) -> 2*blk+{0,1}
    rb_p = jnp.pad(rb, ((0, 0), (0, 0), (0, f_p - n_feat))).astype(jnp.float32)
    rb_p = rb_p.reshape(2 * N_RES_BLOCKS, f_p)
    wo_p = jnp.pad(wo, ((0, f_p - n_feat), (0, out_p - n_out))).astype(jnp.bfloat16)
    bo_p = jnp.pad(bo, (0, out_p - n_out)).reshape(1, out_p).astype(jnp.float32)

    # --- VMEM budget ----------------------------------------------------------
    weight_bytes = (n_in_p * f_p * 2 + f_p * 4
                    + 2 * N_RES_BLOCKS * (f_p * f_p * 2 + f_p * 4)
                    + f_p * out_p * 2 + out_p * 4)
    stream_bytes = 2 * (tb * n_in_p * 2 + tb * out_p * 4)   # double-buffered x / q
    temp_bytes = 4 * tb * f_p * 4                           # live h / t values
    budget = _vmem_budget_bytes()
    vmem_limit = min(max(int(1.3 * (weight_bytes + stream_bytes + temp_bytes))
                         + (4 << 20), 32 << 20), budget)
    # TODO(synk): fall back to a streaming per-block weight grid axis if the
    # resident weight set ever exceeds the VMEM budget (f_p >~ 1024 on v7x).

    grid = (b_p // tb,)

    def run(single_buffer_consts):
        const_kw = ({"pipeline_mode": pl.Buffered(1)}
                    if single_buffer_consts else {})
        return pl.pallas_call(
            q5_kernel,
            out_shape=jax.ShapeDtypeStruct((b_p, out_p), jnp.float32),
            grid_spec=pltpu.PrefetchScalarGridSpec(
                num_scalar_prefetch=0,
                grid=grid,
                in_specs=[
                    pl.BlockSpec((tb, n_in_p), lambda b: (b, 0)),              # x
                    pl.BlockSpec((n_in_p, f_p), lambda b: (0, 0), **const_kw), # w1
                    pl.BlockSpec((1, f_p), lambda b: (0, 0), **const_kw),      # b1
                    pl.BlockSpec((2 * N_RES_BLOCKS, f_p, f_p),
                                 lambda b: (0, 0, 0), **const_kw),             # res W
                    pl.BlockSpec((2 * N_RES_BLOCKS, f_p),
                                 lambda b: (0, 0), **const_kw),                # res b
                    pl.BlockSpec((f_p, out_p), lambda b: (0, 0), **const_kw),  # wo
                    pl.BlockSpec((1, out_p), lambda b: (0, 0), **const_kw),    # bo
                ],
                out_specs=pl.BlockSpec((tb, out_p), lambda b: (b, 0)),         # q
            ),
            compiler_params=pltpu.CompilerParams(
                dimension_semantics=("parallel",),
                vmem_limit_bytes=vmem_limit),
        )(x_p, w1_p, b1_p, rw_p, rb_p, wo_p, bo_p)

    try:
        q_pad = run(single_buffer_consts=True)
    except Exception:
        # Fallback for jax versions without Buffered(1) support on grid BlockSpecs.
        q_pad = run(single_buffer_consts=False)

    q = q_pad[:B, :n_out]
    if action is None:
        return q
    # TODO(synk): fold the action gather into the kernel via scalar prefetch.
    return jnp.squeeze(jnp.take_along_axis(q, action.astype(jnp.int32), axis=1))


# -----------------------------------------------------------------------------
# Deterministic parameter init (xavier_uniform weights, PyTorch-style biases).
# Residual weights packed as rw[block, 0/1, in, out]; biases rb[block, 0/1, F].
# -----------------------------------------------------------------------------
def _xavier_uniform(key, fan_in, fan_out, gain):
    limit = gain * jnp.sqrt(6.0 / (fan_in + fan_out))
    return jax.random.uniform(key, (fan_in, fan_out), jnp.float32, -limit, limit)


def _bias(key, fan_in, size):
    bound = 1.0 / jnp.sqrt(float(fan_in))
    return jax.random.uniform(key, (size,), jnp.float32, -bound, bound)


def init_q5_params(key, n_input, n_features, n_output):
    relu_gain = jnp.sqrt(2.0)  # nn.init.calculate_gain('relu')
    keys = jax.random.split(key, 4 + 4 * N_RES_BLOCKS)
    ki = iter(range(len(keys)))

    w1 = _xavier_uniform(keys[next(ki)], n_input, n_features, relu_gain)
    b1 = _bias(keys[next(ki)], n_input, n_features)

    rw, rb = [], []
    for _ in range(N_RES_BLOCKS):
        wa = _xavier_uniform(keys[next(ki)], n_features, n_features, relu_gain)
        ba = _bias(keys[next(ki)], n_features, n_features)
        wb = _xavier_uniform(keys[next(ki)], n_features, n_features, relu_gain)
        bb = _bias(keys[next(ki)], n_features, n_features)
        rw.append(jnp.stack([wa, wb]))
        rb.append(jnp.stack([ba, bb]))
    rw = jnp.stack(rw)   # (NB, 2, F, F)
    rb = jnp.stack(rb)   # (NB, 2, F)

    wo = _xavier_uniform(keys[next(ki)], n_features, n_output, 1.0)
    bo = _bias(keys[next(ki)], n_features, n_output)
    return (w1, b1, rw, rb, wo, bo)


# -----------------------------------------------------------------------------
# Pure-JAX reference (same bf16-operand / f32-accumulate numerics as the kernel).
# -----------------------------------------------------------------------------
def q5_reference(state, params):
    w1, b1, rw, rb, wo, bo = params
    x = jnp.squeeze(state, axis=1).astype(jnp.float32)

    def mm(a, w):
        return jnp.dot(a.astype(jnp.bfloat16), w.astype(jnp.bfloat16),
                       preferred_element_type=jnp.float32)

    h = jnp.maximum(mm(x, w1) + b1, 0.0)
    for i in range(N_RES_BLOCKS):
        t = jnp.maximum(mm(h, rw[i, 0]) + rb[i, 0], 0.0)
        t = mm(t, rw[i, 1]) + rb[i, 1]
        h = jnp.maximum(t + h, 0.0)
    return mm(h, wo) + bo


if __name__ == "__main__":
    key = jax.random.PRNGKey(0)
    k_state, k_params, k_action, k_state2 = jax.random.split(key, 4)

    B, n_input, n_features, n_output = 4, 8, 32, 5
    state = jax.random.normal(k_state, (B, 1, n_input), jnp.float32)
    params = init_q5_params(k_params, n_input, n_features, n_output)

    # Q-values (no action)
    q = jax.block_until_ready(q5_forward(state, params))
    q_ref = q5_reference(state, params)
    assert q.shape == (B, n_output)
    assert jnp.allclose(q, q_ref, atol=1e-2, rtol=1e-2), "mismatch vs reference"

    # Gathered Q(s, a) path
    action = jax.random.randint(k_action, (B, 1), 0, n_output)
    qa = jax.block_until_ready(q5_forward(state, params, action))
    qa_ref = jnp.squeeze(jnp.take_along_axis(q_ref, action, axis=1))
    assert qa.shape == (B,)
    assert jnp.allclose(qa, qa_ref, atol=1e-2, rtol=1e-2), "gather mismatch"

    # Multi-batch-tile path (grid > 1) with the same weights.
    B2 = 192
    state2 = jax.random.normal(k_state2, (B2, 1, n_input), jnp.float32)
    q2 = jax.block_until_ready(q5_forward(state2, params))
    q2_ref = q5_reference(state2, params)
    assert q2.shape == (B2, n_output)
    assert jnp.allclose(q2, q2_ref, atol=1e-2, rtol=1e-2), "multi-tile mismatch"

    print("KERNEL_OK")
</pallas_src>

<mosaic_0001>
module attributes {stable_mosaic.version = 11 : i64} {
  func.func @q5_kernel(%arg0: i32, %arg1: memref<128x128xbf16, #tpu.memory_space<vmem>>, %arg2: memref<128x128xbf16, #tpu.memory_space<vmem>>, %arg3: memref<1x128xf32, #tpu.memory_space<vmem>>, %arg4: memref<12x128x128xbf16, #tpu.memory_space<vmem>>, %arg5: memref<12x128xf32, #tpu.memory_space<vmem>>, %arg6: memref<128x128xbf16, #tpu.memory_space<vmem>>, %arg7: memref<1x128xf32, #tpu.memory_space<vmem>>, %arg8: memref<128x128xf32, #tpu.memory_space<vmem>>) attributes {dimension_semantics = [#tpu.dimension_semantics<parallel>], iteration_bounds = array<i64: 1>, scalar_prefetch = 0 : i64, scratch_operands = 0 : i64, tpu.core_type = #tpu.core_type<tc>, window_params = [{transform_indices = @transform_0, window_bounds = array<i64: 128, 128>}, {pipeline_mode = #tpu.pipeline_mode<synchronous>, transform_indices = @transform_1, window_bounds = array<i64: 128, 128>}, {pipeline_mode = #tpu.pipeline_mode<synchronous>, transform_indices = @transform_2, window_bounds = array<i64: 1, 128>}, {pipeline_mode = #tpu.pipeline_mode<synchronous>, transform_indices = @transform_3, window_bounds = array<i64: 12, 128, 128>}, {pipeline_mode = #tpu.pipeline_mode<synchronous>, transform_indices = @transform_4, window_bounds = array<i64: 12, 128>}, {pipeline_mode = #tpu.pipeline_mode<synchronous>, transform_indices = @transform_5, window_bounds = array<i64: 128, 128>}, {pipeline_mode = #tpu.pipeline_mode<synchronous>, transform_indices = @transform_6, window_bounds = array<i64: 1, 128>}, {transform_indices = @transform_7, window_bounds = array<i64: 128, 128>}]} {
    %c0 = arith.constant 0 : index
    %c0_0 = arith.constant 0 : index
    %0 = vector.load %arg1[%c0, %c0_0] : memref<128x128xbf16, #tpu.memory_space<vmem>>, vector<128x128xbf16>
    %c0_1 = arith.constant 0 : index
    %c0_2 = arith.constant 0 : index
    %1 = vector.load %arg2[%c0_1, %c0_2] : memref<128x128xbf16, #tpu.memory_space<vmem>>, vector<128x128xbf16>
    %cst = arith.constant dense<0.000000e+00> : vector<128x128xf32>
    %2 = tpu.matmul %0, %1, %cst {dimension_numbers = #tpu.dot_dimension_numbers<[1], [0], [0], [1], [0, 0, 1, 1], [], []>} : vector<128x128xbf16>, vector<128x128xbf16>, vector<128x128xf32> -> vector<128x128xf32>
    %c0_3 = arith.constant 0 : index
    %c0_4 = arith.constant 0 : index
    %3 = vector.load %arg3[%c0_3, %c0_4] : memref<1x128xf32, #tpu.memory_space<vmem>>, vector<1x128xf32>
    %4 = vector.broadcast %3 : vector<1x128xf32> to vector<128x128xf32>
    %5 = arith.addf %2, %4 : vector<128x128xf32>
    %cst_5 = arith.constant 0.000000e+00 : f32
    %6 = vector.broadcast %cst_5 : f32 to vector<128x128xf32>
    %7 = arith.maximumf %5, %6 : vector<128x128xf32>
    %c0_6 = arith.constant 0 : index
    %c0_7 = arith.constant 0 : index
    %8 = vector.load %arg5[%c0_6, %c0_7] : memref<12x128xf32, #tpu.memory_space<vmem>>, vector<12x128xf32>
    %c0_8 = arith.constant 0 : index
    %c0_9 = arith.constant 0 : index
    %c0_10 = arith.constant 0 : index
    %9 = vector.load %arg4[%c0_8, %c0_9, %c0_10] : memref<12x128x128xbf16, #tpu.memory_space<vmem>>, vector<1x128x128xbf16>
    %10 = vector.shape_cast %9 : vector<1x128x128xbf16> to vector<128x128xbf16>
    %c1 = arith.constant 1 : index
    %c0_11 = arith.constant 0 : index
    %c0_12 = arith.constant 0 : index
    %11 = vector.load %arg4[%c1, %c0_11, %c0_12] : memref<12x128x128xbf16, #tpu.memory_space<vmem>>, vector<1x128x128xbf16>
    %12 = vector.shape_cast %11 : vector<1x128x128xbf16> to vector<128x128xbf16>
    %13 = vector.extract_strided_slice %8 {offsets = [0, 0], sizes = [1, 128], strides = [1, 1]} : vector<12x128xf32> to vector<1x128xf32>
    %14 = vector.extract_strided_slice %8 {offsets = [1, 0], sizes = [1, 128], strides = [1, 1]} : vector<12x128xf32> to vector<1x128xf32>
    %15 = arith.truncf %7 : vector<128x128xf32> to vector<128x128xbf16>
    %cst_13 = arith.constant dense<0.000000e+00> : vector<128x128xf32>
    %16 = tpu.matmul %15, %10, %cst_13 {dimension_numbers = #tpu.dot_dimension_numbers<[1], [0], [0], [1], [0, 0, 1, 1], [], []>} : vector<128x128xbf16>, vector<128x128xbf16>, vector<128x128xf32> -> vector<128x128xf32>
    %17 = vector.broadcast %13 : vector<1x128xf32> to vector<128x128xf32>
    %18 = arith.addf %16, %17 : vector<128x128xf32>
    %cst_14 = arith.constant 0.000000e+00 : f32
    %19 = vector.broadcast %cst_14 : f32 to vector<128x128xf32>
    %20 = arith.maximumf %18, %19 : vector<128x128xf32>
    %21 = arith.truncf %20 : vector<128x128xf32> to vector<128x128xbf16>
    %cst_15 = arith.constant dense<0.000000e+00> : vector<128x128xf32>
    %22 = tpu.matmul %21, %12, %cst_15 {dimension_numbers = #tpu.dot_dimension_numbers<[1], [0], [0], [1], [0, 0, 1, 1], [], []>} : vector<128x128xbf16>, vector<128x128xbf16>, vector<128x128xf32> -> vector<128x128xf32>
    %23 = vector.broadcast %14 : vector<1x128xf32> to vector<128x128xf32>
    %24 = arith.addf %22, %23 : vector<128x128xf32>
    %25 = arith.addf %24, %7 : vector<128x128xf32>
    %cst_16 = arith.constant 0.000000e+00 : f32
    %26 = vector.broadcast %cst_16 : f32 to vector<128x128xf32>
    %27 = arith.maximumf %25, %26 : vector<128x128xf32>
    %c2 = arith.constant 2 : index
    %c0_17 = arith.constant 0 : index
    %c0_18 = arith.constant 0 : index
    %28 = vector.load %arg4[%c2, %c0_17, %c0_18] : memref<12x128x128xbf16, #tpu.memory_space<vmem>>, vector<1x128x128xbf16>
    %29 = vector.shape_cast %28 : vector<1x128x128xbf16> to vector<128x128xbf16>
    %c3 = arith.constant 3 : index
    %c0_19 = arith.constant 0 : index
    %c0_20 = arith.constant 0 : index
    %30 = vector.load %arg4[%c3, %c0_19, %c0_20] : memref<12x128x128xbf16, #tpu.memory_space<vmem>>, vector<1x128x128xbf16>
    %31 = vector.shape_cast %30 : vector<1x128x128xbf16> to vector<128x128xbf16>
    %32 = vector.extract_strided_slice %8 {offsets = [2, 0], sizes = [1, 128], strides = [1, 1]} : vector<12x128xf32> to vector<1x128xf32>
    %33 = vector.extract_strided_slice %8 {offsets = [3, 0], sizes = [1, 128], strides = [1, 1]} : vector<12x128xf32> to vector<1x128xf32>
    %34 = arith.truncf %27 : vector<128x128xf32> to vector<128x128xbf16>
    %cst_21 = arith.constant dense<0.000000e+00> : vector<128x128xf32>
    %35 = tpu.matmul %34, %29, %cst_21 {dimension_numbers = #tpu.dot_dimension_numbers<[1], [0], [0], [1], [0, 0, 1, 1], [], []>} : vector<128x128xbf16>, vector<128x128xbf16>, vector<128x128xf32> -> vector<128x128xf32>
    %36 = vector.broadcast %32 : vector<1x128xf32> to vector<128x128xf32>
    %37 = arith.addf %35, %36 : vector<128x128xf32>
    %cst_22 = arith.constant 0.000000e+00 : f32
    %38 = vector.broadcast %cst_22 : f32 to vector<128x128xf32>
    %39 = arith.maximumf %37, %38 : vector<128x128xf32>
    %40 = arith.truncf %39 : vector<128x128xf32> to vector<128x128xbf16>
    %cst_23 = arith.constant dense<0.000000e+00> : vector<128x128xf32>
    %41 = tpu.matmul %40, %31, %cst_23 {dimension_numbers = #tpu.dot_dimension_numbers<[1], [0], [0], [1], [0, 0, 1, 1], [], []>} : vector<128x128xbf16>, vector<128x128xbf16>, vector<128x128xf32> -> vector<128x128xf32>
    %42 = vector.broadcast %33 : vector<1x128xf32> to vector<128x128xf32>
    %43 = arith.addf %41, %42 : vector<128x128xf32>
    %44 = arith.addf %43, %27 : vector<128x128xf32>
    %cst_24 = arith.constant 0.000000e+00 : f32
    %45 = vector.broadcast %cst_24 : f32 to vector<128x128xf32>
    %46 = arith.maximumf %44, %45 : vector<128x128xf32>
    %c4 = arith.constant 4 : index
    %c0_25 = arith.constant 0 : index
    %c0_26 = arith.constant 0 : index
    %47 = vector.load %arg4[%c4, %c0_25, %c0_26] : memref<12x128x128xbf16, #tpu.memory_space<vmem>>, vector<1x128x128xbf16>
    %48 = vector.shape_cast %47 : vector<1x128x128xbf16> to vector<128x128xbf16>
    %c5 = arith.constant 5 : index
    %c0_27 = arith.constant 0 : index
    %c0_28 = arith.constant 0 : index
    %49 = vector.load %arg4[%c5, %c0_27, %c0_28] : memref<12x128x128xbf16, #tpu.memory_space<vmem>>, vector<1x128x128xbf16>
    %50 = vector.shape_cast %49 : vector<1x128x128xbf16> to vector<128x128xbf16>
    %51 = vector.extract_strided_slice %8 {offsets = [4, 0], sizes = [1, 128], strides = [1, 1]} : vector<12x128xf32> to vector<1x128xf32>
    %52 = vector.extract_strided_slice %8 {offsets = [5, 0], sizes = [1, 128], strides = [1, 1]} : vector<12x128xf32> to vector<1x128xf32>
    %53 = arith.truncf %46 : vector<128x128xf32> to vector<128x128xbf16>
    %cst_29 = arith.constant dense<0.000000e+00> : vector<128x128xf32>
    %54 = tpu.matmul %53, %48, %cst_29 {dimension_numbers = #tpu.dot_dimension_numbers<[1], [0], [0], [1], [0, 0, 1, 1], [], []>} : vector<128x128xbf16>, vector<128x128xbf16>, vector<128x128xf32> -> vector<128x128xf32>
    %55 = vector.broadcast %51 : vector<1x128xf32> to vector<128x128xf32>
    %56 = arith.addf %54, %55 : vector<128x128xf32>
    %cst_30 = arith.constant 0.000000e+00 : f32
    %57 = vector.broadcast %cst_30 : f32 to vector<128x128xf32>
    %58 = arith.maximumf %56, %57 : vector<128x128xf32>
    %59 = arith.truncf %58 : vector<128x128xf32> to vector<128x128xbf16>
    %cst_31 = arith.constant dense<0.000000e+00> : vector<128x128xf32>
    %60 = tpu.matmul %59, %50, %cst_31 {dimension_numbers = #tpu.dot_dimension_numbers<[1], [0], [0], [1], [0, 0, 1, 1], [], []>} : vector<128x128xbf16>, vector<128x128xbf16>, vector<128x128xf32> -> vector<128x128xf32>
    %61 = vector.broadcast %52 : vector<1x128xf32> to vector<128x128xf32>
    %62 = arith.addf %60, %61 : vector<128x128xf32>
    %63 = arith.addf %62, %46 : vector<128x128xf32>
    %cst_32 = arith.constant 0.000000e+00 : f32
    %64 = vector.broadcast %cst_32 : f32 to vector<128x128xf32>
    %65 = arith.maximumf %63, %64 : vector<128x128xf32>
    %c6 = arith.constant 6 : index
    %c0_33 = arith.constant 0 : index
    %c0_34 = arith.constant 0 : index
    %66 = vector.load %arg4[%c6, %c0_33, %c0_34] : memref<12x128x128xbf16, #tpu.memory_space<vmem>>, vector<1x128x128xbf16>
    %67 = vector.shape_cast %66 : vector<1x128x128xbf16> to vector<128x128xbf16>
    %c7 = arith.constant 7 : index
    %c0_35 = arith.constant 0 : index
    %c0_36 = arith.constant 0 : index
    %68 = vector.load %arg4[%c7, %c0_35, %c0_36] : memref<12x128x128xbf16, #tpu.memory_space<vmem>>, vector<1x128x128xbf16>
    %69 = vector.shape_cast %68 : vector<1x128x128xbf16> to vector<128x128xbf16>
    %70 = vector.extract_strided_slice %8 {offsets = [6, 0], sizes = [1, 128], strides = [1, 1]} : vector<12x128xf32> to vector<1x128xf32>
    %71 = vector.extract_strided_slice %8 {offsets = [7, 0], sizes = [1, 128], strides = [1, 1]} : vector<12x128xf32> to vector<1x128xf32>
    %72 = arith.truncf %65 : vector<128x128xf32> to vector<128x128xbf16>
    %cst_37 = arith.constant dense<0.000000e+00> : vector<128x128xf32>
    %73 = tpu.matmul %72, %67, %cst_37 {dimension_numbers = #tpu.dot_dimension_numbers<[1], [0], [0], [1], [0, 0, 1, 1], [], []>} : vector<128x128xbf16>, vector<128x128xbf16>, vector<128x128xf32> -> vector<128x128xf32>
    %74 = vector.broadcast %70 : vector<1x128xf32> to vector<128x128xf32>
    %75 = arith.addf %73, %74 : vector<128x128xf32>
    %cst_38 = arith.constant 0.000000e+00 : f32
    %76 = vector.broadcast %cst_38 : f32 to vector<128x128xf32>
    %77 = arith.maximumf %75, %76 : vector<128x128xf32>
    %78 = arith.truncf %77 : vector<128x128xf32> to vector<128x128xbf16>
    %cst_39 = arith.constant dense<0.000000e+00> : vector<128x128xf32>
    %79 = tpu.matmul %78, %69, %cst_39 {dimension_numbers = #tpu.dot_dimension_numbers<[1], [0], [0], [1], [0, 0, 1, 1], [], []>} : vector<128x128xbf16>, vector<128x128xbf16>, vector<128x128xf32> -> vector<128x128xf32>
    %80 = vector.broadcast %71 : vector<1x128xf32> to vector<128x128xf32>
    %81 = arith.addf %79, %80 : vector<128x128xf32>
    %82 = arith.addf %81, %65 : vector<128x128xf32>
    %cst_40 = arith.constant 0.000000e+00 : f32
    %83 = vector.broadcast %cst_40 : f32 to vector<128x128xf32>
    %84 = arith.maximumf %82, %83 : vector<128x128xf32>
    %c8 = arith.constant 8 : index
    %c0_41 = arith.constant 0 : index
    %c0_42 = arith.constant 0 : index
    %85 = vector.load %arg4[%c8, %c0_41, %c0_42] : memref<12x128x128xbf16, #tpu.memory_space<vmem>>, vector<1x128x128xbf16>
    %86 = vector.shape_cast %85 : vector<1x128x128xbf16> to vector<128x128xbf16>
    %c9 = arith.constant 9 : index
    %c0_43 = arith.constant 0 : index
    %c0_44 = arith.constant 0 : index
    %87 = vector.load %arg4[%c9, %c0_43, %c0_44] : memref<12x128x128xbf16, #tpu.memory_space<vmem>>, vector<1x128x128xbf16>
    %88 = vector.shape_cast %87 : vector<1x128x128xbf16> to vector<128x128xbf16>
    %89 = vector.extract_strided_slice %8 {offsets = [8, 0], sizes = [1, 128], strides = [1, 1]} : vector<12x128xf32> to vector<1x128xf32>
    %90 = vector.extract_strided_slice %8 {offsets = [9, 0], sizes = [1, 128], strides = [1, 1]} : vector<12x128xf32> to vector<1x128xf32>
    %91 = arith.truncf %84 : vector<128x128xf32> to vector<128x128xbf16>
    %cst_45 = arith.constant dense<0.000000e+00> : vector<128x128xf32>
    %92 = tpu.matmul %91, %86, %cst_45 {dimension_numbers = #tpu.dot_dimension_numbers<[1], [0], [0], [1], [0, 0, 1, 1], [], []>} : vector<128x128xbf16>, vector<128x128xbf16>, vector<128x128xf32> -> vector<128x128xf32>
    %93 = vector.broadcast %89 : vector<1x128xf32> to vector<128x128xf32>
    %94 = arith.addf %92, %93 : vector<128x128xf32>
    %cst_46 = arith.constant 0.000000e+00 : f32
    %95 = vector.broadcast %cst_46 : f32 to vector<128x128xf32>
    %96 = arith.maximumf %94, %95 : vector<128x128xf32>
    %97 = arith.truncf %96 : vector<128x128xf32> to vector<128x128xbf16>
    %cst_47 = arith.constant dense<0.000000e+00> : vector<128x128xf32>
    %98 = tpu.matmul %97, %88, %cst_47 {dimension_numbers = #tpu.dot_dimension_numbers<[1], [0], [0], [1], [0, 0, 1, 1], [], []>} : vector<128x128xbf16>, vector<128x128xbf16>, vector<128x128xf32> -> vector<128x128xf32>
    %99 = vector.broadcast %90 : vector<1x128xf32> to vector<128x128xf32>
    %100 = arith.addf %98, %99 : vector<128x128xf32>
    %101 = arith.addf %100, %84 : vector<128x128xf32>
    %cst_48 = arith.constant 0.000000e+00 : f32
    %102 = vector.broadcast %cst_48 : f32 to vector<128x128xf32>
    %103 = arith.maximumf %101, %102 : vector<128x128xf32>
    %c10 = arith.constant 10 : index
    %c0_49 = arith.constant 0 : index
    %c0_50 = arith.constant 0 : index
    %104 = vector.load %arg4[%c10, %c0_49, %c0_50] : memref<12x128x128xbf16, #tpu.memory_space<vmem>>, vector<1x128x128xbf16>
    %105 = vector.shape_cast %104 : vector<1x128x128xbf16> to vector<128x128xbf16>
    %c11 = arith.constant 11 : index
    %c0_51 = arith.constant 0 : index
    %c0_52 = arith.constant 0 : index
    %106 = vector.load %arg4[%c11, %c0_51, %c0_52] : memref<12x128x128xbf16, #tpu.memory_space<vmem>>, vector<1x128x128xbf16>
    %107 = vector.shape_cast %106 : vector<1x128x128xbf16> to vector<128x128xbf16>
    %108 = vector.extract_strided_slice %8 {offsets = [10, 0], sizes = [1, 128], strides = [1, 1]} : vector<12x128xf32> to vector<1x128xf32>
    %109 = vector.extract_strided_slice %8 {offsets = [11, 0], sizes = [1, 128], strides = [1, 1]} : vector<12x128xf32> to vector<1x128xf32>
    %110 = arith.truncf %103 : vector<128x128xf32> to vector<128x128xbf16>
    %cst_53 = arith.constant dense<0.000000e+00> : vector<128x128xf32>
    %111 = tpu.matmul %110, %105, %cst_53 {dimension_numbers = #tpu.dot_dimension_numbers<[1], [0], [0], [1], [0, 0, 1, 1], [], []>} : vector<128x128xbf16>, vector<128x128xbf16>, vector<128x128xf32> -> vector<128x128xf32>
    %112 = vector.broadcast %108 : vector<1x128xf32> to vector<128x128xf32>
    %113 = arith.addf %111, %112 : vector<128x128xf32>
    %cst_54 = arith.constant 0.000000e+00 : f32
    %114 = vector.broadcast %cst_54 : f32 to vector<128x128xf32>
    %115 = arith.maximumf %113, %114 : vector<128x128xf32>
    %116 = arith.truncf %115 : vector<128x128xf32> to vector<128x128xbf16>
    %cst_55 = arith.constant dense<0.000000e+00> : vector<128x128xf32>
    %117 = tpu.matmul %116, %107, %cst_55 {dimension_numbers = #tpu.dot_dimension_numbers<[1], [0], [0], [1], [0, 0, 1, 1], [], []>} : vector<128x128xbf16>, vector<128x128xbf16>, vector<128x128xf32> -> vector<128x128xf32>
    %118 = vector.broadcast %109 : vector<1x128xf32> to vector<128x128xf32>
    %119 = arith.addf %117, %118 : vector<128x128xf32>
    %120 = arith.addf %119, %103 : vector<128x128xf32>
    %cst_56 = arith.constant 0.000000e+00 : f32
    %121 = vector.broadcast %cst_56 : f32 to vector<128x128xf32>
    %122 = arith.maximumf %120, %121 : vector<128x128xf32>
    %123 = arith.truncf %122 : vector<128x128xf32> to vector<128x128xbf16>
    %c0_57 = arith.constant 0 : index
    %c0_58 = arith.constant 0 : index
    %124 = vector.load %arg6[%c0_57, %c0_58] : memref<128x128xbf16, #tpu.memory_space<vmem>>, vector<128x128xbf16>
    %cst_59 = arith.constant dense<0.000000e+00> : vector<128x128xf32>
    %125 = tpu.matmul %123, %124, %cst_59 {dimension_numbers = #tpu.dot_dimension_numbers<[1], [0], [0], [1], [0, 0, 1, 1], [], []>} : vector<128x128xbf16>, vector<128x128xbf16>, vector<128x128xf32> -> vector<128x128xf32>
    %c0_60 = arith.constant 0 : index
    %c0_61 = arith.constant 0 : index
    %126 = vector.load %arg7[%c0_60, %c0_61] : memref<1x128xf32, #tpu.memory_space<vmem>>, vector<1x128xf32>
    %127 = vector.broadcast %126 : vector<1x128xf32> to vector<128x128xf32>
    %128 = arith.addf %125, %127 : vector<128x128xf32>
    %c0_62 = arith.constant 0 : index
    %c0_63 = arith.constant 0 : index
    %129 = vector.load %arg8[%c0_62, %c0_63] : memref<128x128xf32, #tpu.memory_space<vmem>>, vector<128x128xf32>
    tpu.vector_store %arg8[%c0_62, %c0_63], %128 {strides = array<i32>} : memref<128x128xf32, #tpu.memory_space<vmem>>, vector<128x128xf32>,
    return
  }
  func.func @transform_0(%arg0: i32) -> (i32, i32) {
    %c0_i32 = arith.constant 0 : i32
    %c0_i32_0 = arith.constant 0 : i32
    return %arg0, %c0_i32 : i32, i32
  }
  func.func @transform_1(%arg0: i32) -> (i32, i32) {
    %c0_i32 = arith.constant 0 : i32
    %c0_i32_0 = arith.constant 0 : i32
    %c0_i32_1 = arith.constant 0 : i32
    return %c0_i32, %c0_i32_0 : i32, i32
  }
  func.func @transform_2(%arg0: i32) -> (i32, i32) {
    %c0_i32 = arith.constant 0 : i32
    %c0_i32_0 = arith.constant 0 : i32
    %c0_i32_1 = arith.constant 0 : i32
    return %c0_i32, %c0_i32_0 : i32, i32
  }
  func.func @transform_3(%arg0: i32) -> (i32, i32, i32) {
    %c0_i32 = arith.constant 0 : i32
    %c0_i32_0 = arith.constant 0 : i32
    %c0_i32_1 = arith.constant 0 : i32
    %c0_i32_2 = arith.constant 0 : i32
    return %c0_i32, %c0_i32_0, %c0_i32_1 : i32, i32, i32
  }
  func.func @transform_4(%arg0: i32) -> (i32, i32) {
    %c0_i32 = arith.constant 0 : i32
    %c0_i32_0 = arith.constant 0 : i32
    %c0_i32_1 = arith.constant 0 : i32
    return %c0_i32, %c0_i32_0 : i32, i32
  }
  func.func @transform_5(%arg0: i32) -> (i32, i32) {
    %c0_i32 = arith.constant 0 : i32
    %c0_i32_0 = arith.constant 0 : i32
    %c0_i32_1 = arith.constant 0 : i32
    return %c0_i32, %c0_i32_0 : i32, i32
  }
  func.func @transform_6(%arg0: i32) -> (i32, i32) {
    %c0_i32 = arith.constant 0 : i32
    %c0_i32_0 = arith.constant 0 : i32
    %c0_i32_1 = arith.constant 0 : i32
    return %c0_i32, %c0_i32_0 : i32, i32
  }
  func.func @transform_7(%arg0: i32) -> (i32, i32) {
    %c0_i32 = arith.constant 0 : i32
    %c0_i32_0 = arith.constant 0 : i32
    return %arg0, %c0_i32 : i32, i32
  }
}

module attributes {stable_mosaic.version = 11 : i64} {
  func.func @q5_kernel(%arg0: i32, %arg1: memref<128x128xbf16, #tpu.memory_space<vmem>>, %arg2: memref<128x128xbf16, #tpu.memory_space<vmem>>, %arg3: memref<1x128xf32, #tpu.memory_space<vmem>>, %arg4: memref<12x128x128xbf16, #tpu.memory_space<vmem>>, %arg5: memref<12x128xf32, #tpu.memory_space<vmem>>, %arg6: memref<128x128xbf16, #tpu.memory_space<vmem>>, %arg7: memref<1x128xf32, #tpu.memory_space<vmem>>, %arg8: memref<128x128xf32, #tpu.memory_space<vmem>>) attributes {dimension_semantics = [#tpu.dimension_semantics<parallel>], iteration_bounds = array<i64: 1>, scalar_prefetch = 0 : i64, scratch_operands = 0 : i64, tpu.core_type = #tpu.core_type<tc>, window_params = [{transform_indices = @transform_0, window_bounds = array<i64: 128, 128>}, {pipeline_mode = #tpu.pipeline_mode<synchronous>, transform_indices = @transform_1, window_bounds = array<i64: 128, 128>}, {pipeline_mode = #tpu.pipeline_mode<synchronous>, transform_indices = @transform_2, window_bounds = array<i64: 1, 128>}, {pipeline_mode = #tpu.pipeline_mode<synchronous>, transform_indices = @transform_3, window_bounds = array<i64: 12, 128, 128>}, {pipeline_mode = #tpu.pipeline_mode<synchronous>, transform_indices = @transform_4, window_bounds = array<i64: 12, 128>}, {pipeline_mode = #tpu.pipeline_mode<synchronous>, transform_indices = @transform_5, window_bounds = array<i64: 128, 128>}, {pipeline_mode = #tpu.pipeline_mode<synchronous>, transform_indices = @transform_6, window_bounds = array<i64: 1, 128>}, {transform_indices = @transform_7, window_bounds = array<i64: 128, 128>}]} {
    %c0 = arith.constant 0 : index
    %c0_0 = arith.constant 0 : index
    %0 = vector.load %arg1[%c0, %c0_0] : memref<128x128xbf16, #tpu.memory_space<vmem>>, vector<128x128xbf16>
    %c0_1 = arith.constant 0 : index
    %c0_2 = arith.constant 0 : index
    %1 = vector.load %arg2[%c0_1, %c0_2] : memref<128x128xbf16, #tpu.memory_space<vmem>>, vector<128x128xbf16>
    %cst = arith.constant dense<0.000000e+00> : vector<128x128xf32>
    %2 = tpu.matmul %0, %1, %cst {dimension_numbers = #tpu.dot_dimension_numbers<[1], [0], [0], [1], [0, 0, 1, 1], [], []>} : vector<128x128xbf16>, vector<128x128xbf16>, vector<128x128xf32> -> vector<128x128xf32>
    %c0_3 = arith.constant 0 : index
    %c0_4 = arith.constant 0 : index
    %3 = vector.load %arg3[%c0_3, %c0_4] : memref<1x128xf32, #tpu.memory_space<vmem>>, vector<1x128xf32>
    %4 = vector.broadcast %3 : vector<1x128xf32> to vector<128x128xf32>
    %5 = arith.addf %2, %4 : vector<128x128xf32>
    %cst_5 = arith.constant 0.000000e+00 : f32
    %6 = vector.broadcast %cst_5 : f32 to vector<128x128xf32>
    %7 = arith.maximumf %5, %6 : vector<128x128xf32>
    %c0_6 = arith.constant 0 : index
    %c0_7 = arith.constant 0 : index
    %8 = vector.load %arg5[%c0_6, %c0_7] : memref<12x128xf32, #tpu.memory_space<vmem>>, vector<12x128xf32>
    %c0_8 = arith.constant 0 : index
    %c0_9 = arith.constant 0 : index
    %c0_10 = arith.constant 0 : index
    %9 = vector.load %arg4[%c0_8, %c0_9, %c0_10] : memref<12x128x128xbf16, #tpu.memory_space<vmem>>, vector<1x128x128xbf16>
    %10 = vector.shape_cast %9 : vector<1x128x128xbf16> to vector<128x128xbf16>
    %c1 = arith.constant 1 : index
    %c0_11 = arith.constant 0 : index
    %c0_12 = arith.constant 0 : index
    %11 = vector.load %arg4[%c1, %c0_11, %c0_12] : memref<12x128x128xbf16, #tpu.memory_space<vmem>>, vector<1x128x128xbf16>
    %12 = vector.shape_cast %11 : vector<1x128x128xbf16> to vector<128x128xbf16>
    %13 = vector.extract_strided_slice %8 {offsets = [0, 0], sizes = [1, 128], strides = [1, 1]} : vector<12x128xf32> to vector<1x128xf32>
    %14 = vector.extract_strided_slice %8 {offsets = [1, 0], sizes = [1, 128], strides = [1, 1]} : vector<12x128xf32> to vector<1x128xf32>
    %15 = arith.truncf %7 : vector<128x128xf32> to vector<128x128xbf16>
    %cst_13 = arith.constant dense<0.000000e+00> : vector<128x128xf32>
    %16 = tpu.matmul %15, %10, %cst_13 {dimension_numbers = #tpu.dot_dimension_numbers<[1], [0], [0], [1], [0, 0, 1, 1], [], []>} : vector<128x128xbf16>, vector<128x128xbf16>, vector<128x128xf32> -> vector<128x128xf32>
    %17 = vector.broadcast %13 : vector<1x128xf32> to vector<128x128xf32>
    %18 = arith.addf %16, %17 : vector<128x128xf32>
    %cst_14 = arith.constant 0.000000e+00 : f32
    %19 = vector.broadcast %cst_14 : f32 to vector<128x128xf32>
    %20 = arith.maximumf %18, %19 : vector<128x128xf32>
    %21 = arith.truncf %20 : vector<128x128xf32> to vector<128x128xbf16>
    %cst_15 = arith.constant dense<0.000000e+00> : vector<128x128xf32>
    %22 = tpu.matmul %21, %12, %cst_15 {dimension_numbers = #tpu.dot_dimension_numbers<[1], [0], [0], [1], [0, 0, 1, 1], [], []>} : vector<128x128xbf16>, vector<128x128xbf16>, vector<128x128xf32> -> vector<128x128xf32>
    %23 = vector.broadcast %14 : vector<1x128xf32> to vector<128x128xf32>
    %24 = arith.addf %22, %23 : vector<128x128xf32>
    %25 = arith.addf %24, %7 : vector<128x128xf32>
    %cst_16 = arith.constant 0.000000e+00 : f32
    %26 = vector.broadcast %cst_16 : f32 to vector<128x128xf32>
    %27 = arith.maximumf %25, %26 : vector<128x128xf32>
    %c2 = arith.constant 2 : index
    %c0_17 = arith.constant 0 : index
    %c0_18 = arith.constant 0 : index
    %28 = vector.load %arg4[%c2, %c0_17, %c0_18] : memref<12x128x128xbf16, #tpu.memory_space<vmem>>, vector<1x128x128xbf16>
    %29 = vector.shape_cast %28 : vector<1x128x128xbf16> to vector<128x128xbf16>
    %c3 = arith.constant 3 : index
    %c0_19 = arith.constant 0 : index
    %c0_20 = arith.constant 0 : index
    %30 = vector.load %arg4[%c3, %c0_19, %c0_20] : memref<12x128x128xbf16, #tpu.memory_space<vmem>>, vector<1x128x128xbf16>
    %31 = vector.shape_cast %30 : vector<1x128x128xbf16> to vector<128x128xbf16>
    %32 = vector.extract_strided_slice %8 {offsets = [2, 0], sizes = [1, 128], strides = [1, 1]} : vector<12x128xf32> to vector<1x128xf32>
    %33 = vector.extract_strided_slice %8 {offsets = [3, 0], sizes = [1, 128], strides = [1, 1]} : vector<12x128xf32> to vector<1x128xf32>
    %34 = arith.truncf %27 : vector<128x128xf32> to vector<128x128xbf16>
    %cst_21 = arith.constant dense<0.000000e+00> : vector<128x128xf32>
    %35 = tpu.matmul %34, %29, %cst_21 {dimension_numbers = #tpu.dot_dimension_numbers<[1], [0], [0], [1], [0, 0, 1, 1], [], []>} : vector<128x128xbf16>, vector<128x128xbf16>, vector<128x128xf32> -> vector<128x128xf32>
    %36 = vector.broadcast %32 : vector<1x128xf32> to vector<128x128xf32>
    %37 = arith.addf %35, %36 : vector<128x128xf32>
    %cst_22 = arith.constant 0.000000e+00 : f32
    %38 = vector.broadcast %cst_22 : f32 to vector<128x128xf32>
    %39 = arith.maximumf %37, %38 : vector<128x128xf32>
    %40 = arith.truncf %39 : vector<128x128xf32> to vector<128x128xbf16>
    %cst_23 = arith.constant dense<0.000000e+00> : vector<128x128xf32>
    %41 = tpu.matmul %40, %31, %cst_23 {dimension_numbers = #tpu.dot_dimension_numbers<[1], [0], [0], [1], [0, 0, 1, 1], [], []>} : vector<128x128xbf16>, vector<128x128xbf16>, vector<128x128xf32> -> vector<128x128xf32>
    %42 = vector.broadcast %33 : vector<1x128xf32> to vector<128x128xf32>
    %43 = arith.addf %41, %42 : vector<128x128xf32>
    %44 = arith.addf %43, %27 : vector<128x128xf32>
    %cst_24 = arith.constant 0.000000e+00 : f32
    %45 = vector.broadcast %cst_24 : f32 to vector<128x128xf32>
    %46 = arith.maximumf %44, %45 : vector<128x128xf32>
    %c4 = arith.constant 4 : index
    %c0_25 = arith.constant 0 : index
    %c0_26 = arith.constant 0 : index
    %47 = vector.load %arg4[%c4, %c0_25, %c0_26] : memref<12x128x128xbf16, #tpu.memory_space<vmem>>, vector<1x128x128xbf16>
    %48 = vector.shape_cast %47 : vector<1x128x128xbf16> to vector<128x128xbf16>
    %c5 = arith.constant 5 : index
    %c0_27 = arith.constant 0 : index
    %c0_28 = arith.constant 0 : index
    %49 = vector.load %arg4[%c5, %c0_27, %c0_28] : memref<12x128x128xbf16, #tpu.memory_space<vmem>>, vector<1x128x128xbf16>
    %50 = vector.shape_cast %49 : vector<1x128x128xbf16> to vector<128x128xbf16>
    %51 = vector.extract_strided_slice %8 {offsets = [4, 0], sizes = [1, 128], strides = [1, 1]} : vector<12x128xf32> to vector<1x128xf32>
    %52 = vector.extract_strided_slice %8 {offsets = [5, 0], sizes = [1, 128], strides = [1, 1]} : vector<12x128xf32> to vector<1x128xf32>
    %53 = arith.truncf %46 : vector<128x128xf32> to vector<128x128xbf16>
    %cst_29 = arith.constant dense<0.000000e+00> : vector<128x128xf32>
    %54 = tpu.matmul %53, %48, %cst_29 {dimension_numbers = #tpu.dot_dimension_numbers<[1], [0], [0], [1], [0, 0, 1, 1], [], []>} : vector<128x128xbf16>, vector<128x128xbf16>, vector<128x128xf32> -> vector<128x128xf32>
    %55 = vector.broadcast %51 : vector<1x128xf32> to vector<128x128xf32>
    %56 = arith.addf %54, %55 : vector<128x128xf32>
    %cst_30 = arith.constant 0.000000e+00 : f32
    %57 = vector.broadcast %cst_30 : f32 to vector<128x128xf32>
    %58 = arith.maximumf %56, %57 : vector<128x128xf32>
    %59 = arith.truncf %58 : vector<128x128xf32> to vector<128x128xbf16>
    %cst_31 = arith.constant dense<0.000000e+00> : vector<128x128xf32>
    %60 = tpu.matmul %59, %50, %cst_31 {dimension_numbers = #tpu.dot_dimension_numbers<[1], [0], [0], [1], [0, 0, 1, 1], [], []>} : vector<128x128xbf16>, vector<128x128xbf16>, vector<128x128xf32> -> vector<128x128xf32>
    %61 = vector.broadcast %52 : vector<1x128xf32> to vector<128x128xf32>
    %62 = arith.addf %60, %61 : vector<128x128xf32>
    %63 = arith.addf %62, %46 : vector<128x128xf32>
    %cst_32 = arith.constant 0.000000e+00 : f32
    %64 = vector.broadcast %cst_32 : f32 to vector<128x128xf32>
    %65 = arith.maximumf %63, %64 : vector<128x128xf32>
    %c6 = arith.constant 6 : index
    %c0_33 = arith.constant 0 : index
    %c0_34 = arith.constant 0 : index
    %66 = vector.load %arg4[%c6, %c0_33, %c0_34] : memref<12x128x128xbf16, #tpu.memory_space<vmem>>, vector<1x128x128xbf16>
    %67 = vector.shape_cast %66 : vector<1x128x128xbf16> to vector<128x128xbf16>
    %c7 = arith.constant 7 : index
    %c0_35 = arith.constant 0 : index
    %c0_36 = arith.constant 0 : index
    %68 = vector.load %arg4[%c7, %c0_35, %c0_36] : memref<12x128x128xbf16, #tpu.memory_space<vmem>>, vector<1x128x128xbf16>
    %69 = vector.shape_cast %68 : vector<1x128x128xbf16> to vector<128x128xbf16>
    %70 = vector.extract_strided_slice %8 {offsets = [6, 0], sizes = [1, 128], strides = [1, 1]} : vector<12x128xf32> to vector<1x128xf32>
    %71 = vector.extract_strided_slice %8 {offsets = [7, 0], sizes = [1, 128], strides = [1, 1]} : vector<12x128xf32> to vector<1x128xf32>
    %72 = arith.truncf %65 : vector<128x128xf32> to vector<128x128xbf16>
    %cst_37 = arith.constant dense<0.000000e+00> : vector<128x128xf32>
    %73 = tpu.matmul %72, %67, %cst_37 {dimension_numbers = #tpu.dot_dimension_numbers<[1], [0], [0], [1], [0, 0, 1, 1], [], []>} : vector<128x128xbf16>, vector<128x128xbf16>, vector<128x128xf32> -> vector<128x128xf32>
    %74 = vector.broadcast %70 : vector<1x128xf32> to vector<128x128xf32>
    %75 = arith.addf %73, %74 : vector<128x128xf32>
    %cst_38 = arith.constant 0.000000e+00 : f32
    %76 = vector.broadcast %cst_38 : f32 to vector<128x128xf32>
    %77 = arith.maximumf %75, %76 : vector<128x128xf32>
    %78 = arith.truncf %77 : vector<128x128xf32> to vector<128x128xbf16>
    %cst_39 = arith.constant dense<0.000000e+00> : vector<128x128xf32>
    %79 = tpu.matmul %78, %69, %cst_39 {dimension_numbers = #tpu.dot_dimension_numbers<[1], [0], [0], [1], [0, 0, 1, 1], [], []>} : vector<128x128xbf16>, vector<128x128xbf16>, vector<128x128xf32> -> vector<128x128xf32>
    %80 = vector.broadcast %71 : vector<1x128xf32> to vector<128x128xf32>
    %81 = arith.addf %79, %80 : vector<128x128xf32>
    %82 = arith.addf %81, %65 : vector<128x128xf32>
    %cst_40 = arith.constant 0.000000e+00 : f32
    %83 = vector.broadcast %cst_40 : f32 to vector<128x128xf32>
    %84 = arith.maximumf %82, %83 : vector<128x128xf32>
    %c8 = arith.constant 8 : index
    %c0_41 = arith.constant 0 : index
    %c0_42 = arith.constant 0 : index
    %85 = vector.load %arg4[%c8, %c0_41, %c0_42] : memref<12x128x128xbf16, #tpu.memory_space<vmem>>, vector<1x128x128xbf16>
    %86 = vector.shape_cast %85 : vector<1x128x128xbf16> to vector<128x128xbf16>
    %c9 = arith.constant 9 : index
    %c0_43 = arith.constant 0 : index
    %c0_44 = arith.constant 0 : index
    %87 = vector.load %arg4[%c9, %c0_43, %c0_44] : memref<12x128x128xbf16, #tpu.memory_space<vmem>>, vector<1x128x128xbf16>
    %88 = vector.shape_cast %87 : vector<1x128x128xbf16> to vector<128x128xbf16>
    %89 = vector.extract_strided_slice %8 {offsets = [8, 0], sizes = [1, 128], strides = [1, 1]} : vector<12x128xf32> to vector<1x128xf32>
    %90 = vector.extract_strided_slice %8 {offsets = [9, 0], sizes = [1, 128], strides = [1, 1]} : vector<12x128xf32> to vector<1x128xf32>
    %91 = arith.truncf %84 : vector<128x128xf32> to vector<128x128xbf16>
    %cst_45 = arith.constant dense<0.000000e+00> : vector<128x128xf32>
    %92 = tpu.matmul %91, %86, %cst_45 {dimension_numbers = #tpu.dot_dimension_numbers<[1], [0], [0], [1], [0, 0, 1, 1], [], []>} : vector<128x128xbf16>, vector<128x128xbf16>, vector<128x128xf32> -> vector<128x128xf32>
    %93 = vector.broadcast %89 : vector<1x128xf32> to vector<128x128xf32>
    %94 = arith.addf %92, %93 : vector<128x128xf32>
    %cst_46 = arith.constant 0.000000e+00 : f32
    %95 = vector.broadcast %cst_46 : f32 to vector<128x128xf32>
    %96 = arith.maximumf %94, %95 : vector<128x128xf32>
    %97 = arith.truncf %96 : vector<128x128xf32> to vector<128x128xbf16>
    %cst_47 = arith.constant dense<0.000000e+00> : vector<128x128xf32>
    %98 = tpu.matmul %97, %88, %cst_47 {dimension_numbers = #tpu.dot_dimension_numbers<[1], [0], [0], [1], [0, 0, 1, 1], [], []>} : vector<128x128xbf16>, vector<128x128xbf16>, vector<128x128xf32> -> vector<128x128xf32>
    %99 = vector.broadcast %90 : vector<1x128xf32> to vector<128x128xf32>
    %100 = arith.addf %98, %99 : vector<128x128xf32>
    %101 = arith.addf %100, %84 : vector<128x128xf32>
    %cst_48 = arith.constant 0.000000e+00 : f32
    %102 = vector.broadcast %cst_48 : f32 to vector<128x128xf32>
    %103 = arith.maximumf %101, %102 : vector<128x128xf32>
    %c10 = arith.constant 10 : index
    %c0_49 = arith.constant 0 : index
    %c0_50 = arith.constant 0 : index
    %104 = vector.load %arg4[%c10, %c0_49, %c0_50] : memref<12x128x128xbf16, #tpu.memory_space<vmem>>, vector<1x128x128xbf16>
    %105 = vector.shape_cast %104 : vector<1x128x128xbf16> to vector<128x128xbf16>
    %c11 = arith.constant 11 : index
    %c0_51 = arith.constant 0 : index
    %c0_52 = arith.constant 0 : index
    %106 = vector.load %arg4[%c11, %c0_51, %c0_52] : memref<12x128x128xbf16, #tpu.memory_space<vmem>>, vector<1x128x128xbf16>
    %107 = vector.shape_cast %106 : vector<1x128x128xbf16> to vector<128x128xbf16>
    %108 = vector.extract_strided_slice %8 {offsets = [10, 0], sizes = [1, 128], strides = [1, 1]} : vector<12x128xf32> to vector<1x128xf32>
    %109 = vector.extract_strided_slice %8 {offsets = [11, 0], sizes = [1, 128], strides = [1, 1]} : vector<12x128xf32> to vector<1x128xf32>
    %110 = arith.truncf %103 : vector<128x128xf32> to vector<128x128xbf16>
    %cst_53 = arith.constant dense<0.000000e+00> : vector<128x128xf32>
    %111 = tpu.matmul %110, %105, %cst_53 {dimension_numbers = #tpu.dot_dimension_numbers<[1], [0], [0], [1], [0, 0, 1, 1], [], []>} : vector<128x128xbf16>, vector<128x128xbf16>, vector<128x128xf32> -> vector<128x128xf32>
    %112 = vector.broadcast %108 : vector<1x128xf32> to vector<128x128xf32>
    %113 = arith.addf %111, %112 : vector<128x128xf32>
    %cst_54 = arith.constant 0.000000e+00 : f32
    %114 = vector.broadcast %cst_54 : f32 to vector<128x128xf32>
    %115 = arith.maximumf %113, %114 : vector<128x128xf32>
    %116 = arith.truncf %115 : vector<128x128xf32> to vector<128x128xbf16>
    %cst_55 = arith.constant dense<0.000000e+00> : vector<128x128xf32>
    %117 = tpu.matmul %116, %107, %cst_55 {dimension_numbers = #tpu.dot_dimension_numbers<[1], [0], [0], [1], [0, 0, 1, 1], [], []>} : vector<128x128xbf16>, vector<128x128xbf16>, vector<128x128xf32> -> vector<128x128xf32>
    %118 = vector.broadcast %109 : vector<1x128xf32> to vector<128x128xf32>
    %119 = arith.addf %117, %118 : vector<128x128xf32>
    %120 = arith.addf %119, %103 : vector<128x128xf32>
    %cst_56 = arith.constant 0.000000e+00 : f32
    %121 = vector.broadcast %cst_56 : f32 to vector<128x128xf32>
    %122 = arith.maximumf %120, %121 : vector<128x128xf32>
    %123 = arith.truncf %122 : vector<128x128xf32> to vector<128x128xbf16>
    %c0_57 = arith.constant 0 : index
    %c0_58 = arith.constant 0 : index
    %124 = vector.load %arg6[%c0_57, %c0_58] : memref<128x128xbf16, #tpu.memory_space<vmem>>, vector<128x128xbf16>
    %cst_59 = arith.constant dense<0.000000e+00> : vector<128x128xf32>
    %125 = tpu.matmul %123, %124, %cst_59 {dimension_numbers = #tpu.dot_dimension_numbers<[1], [0], [0], [1], [0, 0, 1, 1], [], []>} : vector<128x128xbf16>, vector<128x128xbf16>, vector<128x128xf32> -> vector<128x128xf32>
    %c0_60 = arith.constant 0 : index
    %c0_61 = arith.constant 0 : index
    %126 = vector.load %arg7[%c0_60, %c0_61] : memref<1x128xf32, #tpu.memory_space<vmem>>, vector<1x128xf32>
    %127 = vector.broadcast %126 : vector<1x128xf32> to vector<128x128xf32>
    %128 = arith.addf %125, %127 : vector<128x128xf32>
    %c0_62 = arith.constant 0 : index
    %c0_63 = arith.constant 0 : index
    %129 = vector.load %arg8[%c0_62, %c0_63] : memref<128x128xf32, #tpu.memory_space<vmem>>, vector<128x128xf32>
    tpu.vector_store %arg8[%c0_62, %c0_63], %128 {strides = array<i32>} : memref<128x128xf32, #tpu.memory_space<vmem>>, vector<128x128xf32>,
    return
  }
  func.func @transform_0(%arg0: i32) -> (i32, i32) {
    %c0_i32 = arith.constant 0 : i32
    %c0_i32_0 = arith.constant 0 : i32
    return %arg0, %c0_i32 : i32, i32
  }
  func.func @transform_1(%arg0: i32) -> (i32, i32) {
    %c0_i32 = arith.constant 0 : i32
    %c0_i32_0 = arith.constant 0 : i32
    %c0_i32_1 = arith.constant 0 : i32
    return %c0_i32, %c0_i32_0 : i32, i32
  }
  func.func @transform_2(%arg0: i32) -> (i32, i32) {
    %c0_i32 = arith.constant 0 : i32
    %c0_i32_0 = arith.constant 0 : i32
    %c0_i32_1 = arith.constant 0 : i32
    return %c0_i32, %c0_i32_0 : i32, i32
  }
  func.func @transform_3(%arg0: i32) -> (i32, i32, i32) {
    %c0_i32 = arith.constant 0 : i32
    %c0_i32_0 = arith.constant 0 : i32
    %c0_i32_1 = arith.constant 0 : i32
    %c0_i32_2 = arith.constant 0 : i32
    return %c0_i32, %c0_i32_0, %c0_i32_1 : i32, i32, i32
  }
  func.func @transform_4(%arg0: i32) -> (i32, i32) {
    %c0_i32 = arith.constant 0 : i32
    %c0_i32_0 = arith.constant 0 : i32
    %c0_i32_1 = arith.constant 0 : i32
    return %c0_i32, %c0_i32_0 : i32, i32
  }
  func.func @transform_5(%arg0: i32) -> (i32, i32) {
    %c0_i32 = arith.constant 0 : i32
    %c0_i32_0 = arith.constant 0 : i32
    %c0_i32_1 = arith.constant 0 : i32
    return %c0_i32, %c0_i32_0 : i32, i32
  }
  func.func @transform_6(%arg0: i32) -> (i32, i32) {
    %c0_i32 = arith.constant 0 : i32
    %c0_i32_0 = arith.constant 0 : i32
    %c0_i32_1 = arith.constant 0 : i32
    return %c0_i32, %c0_i32_0 : i32, i32
  }
  func.func @transform_7(%arg0: i32) -> (i32, i32) {
    %c0_i32 = arith.constant 0 : i32
    %c0_i32_0 = arith.constant 0 : i32
    return %arg0, %c0_i32 : i32, i32
  }
}

</mosaic_0001>

<llo_original>
// kernel: tpu_custom_call.1
$region0: #{tpu_custom_call.1}
  #allocation0 [shape = 'u32[]', space=smem, size = 0x4, offset = 0x4, fixed_abs, tag = 'smem constant byte address 0x4 - core index']
  #allocation1 [shape = 'u32[72,128]{1,0:T(1,128)}', space=vmem, size = 0x9000, scoped, tag = 'internal scratch']
  %s0 = inlined_call_operand.hbm [shape: bf16[128,128], index: 0, kind: input, shape index: {}]
  %s1 = inlined_call_operand.hbm [shape: bf16[128,128], index: 1, kind: input, shape index: {}]
  %s2 = inlined_call_operand.vmem [shape: f32[1,128], index: 2, kind: input, shape index: {}]
  %s3 = inlined_call_operand.hbm [shape: bf16[12,128,128], index: 3, kind: input, shape index: {}]
  %s4 = inlined_call_operand.hbm [shape: f32[12,128], index: 4, kind: input, shape index: {}]
  %s5 = inlined_call_operand.hbm [shape: bf16[128,128], index: 5, kind: input, shape index: {}]
  %s6 = inlined_call_operand.vmem [shape: f32[1,128], index: 6, kind: input, shape index: {}]
  %s7 = inlined_call_operand.hbm [shape: f32[128,128], index: 7, kind: output, shape index: {}]
  %s8 = sld [smem:[#allocation0]]
  $region58: #{tpu_custom_call.1} parent=0
    _
  %s10 = ssub.s32 1, %s8
  %s11 = scalar_select 0, %s10, %s8
  $region1: #{tpu_custom_call.1} parent=0
    #allocation2 [shape = 'u8[32768]{0}', space=vmem, size = 0x8000, scoped, tag = 'input window, operand 0, single buffered']
    #allocation3 [shape = 's32[1]{0}', space=sflag, size = 0x4, scoped, tag = 'scoped memory for tpu_custom_call.1']
    #allocation4 [shape = 's32[1]{0}', space=sflag, size = 0x4, scoped, tag = 'scoped memory for tpu_custom_call.1']
    #allocation5 [shape = 'u8[32768]{0}', space=vmem, size = 0x8000, scoped, tag = 'input window, operand 1, single buffered']
    #allocation6 [shape = 's32[1]{0}', space=sflag, size = 0x4, scoped, tag = 'scoped memory for tpu_custom_call.1']
    #allocation7 [shape = 'u8[393216]{0}', space=vmem, size = 0x60000, scoped, tag = 'input window, operand 3, single buffered']
    #allocation8 [shape = 'u8[8192]{0}', space=vmem, size = 0x2000, scoped, tag = 'input window, operand 4, single buffered']
    #allocation9 [shape = 's32[1]{0}', space=sflag, size = 0x4, scoped, tag = 'scoped memory for tpu_custom_call.1']
    #allocation10 [shape = 'u8[32768]{0}', space=vmem, size = 0x8000, scoped, tag = 'input window, operand 5, single buffered']
    #allocation11 [shape = 'u8[65536]{0}', space=vmem, size = 0x10000, scoped, tag = 'output window, operand 0, single buffered']
    %12 = vsyncpa [#allocation3], 0
    %13 = vsyncpa [#allocation6], 0
    %14 = vsyncpa [#allocation9], 0
    %15 = vsyncpa [#allocation4], 0
    // Predicated region
    $region2: #{tpu_custom_call.1} parent=1 // pred_check
      _
    $region3: #{tpu_custom_call.1} parent=1 // pred_check_branch
      %17 = sbr.rel (0) target = $region5
    $region4: #{tpu_custom_call.1} parent=1 // pred_region
      %19 = vsyncadd [#allocation3], 0
      %s20 = sshll.u32 %s0, 4
      %s21 = int_to_ptr.hbm [resolvable:$true] %s20
      %s22 = sshll.u32 [#allocation2], 4
      %s23 = int_to_ptr.vmem [resolvable:$true] %s22
      %28 = dma.hbm_to_vmem [thread:$0]  %s21, 1024, %s23, [#allocation3], 64, 64, 4
    $region5: #{tpu_custom_call.1} parent=1 // pred_fallthru
      _
    // Predicated region
    $region6: #{tpu_custom_call.1} parent=1 // pred_check
      _
    $region7: #{tpu_custom_call.1} parent=1 // pred_check_branch
      %30 = sbr.rel (0) target = $region9
    $region8: #{tpu_custom_call.1} parent=1 // pred_region
      %32 = vsyncadd [#allocation6], 0
      %s33 = sshll.u32 %s1, 4
      %s34 = int_to_ptr.hbm [resolvable:$true] %s33
      %s35 = sshll.u32 [#allocation5], 4
      %s36 = int_to_ptr.vmem [resolvable:$true] %s35
      %41 = dma.hbm_to_vmem [thread:$0]  %s34, 1024, %s36, [#allocation6], 64, 64, 4
    $region9: #{tpu_custom_call.1} parent=1 // pred_fallthru
      _
    // Predicated region
    $region10: #{tpu_custom_call.1} parent=1 // pred_check
      _
    $region11: #{tpu_custom_call.1} parent=1 // pred_check_branch
      %43 = sbr.rel (0) target = $region13
    $region12: #{tpu_custom_call.1} parent=1 // pred_region
      _
    $region13: #{tpu_custom_call.1} parent=1 // pred_fallthru
      _
    // Predicated region
    $region14: #{tpu_custom_call.1} parent=1 // pred_check
      _
    $region15: #{tpu_custom_call.1} parent=1 // pred_check_branch
      %45 = sbr.rel (0) target = $region17
    $region16: #{tpu_custom_call.1} parent=1 // pred_region
      %47 = vsyncadd [#allocation6], 0
      %s48 = sshll.u32 %s3, 4
      %s49 = int_to_ptr.hbm [resolvable:$true] %s48
      %s50 = sshll.u32 [#allocation7], 4
      %s51 = int_to_ptr.vmem [resolvable:$true] %s50
      %56 = dma.hbm_to_vmem [thread:$0]  %s49, 12288, %s51, [#allocation6], 64, 64, 4
    $region17: #{tpu_custom_call.1} parent=1 // pred_fallthru
      _
    // Predicated region
    $region18: #{tpu_custom_call.1} parent=1 // pred_check
      _
    $region19: #{tpu_custom_call.1} parent=1 // pred_check_branch
      %58 = sbr.rel (0) target = $region21
    $region20: #{tpu_custom_call.1} parent=1 // pred_region
      %60 = vsyncadd [#allocation9], 0
      %s61 = sshll.u32 %s4, 4
      %s62 = int_to_ptr.hbm [resolvable:$true] %s61
      %s63 = sshll.u32 [#allocation8], 4
      %s64 = int_to_ptr.vmem [resolvable:$true] %s63
      %69 = dma.hbm_to_vmem [thread:$0]  %s62, 256, %s64, [#allocation9], 128, 128, 8
    $region21: #{tpu_custom_call.1} parent=1 // pred_fallthru
      _
    // Predicated region
    $region22: #{tpu_custom_call.1} parent=1 // pred_check
      _
    $region23: #{tpu_custom_call.1} parent=1 // pred_check_branch
      %71 = sbr.rel (0) target = $region25
    $region24: #{tpu_custom_call.1} parent=1 // pred_region
      %73 = vsyncadd [#allocation9], 0
      %s74 = sshll.u32 %s5, 4
      %s75 = int_to_ptr.hbm [resolvable:$true] %s74
      %s76 = sshll.u32 [#allocation10], 4
      %s77 = int_to_ptr.vmem [resolvable:$true] %s76
      %82 = dma.hbm_to_vmem [thread:$0]  %s75, 1024, %s77, [#allocation9], 64, 64, 4
    $region25: #{tpu_custom_call.1} parent=1 // pred_fallthru
      _
    // Predicated region
    $region26: #{tpu_custom_call.1} parent=1 // pred_check
      _
    $region27: #{tpu_custom_call.1} parent=1 // pred_check_branch
      %84 = sbr.rel (0) target = $region29
    $region28: #{tpu_custom_call.1} parent=1 // pred_region
      _
    $region29: #{tpu_custom_call.1} parent=1 // pred_fallthru
      _
    // Predicated region
    $region30: #{tpu_custom_call.1} parent=1 // pred_check
      _
    $region31: #{tpu_custom_call.1} parent=1 // pred_check_branch
      %86 = sbr.rel (0) target = $region33
    $region32: #{tpu_custom_call.1} parent=1 // pred_region
      %88 = dma.done [#allocation3], 1024
    $region33: #{tpu_custom_call.1} parent=1 // pred_fallthru
      _
    // Predicated region
    $region34: #{tpu_custom_call.1} parent=1 // pred_check
      _
    $region35: #{tpu_custom_call.1} parent=1 // pred_check_branch
      %90 = sbr.rel (0) target = $region37
    $region36: #{tpu_custom_call.1} parent=1 // pred_region
      %92 = dma.done [#allocation6], 1024
    $region37: #{tpu_custom_call.1} parent=1 // pred_fallthru
      _
    // Predicated region
    $region38: #{tpu_custom_call.1} parent=1 // pred_check
      _
    $region39: #{tpu_custom_call.1} parent=1 // pred_check_branch
      %94 = sbr.rel (0) target = $region41
    $region40: #{tpu_custom_call.1} parent=1 // pred_region
      %96 = dma.done [#allocation6], 12288
    $region41: #{tpu_custom_call.1} parent=1 // pred_fallthru
      _
    // Predicated region
    $region42: #{tpu_custom_call.1} parent=1 // pred_check
      _
    $region43: #{tpu_custom_call.1} parent=1 // pred_check_branch
      %98 = sbr.rel (0) target = $region45
    $region44: #{tpu_custom_call.1} parent=1 // pred_region
      %100 = dma.done [#allocation9], 256
    $region45: #{tpu_custom_call.1} parent=1 // pred_fallthru
      _
    // Predicated region
    $region46: #{tpu_custom_call.1} parent=1 // pred_check
      _
    $region47: #{tpu_custom_call.1} parent=1 // pred_check_branch
      %102 = sbr.rel (0) target = $region49
    $region48: #{tpu_custom_call.1} parent=1 // pred_region
      %104 = dma.done [#allocation9], 1024
    $region49: #{tpu_custom_call.1} parent=1 // pred_fallthru
      _
    %v105 = vld [vmem:[#allocation2] sm:$0xf]
    %v106 = vld [vmem:[#allocation2 + $0x4] sm:$0xf]
    %v107 = vld [vmem:[#allocation2 + $0x8] sm:$0xf]
    %v108 = vld [vmem:[#allocation2 + $0xc] sm:$0xf]
    %v109 = vld [vmem:[#allocation2 + $0x10] sm:$0xf]
    %v110 = vld [vmem:[#allocation2 + $0x14] sm:$0xf]
    %v111 = vld [vmem:[#allocation2 + $0x18] sm:$0xf]
    %v112 = vld [vmem:[#allocation2 + $0x1c] sm:$0xf]
    %v113 = vld [vmem:[#allocation2 + $0x20] sm:$0xf]
    %v114 = vld [vmem:[#allocation2 + $0x24] sm:$0xf]
    %v115 = vld [vmem:[#allocation2 + $0x28] sm:$0xf]
    %v116 = vld [vmem:[#allocation2 + $0x2c] sm:$0xf]
    %v117 = vld [vmem:[#allocation2 + $0x30] sm:$0xf]
    %v118 = vld [vmem:[#allocation2 + $0x34] sm:$0xf]
    %v119 = vld [vmem:[#allocation2 + $0x38] sm:$0xf]
    %v120 = vld [vmem:[#allocation2 + $0x3c] sm:$0xf]
    %v121 = vld [vmem:[#allocation5] sm:$0xf]
    %v122 = vld [vmem:[#allocation5 + $0x4] sm:$0xf]
    %v123 = vld [vmem:[#allocation5 + $0x8] sm:$0xf]
    %v124 = vld [vmem:[#allocation5 + $0xc] sm:$0xf]
    %v125 = vld [vmem:[#allocation5 + $0x10] sm:$0xf]
    %v126 = vld [vmem:[#allocation5 + $0x14] sm:$0xf]
    %v127 = vld [vmem:[#allocation5 + $0x18] sm:$0xf]
    %v128 = vld [vmem:[#allocation5 + $0x1c] sm:$0xf]
    %v129 = vld [vmem:[#allocation5 + $0x20] sm:$0xf]
    %v130 = vld [vmem:[#allocation5 + $0x24] sm:$0xf]
    %v131 = vld [vmem:[#allocation5 + $0x28] sm:$0xf]
    %v132 = vld [vmem:[#allocation5 + $0x2c] sm:$0xf]
    %v133 = vld [vmem:[#allocation5 + $0x30] sm:$0xf]
    %v134 = vld [vmem:[#allocation5 + $0x34] sm:$0xf]
    %v135 = vld [vmem:[#allocation5 + $0x38] sm:$0xf]
    %v136 = vld [vmem:[#allocation5 + $0x3c] sm:$0xf]
    %v137 = vld [vmem:[%s2] sm:$0x1]
    %v139 = vperm.slane %v137, 0
    %v157 = vunpack.c.l.b16 %v105
    %v158 = vunpack.c.l.b16 %v106
    %v159 = vunpack.c.l.b16 %v107
    %v160 = vunpack.c.l.b16 %v108
    %v161 = vunpack.c.l.b16 %v109
    %v162 = vunpack.c.l.b16 %v110
    %v163 = vunpack.c.l.b16 %v111
    %v164 = vunpack.c.l.b16 %v112
    %v165 = vunpack.c.l.b16 %v113
    %v166 = vunpack.c.l.b16 %v114
    %v167 = vunpack.c.l.b16 %v115
    %v168 = vunpack.c.l.b16 %v116
    %v169 = vunpack.c.l.b16 %v117
    %v170 = vunpack.c.l.b16 %v118
    %v171 = vunpack.c.l.b16 %v119
    %v172 = vunpack.c.l.b16 %v120
    %v173 = vpack.c.b16 %v158, %v157
    %v174 = vpack.c.b16 %v160, %v159
    %v175 = vpack.c.b16 %v162, %v161
    %v176 = vpack.c.b16 %v164, %v163
    %v177 = vpack.c.b16 %v166, %v165
    %v178 = vpack.c.b16 %v168, %v167
    %v179 = vpack.c.b16 %v170, %v169
    %v180 = vpack.c.b16 %v172, %v171
    %v205 = vunpack.c.l.b16 %v121
    %v206 = vunpack.c.l.b16 %v122
    %v207 = vunpack.c.l.b16 %v123
    %v208 = vunpack.c.l.b16 %v124
    %v209 = vunpack.c.l.b16 %v125
    %v210 = vunpack.c.l.b16 %v126
    %v211 = vunpack.c.l.b16 %v127
    %v212 = vunpack.c.l.b16 %v128
    %v213 = vunpack.c.l.b16 %v129
    %v214 = vunpack.c.l.b16 %v130
    %v215 = vunpack.c.l.b16 %v131
    %v216 = vunpack.c.l.b16 %v132
    %v217 = vunpack.c.l.b16 %v133
    %v218 = vunpack.c.l.b16 %v134
    %v219 = vunpack.c.l.b16 %v135
    %v220 = vunpack.c.l.b16 %v136
    %v221 = vpack.c.b16 %v206, %v205
    %v222 = vpack.c.b16 %v208, %v207
    %v223 = vpack.c.b16 %v210, %v209
    %v224 = vpack.c.b16 %v212, %v211
    %v225 = vpack.c.b16 %v214, %v213
    %v226 = vpack.c.b16 %v216, %v215
    %v227 = vpack.c.b16 %v218, %v217
    %v228 = vpack.c.b16 %v220, %v219
    %237 = vmatpush.bf16.msra.mxu0 %v228
    %238 = vmatpush.bf16.msra.mxu0 %v227
    %239 = vmatpush.bf16.msra.mxu0 %v226
    %240 = vmatpush.bf16.msra.mxu0 %v225
    %241 = vmatpush.bf16.msra.mxu0 %v224
    %242 = vmatpush.bf16.msra.mxu0 %v223
    %243 = vmatpush.bf16.msra.mxu0 %v222
    %244 = vmatpush.bf16.msra.mxu0 %v221
    %245 = vmatmul.bf16.gmra.mxu0 %v173
    %v246 = vpop.f32.mrf.mxu0
    %v247 = vadd.f32 %v139, %v246
    %v248 = vpop.f32.mrf.mxu0
    %v249 = vadd.f32 %v139, %v248
    %250 = vmatmul.bf16.gmra.mxu0 %v174
    %v251 = vpop.f32.mrf.mxu0
    %v252 = vadd.f32 %v139, %v251
    %v253 = vpop.f32.mrf.mxu0
    %v254 = vadd.f32 %v139, %v253
    %255 = vmatmul.bf16.gmra.mxu0 %v175
    %v256 = vpop.f32.mrf.mxu0
    %v257 = vadd.f32 %v139, %v256
    %v258 = vpop.f32.mrf.mxu0
    %v259 = vadd.f32 %v139, %v258
    %260 = vmatmul.bf16.gmra.mxu0 %v176
    %v261 = vpop.f32.mrf.mxu0
    %v262 = vadd.f32 %v139, %v261
    %v263 = vpop.f32.mrf.mxu0
    %v264 = vadd.f32 %v139, %v263
    %265 = vmatmul.bf16.gmra.mxu0 %v177
    %v266 = vpop.f32.mrf.mxu0
    %v267 = vadd.f32 %v139, %v266
    %v268 = vpop.f32.mrf.mxu0
    %v269 = vadd.f32 %v139, %v268
    %270 = vmatmul.bf16.gmra.mxu0 %v178
    %v271 = vpop.f32.mrf.mxu0
    %v272 = vadd.f32 %v139, %v271
    %v273 = vpop.f32.mrf.mxu0
    %v274 = vadd.f32 %v139, %v273
    %275 = vmatmul.bf16.gmra.mxu0 %v179
    %v276 = vpop.f32.mrf.mxu0
    %v277 = vadd.f32 %v139, %v276
    %v278 = vpop.f32.mrf.mxu0
    %v279 = vadd.f32 %v139, %v278
    %280 = vmatmul.bf16.gmra.mxu0 %v180
    %v281 = vpop.f32.mrf.mxu0
    %v282 = vadd.f32 %v139, %v281
    %v283 = vpop.f32.mrf.mxu0
    %v284 = vadd.f32 %v139, %v283
    %285 = vdwg.mxu0
    %v286 = vmax.f32 %v247, 0.0
    %v287 = vmax.f32 %v249, 0.0
    %v288 = vmax.f32 %v252, 0.0
    %v289 = vmax.f32 %v254, 0.0
    %v290 = vmax.f32 %v257, 0.0
    %v291 = vmax.f32 %v259, 0.0
    %v292 = vmax.f32 %v262, 0.0
    %v293 = vmax.f32 %v264, 0.0
    %v294 = vmax.f32 %v267, 0.0
    %v295 = vmax.f32 %v269, 0.0
    %v296 = vmax.f32 %v272, 0.0
    %v297 = vmax.f32 %v274, 0.0
    %v298 = vmax.f32 %v277, 0.0
    %v299 = vmax.f32 %v279, 0.0
    %v300 = vmax.f32 %v282, 0.0
    %v301 = vmax.f32 %v284, 0.0
    %v302 = vld [vmem:[#allocation8] sm:$0xff]
    %v303 = vld [vmem:[#allocation8 + $0x8] sm:$0xf]
    %v304 = vld [vmem:[#allocation7] sm:$0xf]
    %v305 = vld [vmem:[#allocation7 + $0x4] sm:$0xf]
    %v306 = vld [vmem:[#allocation7 + $0x8] sm:$0xf]
    %v307 = vld [vmem:[#allocation7 + $0xc] sm:$0xf]
    %v308 = vld [vmem:[#allocation7 + $0x10] sm:$0xf]
    %v309 = vld [vmem:[#allocation7 + $0x14] sm:$0xf]
    %v310 = vld [vmem:[#allocation7 + $0x18] sm:$0xf]
    %v311 = vld [vmem:[#allocation7 + $0x1c] sm:$0xf]
    %v312 = vld [vmem:[#allocation7 + $0x20] sm:$0xf]
    %v313 = vld [vmem:[#allocation7 + $0x24] sm:$0xf]
    %v314 = vld [vmem:[#allocation7 + $0x28] sm:$0xf]
    %v315 = vld [vmem:[#allocation7 + $0x2c] sm:$0xf]
    %v316 = vld [vmem:[#allocation7 + $0x30] sm:$0xf]
    %v317 = vld [vmem:[#allocation7 + $0x34] sm:$0xf]
    %v318 = vld [vmem:[#allocation7 + $0x38] sm:$0xf]
    %v319 = vld [vmem:[#allocation7 + $0x3c] sm:$0xf]
    %s320 = scalar_lea.vmem [#allocation7], 64
    %v321 = vld [vmem:[%s320] sm:$0xf]
    %v322 = vld [vmem:[%s320 + $0x4] sm:$0xf]
    %v323 = vld [vmem:[%s320 + $0x8] sm:$0xf]
    %v324 = vld [vmem:[%s320 + $0xc] sm:$0xf]
    %v325 = vld [vmem:[%s320 + $0x10] sm:$0xf]
    %v326 = vld [vmem:[%s320 + $0x14] sm:$0xf]
    %v327 = vld [vmem:[%s320 + $0x18] sm:$0xf]
    %v328 = vld [vmem:[%s320 + $0x1c] sm:$0xf]
    %v329 = vld [vmem:[%s320 + $0x20] sm:$0xf]
    %v330 = vld [vmem:[%s320 + $0x24] sm:$0xf]
    %v331 = vld [vmem:[%s320 + $0x28] sm:$0xf]
    %v332 = vld [vmem:[%s320 + $0x2c] sm:$0xf]
    %v333 = vld [vmem:[%s320 + $0x30] sm:$0xf]
    %v334 = vld [vmem:[%s320 + $0x34] sm:$0xf]
    %v335 = vld [vmem:[%s320 + $0x38] sm:$0xf]
    %v336 = vld [vmem:[%s320 + $0x3c] sm:$0xf]
    %v337 = vpack.c.bf16 %v287, %v286
    %v338 = vpack.c.bf16 %v289, %v288
    %v339 = vpack.c.bf16 %v291, %v290
    %v340 = vpack.c.bf16 %v293, %v292
    %v341 = vpack.c.bf16 %v295, %v294
    %v342 = vpack.c.bf16 %v297, %v296
    %v343 = vpack.c.bf16 %v299, %v298
    %v344 = vpack.c.bf16 %v301, %v300
    %v345 = vperm.slane %v302, 0
    %v362 = vunpack.c.l.b16 %v304
    %v363 = vunpack.c.l.b16 %v305
    %v364 = vunpack.c.l.b16 %v306
    %v365 = vunpack.c.l.b16 %v307
    %v366 = vunpack.c.l.b16 %v308
    %v367 = vunpack.c.l.b16 %v309
    %v368 = vunpack.c.l.b16 %v310
    %v369 = vunpack.c.l.b16 %v311
    %v370 = vunpack.c.l.b16 %v312
    %v371 = vunpack.c.l.b16 %v313
    %v372 = vunpack.c.l.b16 %v314
    %v373 = vunpack.c.l.b16 %v315
    %v374 = vunpack.c.l.b16 %v316
    %v375 = vunpack.c.l.b16 %v317
    %v376 = vunpack.c.l.b16 %v318
    %v377 = vunpack.c.l.b16 %v319
    %v378 = vpack.c.b16 %v363, %v362
    %v379 = vpack.c.b16 %v365, %v364
    %v380 = vpack.c.b16 %v367, %v366
    %v381 = vpack.c.b16 %v369, %v368
    %v382 = vpack.c.b16 %v371, %v370
    %v383 = vpack.c.b16 %v373, %v372
    %v384 = vpack.c.b16 %v375, %v374
    %v385 = vpack.c.b16 %v377, %v376
    %394 = vmatpush.bf16.msra.mxu0 %v385
    %395 = vmatpush.bf16.msra.mxu0 %v384
    %396 = vmatpush.bf16.msra.mxu0 %v383
    %397 = vmatpush.bf16.msra.mxu0 %v382
    %398 = vmatpush.bf16.msra.mxu0 %v381
    %399 = vmatpush.bf16.msra.mxu0 %v380
    %400 = vmatpush.bf16.msra.mxu0 %v379
    %401 = vmatpush.bf16.msra.mxu0 %v378
    %402 = vmatmul.bf16.gmra.mxu0 %v337
    %v403 = vpop.f32.mrf.mxu0
    %v404 = vadd.f32 %v345, %v403
    %v405 = vpop.f32.mrf.mxu0
    %v406 = vadd.f32 %v345, %v405
    %407 = vmatmul.bf16.gmra.mxu0 %v338
    %v408 = vpop.f32.mrf.mxu0
    %v409 = vadd.f32 %v345, %v408
    %v410 = vpop.f32.mrf.mxu0
    %v411 = vadd.f32 %v345, %v410
    %412 = vmatmul.bf16.gmra.mxu0 %v339
    %v413 = vpop.f32.mrf.mxu0
    %v414 = vadd.f32 %v345, %v413
    %v415 = vpop.f32.mrf.mxu0
    %v416 = vadd.f32 %v345, %v415
    %417 = vmatmul.bf16.gmra.mxu0 %v340
    %v418 = vpop.f32.mrf.mxu0
    %v419 = vadd.f32 %v345, %v418
    %v420 = vpop.f32.mrf.mxu0
    %v421 = vadd.f32 %v345, %v420
    %422 = vmatmul.bf16.gmra.mxu0 %v341
    %v423 = vpop.f32.mrf.mxu0
    %v424 = vadd.f32 %v345, %v423
    %v425 = vpop.f32.mrf.mxu0
    %v426 = vadd.f32 %v345, %v425
    %427 = vmatmul.bf16.gmra.mxu0 %v342
    %v428 = vpop.f32.mrf.mxu0
    %v429 = vadd.f32 %v345, %v428
    %v430 = vpop.f32.mrf.mxu0
    %v431 = vadd.f32 %v345, %v430
    %432 = vmatmul.bf16.gmra.mxu0 %v343
    %v433 = vpop.f32.mrf.mxu0
    %v434 = vadd.f32 %v345, %v433
    %v435 = vpop.f32.mrf.mxu0
    %v436 = vadd.f32 %v345, %v435
    %437 = vmatmul.bf16.gmra.mxu0 %v344
    %v438 = vpop.f32.mrf.mxu0
    %v439 = vadd.f32 %v345, %v438
    %v440 = vpop.f32.mrf.mxu0
    %v441 = vadd.f32 %v345, %v440
    %442 = vdwg.mxu0
    %v443 = vmax.f32 %v404, 0.0
    %v444 = vmax.f32 %v406, 0.0
    %v445 = vmax.f32 %v409, 0.0
    %v446 = vmax.f32 %v411, 0.0
    %v447 = vmax.f32 %v414, 0.0
    %v448 = vmax.f32 %v416, 0.0
    %v449 = vmax.f32 %v419, 0.0
    %v450 = vmax.f32 %v421, 0.0
    %v451 = vmax.f32 %v424, 0.0
    %v452 = vmax.f32 %v426, 0.0
    %v453 = vmax.f32 %v429, 0.0
    %v454 = vmax.f32 %v431, 0.0
    %v455 = vmax.f32 %v434, 0.0
    %v456 = vmax.f32 %v436, 0.0
    %v457 = vmax.f32 %v439, 0.0
    %v458 = vmax.f32 %v441, 0.0
    %v459 = vpack.c.bf16 %v444, %v443
    %v460 = vpack.c.bf16 %v446, %v445
    %v461 = vpack.c.bf16 %v448, %v447
    %v462 = vpack.c.bf16 %v450, %v449
    %v463 = vpack.c.bf16 %v452, %v451
    %v464 = vpack.c.bf16 %v454, %v453
    %v465 = vpack.c.bf16 %v456, %v455
    %v466 = vpack.c.bf16 %v458, %v457
    %v467 = vperm.slane %v302, 1
    %v484 = vunpack.c.l.b16 %v321
    %v485 = vunpack.c.l.b16 %v322
    %v486 = vunpack.c.l.b16 %v323
    %v487 = vunpack.c.l.b16 %v324
    %v488 = vunpack.c.l.b16 %v325
    %v489 = vunpack.c.l.b16 %v326
    %v490 = vunpack.c.l.b16 %v327
    %v491 = vunpack.c.l.b16 %v328
    %v492 = vunpack.c.l.b16 %v329
    %v493 = vunpack.c.l.b16 %v330
    %v494 = vunpack.c.l.b16 %v331
    %v495 = vunpack.c.l.b16 %v332
    %v496 = vunpack.c.l.b16 %v333
    %v497 = vunpack.c.l.b16 %v334
    %v498 = vunpack.c.l.b16 %v335
    %v499 = vunpack.c.l.b16 %v336
    %v500 = vpack.c.b16 %v485, %v484
    %v501 = vpack.c.b16 %v487, %v486
    %v502 = vpack.c.b16 %v489, %v488
    %v503 = vpack.c.b16 %v491, %v490
    %v504 = vpack.c.b16 %v493, %v492
    %v505 = vpack.c.b16 %v495, %v494
    %v506 = vpack.c.b16 %v497, %v496
    %v507 = vpack.c.b16 %v499, %v498
    %516 = vmatpush.bf16.msra.mxu0 %v507
    %517 = vmatpush.bf16.msra.mxu0 %v506
    %518 = vmatpush.bf16.msra.mxu0 %v505
    %519 = vmatpush.bf16.msra.mxu0 %v504
    %520 = vmatpush.bf16.msra.mxu0 %v503
    %521 = vmatpush.bf16.msra.mxu0 %v502
    %522 = vmatpush.bf16.msra.mxu0 %v501
    %523 = vmatpush.bf16.msra.mxu0 %v500
    %524 = vmatmul.bf16.gmra.mxu0 %v459
    %v525 = vpop.f32.mrf.mxu0
    %v526 = vadd.f32 %v467, %v525
    %v527 = vpop.f32.mrf.mxu0
    %v528 = vadd.f32 %v467, %v527
    %529 = vmatmul.bf16.gmra.mxu0 %v460
    %v530 = vpop.f32.mrf.mxu0
    %v531 = vadd.f32 %v467, %v530
    %v532 = vpop.f32.mrf.mxu0
    %v533 = vadd.f32 %v467, %v532
    %534 = vmatmul.bf16.gmra.mxu0 %v461
    %v535 = vpop.f32.mrf.mxu0
    %v536 = vadd.f32 %v467, %v535
    %v537 = vpop.f32.mrf.mxu0
    %v538 = vadd.f32 %v467, %v537
    %539 = vmatmul.bf16.gmra.mxu0 %v462
    %v540 = vpop.f32.mrf.mxu0
    %v541 = vadd.f32 %v467, %v540
    %v542 = vpop.f32.mrf.mxu0
    %v543 = vadd.f32 %v467, %v542
    %544 = vmatmul.bf16.gmra.mxu0 %v463
    %v545 = vpop.f32.mrf.mxu0
    %v546 = vadd.f32 %v467, %v545
    %v547 = vpop.f32.mrf.mxu0
    %v548 = vadd.f32 %v467, %v547
    %549 = vmatmul.bf16.gmra.mxu0 %v464
    %v550 = vpop.f32.mrf.mxu0
    %v551 = vadd.f32 %v467, %v550
    %v552 = vpop.f32.mrf.mxu0
    %v553 = vadd.f32 %v467, %v552
    %554 = vmatmul.bf16.gmra.mxu0 %v465
    %v555 = vpop.f32.mrf.mxu0
    %v556 = vadd.f32 %v467, %v555
    %v557 = vpop.f32.mrf.mxu0
    %v558 = vadd.f32 %v467, %v557
    %559 = vmatmul.bf16.gmra.mxu0 %v466
    %v560 = vpop.f32.mrf.mxu0
    %v561 = vadd.f32 %v467, %v560
    %v562 = vpop.f32.mrf.mxu0
    %v563 = vadd.f32 %v467, %v562
    %564 = vdwg.mxu0
    %v565 = vadd.f32 %v526, %v286
    %v566 = vadd.f32 %v528, %v287
    %v567 = vadd.f32 %v531, %v288
    %v568 = vadd.f32 %v533, %v289
    %v569 = vadd.f32 %v536, %v290
    %v570 = vadd.f32 %v538, %v291
    %v571 = vadd.f32 %v541, %v292
    %v572 = vadd.f32 %v543, %v293
    %v573 = vadd.f32 %v546, %v294
    %v574 = vadd.f32 %v548, %v295
    %v575 = vadd.f32 %v551, %v296
    %v576 = vadd.f32 %v553, %v297
    %v577 = vadd.f32 %v556, %v298
    %v578 = vadd.f32 %v558, %v299
    %v579 = vadd.f32 %v561, %v300
    %v580 = vadd.f32 %v563, %v301
    %v581 = vmax.f32 %v565, 0.0
    %v582 = vmax.f32 %v566, 0.0
    %v583 = vmax.f32 %v567, 0.0
    %v584 = vmax.f32 %v568, 0.0
    %v585 = vmax.f32 %v569, 0.0
    %v586 = vmax.f32 %v570, 0.0
    %v587 = vmax.f32 %v571, 0.0
    %v588 = vmax.f32 %v572, 0.0
    %v589 = vmax.f32 %v573, 0.0
    %v590 = vmax.f32 %v574, 0.0
    %v591 = vmax.f32 %v575, 0.0
    %v592 = vmax.f32 %v576, 0.0
    %v593 = vmax.f32 %v577, 0.0
    %v594 = vmax.f32 %v578, 0.0
    %v595 = vmax.f32 %v579, 0.0
    %v596 = vmax.f32 %v580, 0.0
    %s597 = scalar_lea.vmem [#allocation7], 128
    %v598 = vld [vmem:[%s597] sm:$0xf]
    %v599 = vld [vmem:[%s597 + $0x4] sm:$0xf]
    %v600 = vld [vmem:[%s597 + $0x8] sm:$0xf]
    %v601 = vld [vmem:[%s597 + $0xc] sm:$0xf]
    %v602 = vld [vmem:[%s597 + $0x10] sm:$0xf]
    %v603 = vld [vmem:[%s597 + $0x14] sm:$0xf]
    %v604 = vld [vmem:[%s597 + $0x18] sm:$0xf]
    %v605 = vld [vmem:[%s597 + $0x1c] sm:$0xf]
    %v606 = vld [vmem:[%s597 + $0x20] sm:$0xf]
    %v607 = vld [vmem:[%s597 + $0x24] sm:$0xf]
    %v608 = vld [vmem:[%s597 + $0x28] sm:$0xf]
    %v609 = vld [vmem:[%s597 + $0x2c] sm:$0xf]
    %v610 = vld [vmem:[%s597 + $0x30] sm:$0xf]
    %v611 = vld [vmem:[%s597 + $0x34] sm:$0xf]
    %v612 = vld [vmem:[%s597 + $0x38] sm:$0xf]
    %v613 = vld [vmem:[%s597 + $0x3c] sm:$0xf]
    %s614 = scalar_lea.vmem [#allocation7], 192
    %v615 = vld [vmem:[%s614] sm:$0xf]
    %v616 = vld [vmem:[%s614 + $0x4] sm:$0xf]
    %v617 = vld [vmem:[%s614 + $0x8] sm:$0xf]
    %v618 = vld [vmem:[%s614 + $0xc] sm:$0xf]
    %v619 = vld [vmem:[%s614 + $0x10] sm:$0xf]
    %v620 = vld [vmem:[%s614 + $0x14] sm:$0xf]
    %v621 = vld [vmem:[%s614 + $0x18] sm:$0xf]
    %v622 = vld [vmem:[%s614 + $0x1c] sm:$0xf]
    %v623 = vld [vmem:[%s614 + $0x20] sm:$0xf]
    %v624 = vld [vmem:[%s614 + $0x24] sm:$0xf]
    %v625 = vld [vmem:[%s614 + $0x28] sm:$0xf]
    %v626 = vld [vmem:[%s614 + $0x2c] sm:$0xf]
    %v627 = vld [vmem:[%s614 + $0x30] sm:$0xf]
    %v628 = vld [vmem:[%s614 + $0x34] sm:$0xf]
    %v629 = vld [vmem:[%s614 + $0x38] sm:$0xf]
    %v630 = vld [vmem:[%s614 + $0x3c] sm:$0xf]
    %v631 = vpack.c.bf16 %v582, %v581
    %v632 = vpack.c.bf16 %v584, %v583
    %v633 = vpack.c.bf16 %v586, %v585
    %v634 = vpack.c.bf16 %v588, %v587
    %v635 = vpack.c.bf16 %v590, %v589
    %v636 = vpack.c.bf16 %v592, %v591
    %v637 = vpack.c.bf16 %v594, %v593
    %v638 = vpack.c.bf16 %v596, %v595
    %v639 = vperm.slane %v302, 2
    %v656 = vunpack.c.l.b16 %v598
    %v657 = vunpack.c.l.b16 %v599
    %v658 = vunpack.c.l.b16 %v600
    %v659 = vunpack.c.l.b16 %v601
    %v660 = vunpack.c.l.b16 %v602
    %v661 = vunpack.c.l.b16 %v603
    %v662 = vunpack.c.l.b16 %v604
    %v663 = vunpack.c.l.b16 %v605
    %v664 = vunpack.c.l.b16 %v606
    %v665 = vunpack.c.l.b16 %v607
    %v666 = vunpack.c.l.b16 %v608
    %v667 = vunpack.c.l.b16 %v609
    %v668 = vunpack.c.l.b16 %v610
    %v669 = vunpack.c.l.b16 %v611
    %v670 = vunpack.c.l.b16 %v612
    %v671 = vunpack.c.l.b16 %v613
    %v672 = vpack.c.b16 %v657, %v656
    %v673 = vpack.c.b16 %v659, %v658
    %v674 = vpack.c.b16 %v661, %v660
    %v675 = vpack.c.b16 %v663, %v662
    %v676 = vpack.c.b16 %v665, %v664
    %v677 = vpack.c.b16 %v667, %v666
    %v678 = vpack.c.b16 %v669, %v668
    %v679 = vpack.c.b16 %v671, %v670
    %688 = vmatpush.bf16.msra.mxu0 %v679
    %689 = vmatpush.bf16.msra.mxu0 %v678
    %690 = vmatpush.bf16.msra.mxu0 %v677
    %691 = vmatpush.bf16.msra.mxu0 %v676
    %692 = vmatpush.bf16.msra.mxu0 %v675
    %693 = vmatpush.bf16.msra.mxu0 %v674
    %694 = vmatpush.bf16.msra.mxu0 %v673
    %695 = vmatpush.bf16.msra.mxu0 %v672
    %696 = vmatmul.bf16.gmra.mxu0 %v631
    %v697 = vpop.f32.mrf.mxu0
    %v698 = vadd.f32 %v639, %v697
    %v699 = vpop.f32.mrf.mxu0
    %v700 = vadd.f32 %v639, %v699
    %701 = vmatmul.bf16.gmra.mxu0 %v632
    %v702 = vpop.f32.mrf.mxu0
    %v703 = vadd.f32 %v639, %v702
    %v704 = vpop.f32.mrf.mxu0
    %v705 = vadd.f32 %v639, %v704
    %706 = vmatmul.bf16.gmra.mxu0 %v633
    %v707 = vpop.f32.mrf.mxu0
    %v708 = vadd.f32 %v639, %v707
    %v709 = vpop.f32.mrf.mxu0
    %v710 = vadd.f32 %v639, %v709
    %711 = vmatmul.bf16.gmra.mxu0 %v634
    %v712 = vpop.f32.mrf.mxu0
    %v713 = vadd.f32 %v639, %v712
    %v714 = vpop.f32.mrf.mxu0
    %v715 = vadd.f32 %v639, %v714
    %716 = vmatmul.bf16.gmra.mxu0 %v635
    %v717 = vpop.f32.mrf.mxu0
    %v718 = vadd.f32 %v639, %v717
    %v719 = vpop.f32.mrf.mxu0
    %v720 = vadd.f32 %v639, %v719
    %721 = vmatmul.bf16.gmra.mxu0 %v636
    %v722 = vpop.f32.mrf.mxu0
    %v723 = vadd.f32 %v639, %v722
    %v724 = vpop.f32.mrf.mxu0
    %v725 = vadd.f32 %v639, %v724
    %726 = vmatmul.bf16.gmra.mxu0 %v637
    %v727 = vpop.f32.mrf.mxu0
    %v728 = vadd.f32 %v639, %v727
    %v729 = vpop.f32.mrf.mxu0
    %v730 = vadd.f32 %v639, %v729
    %731 = vmatmul.bf16.gmra.mxu0 %v638
    %v732 = vpop.f32.mrf.mxu0
    %v733 = vadd.f32 %v639, %v732
    %v734 = vpop.f32.mrf.mxu0
    %v735 = vadd.f32 %v639, %v734
    %736 = vdwg.mxu0
    %v737 = vmax.f32 %v698, 0.0
    %v738 = vmax.f32 %v700, 0.0
    %v739 = vmax.f32 %v703, 0.0
    %v740 = vmax.f32 %v705, 0.0
    %v741 = vmax.f32 %v708, 0.0
    %v742 = vmax.f32 %v710, 0.0
    %v743 = vmax.f32 %v713, 0.0
    %v744 = vmax.f32 %v715, 0.0
    %v745 = vmax.f32 %v718, 0.0
    %v746 = vmax.f32 %v720, 0.0
    %v747 = vmax.f32 %v723, 0.0
    %v748 = vmax.f32 %v725, 0.0
    %v749 = vmax.f32 %v728, 0.0
    %v750 = vmax.f32 %v730, 0.0
    %v751 = vmax.f32 %v733, 0.0
    %v752 = vmax.f32 %v735, 0.0
    %v753 = vpack.c.bf16 %v738, %v737
    %v754 = vpack.c.bf16 %v740, %v739
    %v755 = vpack.c.bf16 %v742, %v741
    %v756 = vpack.c.bf16 %v744, %v743
    %v757 = vpack.c.bf16 %v746, %v745
    %v758 = vpack.c.bf16 %v748, %v747
    %v759 = vpack.c.bf16 %v750, %v749
    %v760 = vpack.c.bf16 %v752, %v751
    %v761 = vperm.slane %v302, 3
    %v778 = vunpack.c.l.b16 %v615
    %v779 = vunpack.c.l.b16 %v616
    %v780 = vunpack.c.l.b16 %v617
    %v781 = vunpack.c.l.b16 %v618
    %v782 = vunpack.c.l.b16 %v619
    %v783 = vunpack.c.l.b16 %v620
    %v784 = vunpack.c.l.b16 %v621
    %v785 = vunpack.c.l.b16 %v622
    %v786 = vunpack.c.l.b16 %v623
    %v787 = vunpack.c.l.b16 %v624
    %v788 = vunpack.c.l.b16 %v625
    %v789 = vunpack.c.l.b16 %v626
    %v790 = vunpack.c.l.b16 %v627
    %v791 = vunpack.c.l.b16 %v628
    %v792 = vunpack.c.l.b16 %v629
    %v793 = vunpack.c.l.b16 %v630
    %v794 = vpack.c.b16 %v779, %v778
    %v795 = vpack.c.b16 %v781, %v780
    %v796 = vpack.c.b16 %v783, %v782
    %v797 = vpack.c.b16 %v785, %v784
    %v798 = vpack.c.b16 %v787, %v786
    %v799 = vpack.c.b16 %v789, %v788
    %v800 = vpack.c.b16 %v791, %v790
    %v801 = vpack.c.b16 %v793, %v792
    %810 = vmatpush.bf16.msra.mxu0 %v801
    %811 = vmatpush.bf16.msra.mxu0 %v800
    %812 = vmatpush.bf16.msra.mxu0 %v799
    %813 = vmatpush.bf16.msra.mxu0 %v798
    %814 = vmatpush.bf16.msra.mxu0 %v797
    %815 = vmatpush.bf16.msra.mxu0 %v796
    %816 = vmatpush.bf16.msra.mxu0 %v795
    %817 = vmatpush.bf16.msra.mxu0 %v794
    %818 = vmatmul.bf16.gmra.mxu0 %v753
    %v819 = vpop.f32.mrf.mxu0
    %v820 = vadd.f32 %v761, %v819
    %v821 = vpop.f32.mrf.mxu0
    %v822 = vadd.f32 %v761, %v821
    %823 = vmatmul.bf16.gmra.mxu0 %v754
    %v824 = vpop.f32.mrf.mxu0
    %v825 = vadd.f32 %v761, %v824
    %v826 = vpop.f32.mrf.mxu0
    %v827 = vadd.f32 %v761, %v826
    %828 = vmatmul.bf16.gmra.mxu0 %v755
    %v829 = vpop.f32.mrf.mxu0
    %v830 = vadd.f32 %v761, %v829
    %v831 = vpop.f32.mrf.mxu0
    %v832 = vadd.f32 %v761, %v831
    %833 = vmatmul.bf16.gmra.mxu0 %v756
    %v834 = vpop.f32.mrf.mxu0
    %v835 = vadd.f32 %v761, %v834
    %v836 = vpop.f32.mrf.mxu0
    %v837 = vadd.f32 %v761, %v836
    %838 = vmatmul.bf16.gmra.mxu0 %v757
    %v839 = vpop.f32.mrf.mxu0
    %v840 = vadd.f32 %v761, %v839
    %v841 = vpop.f32.mrf.mxu0
    %v842 = vadd.f32 %v761, %v841
    %843 = vmatmul.bf16.gmra.mxu0 %v758
    %v844 = vpop.f32.mrf.mxu0
    %v845 = vadd.f32 %v761, %v844
    %v846 = vpop.f32.mrf.mxu0
    %v847 = vadd.f32 %v761, %v846
    %848 = vmatmul.bf16.gmra.mxu0 %v759
    %v849 = vpop.f32.mrf.mxu0
    %v850 = vadd.f32 %v761, %v849
    %v851 = vpop.f32.mrf.mxu0
    %v852 = vadd.f32 %v761, %v851
    %853 = vmatmul.bf16.gmra.mxu0 %v760
    %v854 = vpop.f32.mrf.mxu0
    %v855 = vadd.f32 %v761, %v854
    %v856 = vpop.f32.mrf.mxu0
    %v857 = vadd.f32 %v761, %v856
    %858 = vdwg.mxu0
    %v859 = vadd.f32 %v820, %v581
    %v860 = vadd.f32 %v822, %v582
    %v861 = vadd.f32 %v825, %v583
    %v862 = vadd.f32 %v827, %v584
    %v863 = vadd.f32 %v830, %v585
    %v864 = vadd.f32 %v832, %v586
    %v865 = vadd.f32 %v835, %v587
    %v866 = vadd.f32 %v837, %v588
    %v867 = vadd.f32 %v840, %v589
    %v868 = vadd.f32 %v842, %v590
    %v869 = vadd.f32 %v845, %v591
    %v870 = vadd.f32 %v847, %v592
    %v871 = vadd.f32 %v850, %v593
    %v872 = vadd.f32 %v852, %v594
    %v873 = vadd.f32 %v855, %v595
    %v874 = vadd.f32 %v857, %v596
    %v875 = vmax.f32 %v859, 0.0
    %v876 = vmax.f32 %v860, 0.0
    %v877 = vmax.f32 %v861, 0.0
    %v878 = vmax.f32 %v862, 0.0
    %v879 = vmax.f32 %v863, 0.0
    %v880 = vmax.f32 %v864, 0.0
    %v881 = vmax.f32 %v865, 0.0
    %v882 = vmax.f32 %v866, 0.0
    %v883 = vmax.f32 %v867, 0.0
    %v884 = vmax.f32 %v868, 0.0
    %v885 = vmax.f32 %v869, 0.0
    %v886 = vmax.f32 %v870, 0.0
    %v887 = vmax.f32 %v871, 0.0
    %v888 = vmax.f32 %v872, 0.0
    %v889 = vmax.f32 %v873, 0.0
    %v890 = vmax.f32 %v874, 0.0
    %s891 = scalar_lea.vmem [#allocation7], 256
    %v892 = vld [vmem:[%s891] sm:$0xf]
    %v893 = vld [vmem:[%s891 + $0x4] sm:$0xf]
    %v894 = vld [vmem:[%s891 + $0x8] sm:$0xf]
    %v895 = vld [vmem:[%s891 + $0xc] sm:$0xf]
    %v896 = vld [vmem:[%s891 + $0x10] sm:$0xf]
    %v897 = vld [vmem:[%s891 + $0x14] sm:$0xf]
    %v898 = vld [vmem:[%s891 + $0x18] sm:$0xf]
    %v899 = vld [vmem:[%s891 + $0x1c] sm:$0xf]
    %v900 = vld [vmem:[%s891 + $0x20] sm:$0xf]
    %v901 = vld [vmem:[%s891 + $0x24] sm:$0xf]
    %v902 = vld [vmem:[%s891 + $0x28] sm:$0xf]
    %v903 = vld [vmem:[%s891 + $0x2c] sm:$0xf]
    %v904 = vld [vmem:[%s891 + $0x30] sm:$0xf]
    %v905 = vld [vmem:[%s891 + $0x34] sm:$0xf]
    %v906 = vld [vmem:[%s891 + $0x38] sm:$0xf]
    %v907 = vld [vmem:[%s891 + $0x3c] sm:$0xf]
    %s908 = scalar_lea.vmem [#allocation7], 320
    %v909 = vld [vmem:[%s908] sm:$0xf]
    %v910 = vld [vmem:[%s908 + $0x4] sm:$0xf]
    %v911 = vld [vmem:[%s908 + $0x8] sm:$0xf]
    %v912 = vld [vmem:[%s908 + $0xc] sm:$0xf]
    %v913 = vld [vmem:[%s908 + $0x10] sm:$0xf]
    %v914 = vld [vmem:[%s908 + $0x14] sm:$0xf]
    %v915 = vld [vmem:[%s908 + $0x18] sm:$0xf]
    %v916 = vld [vmem:[%s908 + $0x1c] sm:$0xf]
    %v917 = vld [vmem:[%s908 + $0x20] sm:$0xf]
    %v918 = vld [vmem:[%s908 + $0x24] sm:$0xf]
    %v919 = vld [vmem:[%s908 + $0x28] sm:$0xf]
    %v920 = vld [vmem:[%s908 + $0x2c] sm:$0xf]
    %v921 = vld [vmem:[%s908 + $0x30] sm:$0xf]
    %v922 = vld [vmem:[%s908 + $0x34] sm:$0xf]
    %v923 = vld [vmem:[%s908 + $0x38] sm:$0xf]
    %v924 = vld [vmem:[%s908 + $0x3c] sm:$0xf]
    %v925 = vpack.c.bf16 %v876, %v875
    %v926 = vpack.c.bf16 %v878, %v877
    %v927 = vpack.c.bf16 %v880, %v879
    %v928 = vpack.c.bf16 %v882, %v881
    %v929 = vpack.c.bf16 %v884, %v883
    %v930 = vpack.c.bf16 %v886, %v885
    %v931 = vpack.c.bf16 %v888, %v887
    %v932 = vpack.c.bf16 %v890, %v889
    %v933 = vperm.slane %v302, 4
    %v950 = vunpack.c.l.b16 %v892
    %v951 = vunpack.c.l.b16 %v893
    %v952 = vunpack.c.l.b16 %v894
    %v953 = vunpack.c.l.b16 %v895
    %v954 = vunpack.c.l.b16 %v896
    %v955 = vunpack.c.l.b16 %v897
    %v956 = vunpack.c.l.b16 %v898
    %v957 = vunpack.c.l.b16 %v899
    %v958 = vunpack.c.l.b16 %v900
    %v959 = vunpack.c.l.b16 %v901
    %v960 = vunpack.c.l.b16 %v902
    %v961 = vunpack.c.l.b16 %v903
    %v962 = vunpack.c.l.b16 %v904
    %v963 = vunpack.c.l.b16 %v905
    %v964 = vunpack.c.l.b16 %v906
    %v965 = vunpack.c.l.b16 %v907
    %v966 = vpack.c.b16 %v951, %v950
    %v967 = vpack.c.b16 %v953, %v952
    %v968 = vpack.c.b16 %v955, %v954
    %v969 = vpack.c.b16 %v957, %v956
    %v970 = vpack.c.b16 %v959, %v958
    %v971 = vpack.c.b16 %v961, %v960
    %v972 = vpack.c.b16 %v963, %v962
    %v973 = vpack.c.b16 %v965, %v964
    %982 = vmatpush.bf16.msra.mxu0 %v973
    %983 = vmatpush.bf16.msra.mxu0 %v972
    %984 = vmatpush.bf16.msra.mxu0 %v971
    %985 = vmatpush.bf16.msra.mxu0 %v970
    %986 = vmatpush.bf16.msra.mxu0 %v969
    %987 = vmatpush.bf16.msra.mxu0 %v968
    %988 = vmatpush.bf16.msra.mxu0 %v967
    %989 = vmatpush.bf16.msra.mxu0 %v966
    %990 = vmatmul.bf16.gmra.mxu0 %v925
    %v991 = vpop.f32.mrf.mxu0
    %v992 = vadd.f32 %v933, %v991
    %v993 = vpop.f32.mrf.mxu0
    %v994 = vadd.f32 %v933, %v993
    %995 = vmatmul.bf16.gmra.mxu0 %v926
    %v996 = vpop.f32.mrf.mxu0
    %v997 = vadd.f32 %v933, %v996
    %v998 = vpop.f32.mrf.mxu0
    %v999 = vadd.f32 %v933, %v998
    %1000 = vmatmul.bf16.gmra.mxu0 %v927
    %v1001 = vpop.f32.mrf.mxu0
    %v1002 = vadd.f32 %v933, %v1001
    %v1003 = vpop.f32.mrf.mxu0
    %v1004 = vadd.f32 %v933, %v1003
    %1005 = vmatmul.bf16.gmra.mxu0 %v928
    %v1006 = vpop.f32.mrf.mxu0
    %v1007 = vadd.f32 %v933, %v1006
    %v1008 = vpop.f32.mrf.mxu0
    %v1009 = vadd.f32 %v933, %v1008
    %1010 = vmatmul.bf16.gmra.mxu0 %v929
    %v1011 = vpop.f32.mrf.mxu0
    %v1012 = vadd.f32 %v933, %v1011
    %v1013 = vpop.f32.mrf.mxu0
    %v1014 = vadd.f32 %v933, %v1013
    %1015 = vmatmul.bf16.gmra.mxu0 %v930
    %v1016 = vpop.f32.mrf.mxu0
    %v1017 = vadd.f32 %v933, %v1016
    %v1018 = vpop.f32.mrf.mxu0
    %v1019 = vadd.f32 %v933, %v1018
    %1020 = vmatmul.bf16.gmra.mxu0 %v931
    %v1021 = vpop.f32.mrf.mxu0
    %v1022 = vadd.f32 %v933, %v1021
    %v1023 = vpop.f32.mrf.mxu0
    %v1024 = vadd.f32 %v933, %v1023
    %1025 = vmatmul.bf16.gmra.mxu0 %v932
    %v1026 = vpop.f32.mrf.mxu0
    %v1027 = vadd.f32 %v933, %v1026
    %v1028 = vpop.f32.mrf.mxu0
    %v1029 = vadd.f32 %v933, %v1028
    %1030 = vdwg.mxu0
    %v1031 = vmax.f32 %v992, 0.0
    %v1032 = vmax.f32 %v994, 0.0
    %v1033 = vmax.f32 %v997, 0.0
    %v1034 = vmax.f32 %v999, 0.0
    %v1035 = vmax.f32 %v1002, 0.0
    %v1036 = vmax.f32 %v1004, 0.0
    %v1037 = vmax.f32 %v1007, 0.0
    %v1038 = vmax.f32 %v1009, 0.0
    %v1039 = vmax.f32 %v1012, 0.0
    %v1040 = vmax.f32 %v1014, 0.0
    %v1041 = vmax.f32 %v1017, 0.0
    %v1042 = vmax.f32 %v1019, 0.0
    %v1043 = vmax.f32 %v1022, 0.0
    %v1044 = vmax.f32 %v1024, 0.0
    %v1045 = vmax.f32 %v1027, 0.0
    %v1046 = vmax.f32 %v1029, 0.0
    %v1047 = vpack.c.bf16 %v1032, %v1031
    %v1048 = vpack.c.bf16 %v1034, %v1033
    %v1049 = vpack.c.bf16 %v1036, %v1035
    %v1050 = vpack.c.bf16 %v1038, %v1037
    %v1051 = vpack.c.bf16 %v1040, %v1039
    %v1052 = vpack.c.bf16 %v1042, %v1041
    %v1053 = vpack.c.bf16 %v1044, %v1043
    %v1054 = vpack.c.bf16 %v1046, %v1045
    %v1055 = vperm.slane %v302, 5
    %v1072 = vunpack.c.l.b16 %v909
    %v1073 = vunpack.c.l.b16 %v910
    %v1074 = vunpack.c.l.b16 %v911
    %v1075 = vunpack.c.l.b16 %v912
    %v1076 = vunpack.c.l.b16 %v913
    %v1077 = vunpack.c.l.b16 %v914
    %v1078 = vunpack.c.l.b16 %v915
    %v1079 = vunpack.c.l.b16 %v916
    %v1080 = vunpack.c.l.b16 %v917
    %v1081 = vunpack.c.l.b16 %v918
    %v1082 = vunpack.c.l.b16 %v919
    %v1083 = vunpack.c.l.b16 %v920
    %v1084 = vunpack.c.l.b16 %v921
    %v1085 = vunpack.c.l.b16 %v922
    %v1086 = vunpack.c.l.b16 %v923
    %v1087 = vunpack.c.l.b16 %v924
    %v1088 = vpack.c.b16 %v1073, %v1072
    %v1089 = vpack.c.b16 %v1075, %v1074
    %v1090 = vpack.c.b16 %v1077, %v1076
    %v1091 = vpack.c.b16 %v1079, %v1078
    %v1092 = vpack.c.b16 %v1081, %v1080
    %v1093 = vpack.c.b16 %v1083, %v1082
    %v1094 = vpack.c.b16 %v1085, %v1084
    %v1095 = vpack.c.b16 %v1087, %v1086
    %1104 = vmatpush.bf16.msra.mxu0 %v1095
    %1105 = vmatpush.bf16.msra.mxu0 %v1094
    %1106 = vmatpush.bf16.msra.mxu0 %v1093
    %1107 = vmatpush.bf16.msra.mxu0 %v1092
    %1108 = vmatpush.bf16.msra.mxu0 %v1091
    %1109 = vmatpush.bf16.msra.mxu0 %v1090
    %1110 = vmatpush.bf16.msra.mxu0 %v1089
    %1111 = vmatpush.bf16.msra.mxu0 %v1088
    %1112 = vmatmul.bf16.gmra.mxu0 %v1047
    %v1113 = vpop.f32.mrf.mxu0
    %v1114 = vadd.f32 %v1055, %v1113
    %v1115 = vpop.f32.mrf.mxu0
    %v1116 = vadd.f32 %v1055, %v1115
    %1117 = vmatmul.bf16.gmra.mxu0 %v1048
    %v1118 = vpop.f32.mrf.mxu0
    %v1119 = vadd.f32 %v1055, %v1118
    %v1120 = vpop.f32.mrf.mxu0
    %v1121 = vadd.f32 %v1055, %v1120
    %1122 = vmatmul.bf16.gmra.mxu0 %v1049
    %v1123 = vpop.f32.mrf.mxu0
    %v1124 = vadd.f32 %v1055, %v1123
    %v1125 = vpop.f32.mrf.mxu0
    %v1126 = vadd.f32 %v1055, %v1125
    %1127 = vmatmul.bf16.gmra.mxu0 %v1050
    %v1128 = vpop.f32.mrf.mxu0
    %v1129 = vadd.f32 %v1055, %v1128
    %v1130 = vpop.f32.mrf.mxu0
    %v1131 = vadd.f32 %v1055, %v1130
    %1132 = vmatmul.bf16.gmra.mxu0 %v1051
    %v1133 = vpop.f32.mrf.mxu0
    %v1134 = vadd.f32 %v1055, %v1133
    %v1135 = vpop.f32.mrf.mxu0
    %v1136 = vadd.f32 %v1055, %v1135
    %1137 = vmatmul.bf16.gmra.mxu0 %v1052
    %v1138 = vpop.f32.mrf.mxu0
    %v1139 = vadd.f32 %v1055, %v1138
    %v1140 = vpop.f32.mrf.mxu0
    %v1141 = vadd.f32 %v1055, %v1140
    %1142 = vmatmul.bf16.gmra.mxu0 %v1053
    %v1143 = vpop.f32.mrf.mxu0
    %v1144 = vadd.f32 %v1055, %v1143
    %v1145 = vpop.f32.mrf.mxu0
    %v1146 = vadd.f32 %v1055, %v1145
    %1147 = vmatmul.bf16.gmra.mxu0 %v1054
    %v1148 = vpop.f32.mrf.mxu0
    %v1149 = vadd.f32 %v1055, %v1148
    %v1150 = vpop.f32.mrf.mxu0
    %v1151 = vadd.f32 %v1055, %v1150
    %1152 = vdwg.mxu0
    %v1153 = vadd.f32 %v1114, %v875
    %v1154 = vadd.f32 %v1116, %v876
    %v1155 = vadd.f32 %v1119, %v877
    %v1156 = vadd.f32 %v1121, %v878
    %v1157 = vadd.f32 %v1124, %v879
    %v1158 = vadd.f32 %v1126, %v880
    %v1159 = vadd.f32 %v1129, %v881
    %v1160 = vadd.f32 %v1131, %v882
    %v1161 = vadd.f32 %v1134, %v883
    %v1162 = vadd.f32 %v1136, %v884
    %v1163 = vadd.f32 %v1139, %v885
    %v1164 = vadd.f32 %v1141, %v886
    %v1165 = vadd.f32 %v1144, %v887
    %v1166 = vadd.f32 %v1146, %v888
    %v1167 = vadd.f32 %v1149, %v889
    %v1168 = vadd.f32 %v1151, %v890
    %v1169 = vmax.f32 %v1153, 0.0
    %v1170 = vmax.f32 %v1154, 0.0
    %v1171 = vmax.f32 %v1155, 0.0
    %v1172 = vmax.f32 %v1156, 0.0
    %v1173 = vmax.f32 %v1157, 0.0
    %v1174 = vmax.f32 %v1158, 0.0
    %v1175 = vmax.f32 %v1159, 0.0
    %v1176 = vmax.f32 %v1160, 0.0
    %v1177 = vmax.f32 %v1161, 0.0
    %v1178 = vmax.f32 %v1162, 0.0
    %v1179 = vmax.f32 %v1163, 0.0
    %v1180 = vmax.f32 %v1164, 0.0
    %v1181 = vmax.f32 %v1165, 0.0
    %v1182 = vmax.f32 %v1166, 0.0
    %v1183 = vmax.f32 %v1167, 0.0
    %v1184 = vmax.f32 %v1168, 0.0
    %s1185 = scalar_lea.vmem [#allocation7], 384
    %v1186 = vld [vmem:[%s1185] sm:$0xf]
    %v1187 = vld [vmem:[%s1185 + $0x4] sm:$0xf]
    %v1188 = vld [vmem:[%s1185 + $0x8] sm:$0xf]
    %v1189 = vld [vmem:[%s1185 + $0xc] sm:$0xf]
    %v1190 = vld [vmem:[%s1185 + $0x10] sm:$0xf]
    %v1191 = vld [vmem:[%s1185 + $0x14] sm:$0xf]
    %v1192 = vld [vmem:[%s1185 + $0x18] sm:$0xf]
    %v1193 = vld [vmem:[%s1185 + $0x1c] sm:$0xf]
    %v1194 = vld [vmem:[%s1185 + $0x20] sm:$0xf]
    %v1195 = vld [vmem:[%s1185 + $0x24] sm:$0xf]
    %v1196 = vld [vmem:[%s1185 + $0x28] sm:$0xf]
    %v1197 = vld [vmem:[%s1185 + $0x2c] sm:$0xf]
    %v1198 = vld [vmem:[%s1185 + $0x30] sm:$0xf]
    %v1199 = vld [vmem:[%s1185 + $0x34] sm:$0xf]
    %v1200 = vld [vmem:[%s1185 + $0x38] sm:$0xf]
    %v1201 = vld [vmem:[%s1185 + $0x3c] sm:$0xf]
    %s1202 = scalar_lea.vmem [#allocation7], 448
    %v1203 = vld [vmem:[%s1202] sm:$0xf]
    %v1204 = vld [vmem:[%s1202 + $0x4] sm:$0xf]
    %v1205 = vld [vmem:[%s1202 + $0x8] sm:$0xf]
    %v1206 = vld [vmem:[%s1202 + $0xc] sm:$0xf]
    %v1207 = vld [vmem:[%s1202 + $0x10] sm:$0xf]
    %v1208 = vld [vmem:[%s1202 + $0x14] sm:$0xf]
    %v1209 = vld [vmem:[%s1202 + $0x18] sm:$0xf]
    %v1210 = vld [vmem:[%s1202 + $0x1c] sm:$0xf]
    %v1211 = vld [vmem:[%s1202 + $0x20] sm:$0xf]
    %v1212 = vld [vmem:[%s1202 + $0x24] sm:$0xf]
    %v1213 = vld [vmem:[%s1202 + $0x28] sm:$0xf]
    %v1214 = vld [vmem:[%s1202 + $0x2c] sm:$0xf]
    %v1215 = vld [vmem:[%s1202 + $0x30] sm:$0xf]
    %v1216 = vld [vmem:[%s1202 + $0x34] sm:$0xf]
    %v1217 = vld [vmem:[%s1202 + $0x38] sm:$0xf]
    %v1218 = vld [vmem:[%s1202 + $0x3c] sm:$0xf]
    %v1219 = vpack.c.bf16 %v1170, %v1169
    %v1220 = vpack.c.bf16 %v1172, %v1171
    %v1221 = vpack.c.bf16 %v1174, %v1173
    %v1222 = vpack.c.bf16 %v1176, %v1175
    %v1223 = vpack.c.bf16 %v1178, %v1177
    %v1224 = vpack.c.bf16 %v1180, %v1179
    %v1225 = vpack.c.bf16 %v1182, %v1181
    %v1226 = vpack.c.bf16 %v1184, %v1183
    %v1227 = vperm.slane %v302, 6
    %v1244 = vunpack.c.l.b16 %v1186
    %v1245 = vunpack.c.l.b16 %v1187
    %v1246 = vunpack.c.l.b16 %v1188
    %v1247 = vunpack.c.l.b16 %v1189
    %v1248 = vunpack.c.l.b16 %v1190
    %v1249 = vunpack.c.l.b16 %v1191
    %v1250 = vunpack.c.l.b16 %v1192
    %v1251 = vunpack.c.l.b16 %v1193
    %v1252 = vunpack.c.l.b16 %v1194
    %v1253 = vunpack.c.l.b16 %v1195
    %v1254 = vunpack.c.l.b16 %v1196
    %v1255 = vunpack.c.l.b16 %v1197
    %v1256 = vunpack.c.l.b16 %v1198
    %v1257 = vunpack.c.l.b16 %v1199
    %v1258 = vunpack.c.l.b16 %v1200
    %v1259 = vunpack.c.l.b16 %v1201
    %v1260 = vpack.c.b16 %v1245, %v1244
    %v1261 = vpack.c.b16 %v1247, %v1246
    %v1262 = vpack.c.b16 %v1249, %v1248
    %v1263 = vpack.c.b16 %v1251, %v1250
    %v1264 = vpack.c.b16 %v1253, %v1252
    %v1265 = vpack.c.b16 %v1255, %v1254
    %v1266 = vpack.c.b16 %v1257, %v1256
    %v1267 = vpack.c.b16 %v1259, %v1258
    %1276 = vmatpush.bf16.msra.mxu0 %v1267
    %1277 = vmatpush.bf16.msra.mxu0 %v1266
    %1278 = vmatpush.bf16.msra.mxu0 %v1265
    %1279 = vmatpush.bf16.msra.mxu0 %v1264
    %1280 = vmatpush.bf16.msra.mxu0 %v1263
    %1281 = vmatpush.bf16.msra.mxu0 %v1262
    %1282 = vmatpush.bf16.msra.mxu0 %v1261
    %1283 = vmatpush.bf16.msra.mxu0 %v1260
    %1284 = vmatmul.bf16.gmra.mxu0 %v1219
    %v1285 = vpop.f32.mrf.mxu0
    %v1286 = vadd.f32 %v1227, %v1285
    %v1287 = vpop.f32.mrf.mxu0
    %v1288 = vadd.f32 %v1227, %v1287
    %1289 = vmatmul.bf16.gmra.mxu0 %v1220
    %v1290 = vpop.f32.mrf.mxu0
    %v1291 = vadd.f32 %v1227, %v1290
    %v1292 = vpop.f32.mrf.mxu0
    %v1293 = vadd.f32 %v1227, %v1292
    %1294 = vmatmul.bf16.gmra.mxu0 %v1221
    %v1295 = vpop.f32.mrf.mxu0
    %v1296 = vadd.f32 %v1227, %v1295
    %v1297 = vpop.f32.mrf.mxu0
    %v1298 = vadd.f32 %v1227, %v1297
    %1299 = vmatmul.bf16.gmra.mxu0 %v1222
    %v1300 = vpop.f32.mrf.mxu0
    %v1301 = vadd.f32 %v1227, %v1300
    %v1302 = vpop.f32.mrf.mxu0
    %v1303 = vadd.f32 %v1227, %v1302
    %1304 = vmatmul.bf16.gmra.mxu0 %v1223
    %v1305 = vpop.f32.mrf.mxu0
    %v1306 = vadd.f32 %v1227, %v1305
    %v1307 = vpop.f32.mrf.mxu0
    %v1308 = vadd.f32 %v1227, %v1307
    %1309 = vmatmul.bf16.gmra.mxu0 %v1224
    %v1310 = vpop.f32.mrf.mxu0
    %v1311 = vadd.f32 %v1227, %v1310
    %v1312 = vpop.f32.mrf.mxu0
    %v1313 = vadd.f32 %v1227, %v1312
    %1314 = vmatmul.bf16.gmra.mxu0 %v1225
    %v1315 = vpop.f32.mrf.mxu0
    %v1316 = vadd.f32 %v1227, %v1315
    %v1317 = vpop.f32.mrf.mxu0
    %v1318 = vadd.f32 %v1227, %v1317
    %1319 = vmatmul.bf16.gmra.mxu0 %v1226
    %v1320 = vpop.f32.mrf.mxu0
    %v1321 = vadd.f32 %v1227, %v1320
    %v1322 = vpop.f32.mrf.mxu0
    %v1323 = vadd.f32 %v1227, %v1322
    %1324 = vdwg.mxu0
    %v1325 = vmax.f32 %v1286, 0.0
    %v1326 = vmax.f32 %v1288, 0.0
    %v1327 = vmax.f32 %v1291, 0.0
    %v1328 = vmax.f32 %v1293, 0.0
    %v1329 = vmax.f32 %v1296, 0.0
    %v1330 = vmax.f32 %v1298, 0.0
    %v1331 = vmax.f32 %v1301, 0.0
    %v1332 = vmax.f32 %v1303, 0.0
    %v1333 = vmax.f32 %v1306, 0.0
    %v1334 = vmax.f32 %v1308, 0.0
    %v1335 = vmax.f32 %v1311, 0.0
    %v1336 = vmax.f32 %v1313, 0.0
    %v1337 = vmax.f32 %v1316, 0.0
    %v1338 = vmax.f32 %v1318, 0.0
    %v1339 = vmax.f32 %v1321, 0.0
    %v1340 = vmax.f32 %v1323, 0.0
    %v1341 = vpack.c.bf16 %v1326, %v1325
    %v1342 = vpack.c.bf16 %v1328, %v1327
    %v1343 = vpack.c.bf16 %v1330, %v1329
    %v1344 = vpack.c.bf16 %v1332, %v1331
    %v1345 = vpack.c.bf16 %v1334, %v1333
    %v1346 = vpack.c.bf16 %v1336, %v1335
    %v1347 = vpack.c.bf16 %v1338, %v1337
    %v1348 = vpack.c.bf16 %v1340, %v1339
    %v1349 = vperm.slane %v302, 7
    %v1366 = vunpack.c.l.b16 %v1203
    %v1367 = vunpack.c.l.b16 %v1204
    %v1368 = vunpack.c.l.b16 %v1205
    %v1369 = vunpack.c.l.b16 %v1206
    %v1370 = vunpack.c.l.b16 %v1207
    %v1371 = vunpack.c.l.b16 %v1208
    %v1372 = vunpack.c.l.b16 %v1209
    %v1373 = vunpack.c.l.b16 %v1210
    %v1374 = vunpack.c.l.b16 %v1211
    %v1375 = vunpack.c.l.b16 %v1212
    %v1376 = vunpack.c.l.b16 %v1213
    %v1377 = vunpack.c.l.b16 %v1214
    %v1378 = vunpack.c.l.b16 %v1215
    %v1379 = vunpack.c.l.b16 %v1216
    %v1380 = vunpack.c.l.b16 %v1217
    %v1381 = vunpack.c.l.b16 %v1218
    %v1382 = vpack.c.b16 %v1367, %v1366
    %v1383 = vpack.c.b16 %v1369, %v1368
    %v1384 = vpack.c.b16 %v1371, %v1370
    %v1385 = vpack.c.b16 %v1373, %v1372
    %v1386 = vpack.c.b16 %v1375, %v1374
    %v1387 = vpack.c.b16 %v1377, %v1376
    %v1388 = vpack.c.b16 %v1379, %v1378
    %v1389 = vpack.c.b16 %v1381, %v1380
    %1398 = vmatpush.bf16.msra.mxu0 %v1389
    %1399 = vmatpush.bf16.msra.mxu0 %v1388
    %1400 = vmatpush.bf16.msra.mxu0 %v1387
    %1401 = vmatpush.bf16.msra.mxu0 %v1386
    %1402 = vmatpush.bf16.msra.mxu0 %v1385
    %1403 = vmatpush.bf16.msra.mxu0 %v1384
    %1404 = vmatpush.bf16.msra.mxu0 %v1383
    %1405 = vmatpush.bf16.msra.mxu0 %v1382
    %1406 = vmatmul.bf16.gmra.mxu0 %v1341
    %v1407 = vpop.f32.mrf.mxu0
    %v1408 = vadd.f32 %v1349, %v1407
    %v1409 = vpop.f32.mrf.mxu0
    %v1410 = vadd.f32 %v1349, %v1409
    %1411 = vmatmul.bf16.gmra.mxu0 %v1342
    %v1412 = vpop.f32.mrf.mxu0
    %v1413 = vadd.f32 %v1349, %v1412
    %v1414 = vpop.f32.mrf.mxu0
    %v1415 = vadd.f32 %v1349, %v1414
    %1416 = vmatmul.bf16.gmra.mxu0 %v1343
    %v1417 = vpop.f32.mrf.mxu0
    %v1418 = vadd.f32 %v1349, %v1417
    %v1419 = vpop.f32.mrf.mxu0
    %v1420 = vadd.f32 %v1349, %v1419
    %1421 = vmatmul.bf16.gmra.mxu0 %v1344
    %v1422 = vpop.f32.mrf.mxu0
    %v1423 = vadd.f32 %v1349, %v1422
    %v1424 = vpop.f32.mrf.mxu0
    %v1425 = vadd.f32 %v1349, %v1424
    %1426 = vmatmul.bf16.gmra.mxu0 %v1345
    %v1427 = vpop.f32.mrf.mxu0
    %v1428 = vadd.f32 %v1349, %v1427
    %v1429 = vpop.f32.mrf.mxu0
    %v1430 = vadd.f32 %v1349, %v1429
    %1431 = vmatmul.bf16.gmra.mxu0 %v1346
    %v1432 = vpop.f32.mrf.mxu0
    %v1433 = vadd.f32 %v1349, %v1432
    %v1434 = vpop.f32.mrf.mxu0
    %v1435 = vadd.f32 %v1349, %v1434
    %1436 = vmatmul.bf16.gmra.mxu0 %v1347
    %v1437 = vpop.f32.mrf.mxu0
    %v1438 = vadd.f32 %v1349, %v1437
    %v1439 = vpop.f32.mrf.mxu0
    %v1440 = vadd.f32 %v1349, %v1439
    %1441 = vmatmul.bf16.gmra.mxu0 %v1348
    %v1442 = vpop.f32.mrf.mxu0
    %v1443 = vadd.f32 %v1349, %v1442
    %v1444 = vpop.f32.mrf.mxu0
    %v1445 = vadd.f32 %v1349, %v1444
    %1446 = vdwg.mxu0
    %v1447 = vadd.f32 %v1408, %v1169
    %v1448 = vadd.f32 %v1410, %v1170
    %v1449 = vadd.f32 %v1413, %v1171
    %v1450 = vadd.f32 %v1415, %v1172
    %v1451 = vadd.f32 %v1418, %v1173
    %v1452 = vadd.f32 %v1420, %v1174
    %v1453 = vadd.f32 %v1423, %v1175
    %v1454 = vadd.f32 %v1425, %v1176
    %v1455 = vadd.f32 %v1428, %v1177
    %v1456 = vadd.f32 %v1430, %v1178
    %v1457 = vadd.f32 %v1433, %v1179
    %v1458 = vadd.f32 %v1435, %v1180
    %v1459 = vadd.f32 %v1438, %v1181
    %v1460 = vadd.f32 %v1440, %v1182
    %v1461 = vadd.f32 %v1443, %v1183
    %v1462 = vadd.f32 %v1445, %v1184
    %v1463 = vmax.f32 %v1447, 0.0
    %v1464 = vmax.f32 %v1448, 0.0
    %v1465 = vmax.f32 %v1449, 0.0
    %v1466 = vmax.f32 %v1450, 0.0
    %v1467 = vmax.f32 %v1451, 0.0
    %v1468 = vmax.f32 %v1452, 0.0
    %v1469 = vmax.f32 %v1453, 0.0
    %v1470 = vmax.f32 %v1454, 0.0
    %v1471 = vmax.f32 %v1455, 0.0
    %v1472 = vmax.f32 %v1456, 0.0
    %v1473 = vmax.f32 %v1457, 0.0
    %v1474 = vmax.f32 %v1458, 0.0
    %v1475 = vmax.f32 %v1459, 0.0
    %v1476 = vmax.f32 %v1460, 0.0
    %v1477 = vmax.f32 %v1461, 0.0
    %v1478 = vmax.f32 %v1462, 0.0
    %s1479 = scalar_lea.vmem [#allocation7], 512
    %v1480 = vld [vmem:[%s1479] sm:$0xf]
    %v1481 = vld [vmem:[%s1479 + $0x4] sm:$0xf]
    %v1482 = vld [vmem:[%s1479 + $0x8] sm:$0xf]
    %v1483 = vld [vmem:[%s1479 + $0xc] sm:$0xf]
    %v1484 = vld [vmem:[%s1479 + $0x10] sm:$0xf]
    %v1485 = vld [vmem:[%s1479 + $0x14] sm:$0xf]
    %v1486 = vld [vmem:[%s1479 + $0x18] sm:$0xf]
    %v1487 = vld [vmem:[%s1479 + $0x1c] sm:$0xf]
    %v1488 = vld [vmem:[%s1479 + $0x20] sm:$0xf]
    %v1489 = vld [vmem:[%s1479 + $0x24] sm:$0xf]
    %v1490 = vld [vmem:[%s1479 + $0x28] sm:$0xf]
    %v1491 = vld [vmem:[%s1479 + $0x2c] sm:$0xf]
    %v1492 = vld [vmem:[%s1479 + $0x30] sm:$0xf]
    %v1493 = vld [vmem:[%s1479 + $0x34] sm:$0xf]
    %v1494 = vld [vmem:[%s1479 + $0x38] sm:$0xf]
    %v1495 = vld [vmem:[%s1479 + $0x3c] sm:$0xf]
    %s1496 = scalar_lea.vmem [#allocation7], 576
    %v1497 = vld [vmem:[%s1496] sm:$0xf]
    %v1498 = vld [vmem:[%s1496 + $0x4] sm:$0xf]
    %v1499 = vld [vmem:[%s1496 + $0x8] sm:$0xf]
    %v1500 = vld [vmem:[%s1496 + $0xc] sm:$0xf]
    %v1501 = vld [vmem:[%s1496 + $0x10] sm:$0xf]
    %v1502 = vld [vmem:[%s1496 + $0x14] sm:$0xf]
    %v1503 = vld [vmem:[%s1496 + $0x18] sm:$0xf]
    %v1504 = vld [vmem:[%s1496 + $0x1c] sm:$0xf]
    %v1505 = vld [vmem:[%s1496 + $0x20] sm:$0xf]
    %v1506 = vld [vmem:[%s1496 + $0x24] sm:$0xf]
    %v1507 = vld [vmem:[%s1496 + $0x28] sm:$0xf]
    %v1508 = vld [vmem:[%s1496 + $0x2c] sm:$0xf]
    %v1509 = vld [vmem:[%s1496 + $0x30] sm:$0xf]
    %v1510 = vld [vmem:[%s1496 + $0x34] sm:$0xf]
    %v1511 = vld [vmem:[%s1496 + $0x38] sm:$0xf]
    %v1512 = vld [vmem:[%s1496 + $0x3c] sm:$0xf]
    %v1513 = vpack.c.bf16 %v1464, %v1463
    %v1514 = vpack.c.bf16 %v1466, %v1465
    %v1515 = vpack.c.bf16 %v1468, %v1467
    %v1516 = vpack.c.bf16 %v1470, %v1469
    %v1517 = vpack.c.bf16 %v1472, %v1471
    %v1518 = vpack.c.bf16 %v1474, %v1473
    %v1519 = vpack.c.bf16 %v1476, %v1475
    %v1520 = vpack.c.bf16 %v1478, %v1477
    %v1521 = vperm.slane %v303, 0
    %v1538 = vunpack.c.l.b16 %v1480
    %v1539 = vunpack.c.l.b16 %v1481
    %v1540 = vunpack.c.l.b16 %v1482
    %v1541 = vunpack.c.l.b16 %v1483
    %v1542 = vunpack.c.l.b16 %v1484
    %v1543 = vunpack.c.l.b16 %v1485
    %v1544 = vunpack.c.l.b16 %v1486
    %v1545 = vunpack.c.l.b16 %v1487
    %v1546 = vunpack.c.l.b16 %v1488
    %v1547 = vunpack.c.l.b16 %v1489
    %v1548 = vunpack.c.l.b16 %v1490
    %v1549 = vunpack.c.l.b16 %v1491
    %v1550 = vunpack.c.l.b16 %v1492
    %v1551 = vunpack.c.l.b16 %v1493
    %v1552 = vunpack.c.l.b16 %v1494
    %v1553 = vunpack.c.l.b16 %v1495
    %v1554 = vpack.c.b16 %v1539, %v1538
    %v1555 = vpack.c.b16 %v1541, %v1540
    %v1556 = vpack.c.b16 %v1543, %v1542
    %v1557 = vpack.c.b16 %v1545, %v1544
    %v1558 = vpack.c.b16 %v1547, %v1546
    %v1559 = vpack.c.b16 %v1549, %v1548
    %v1560 = vpack.c.b16 %v1551, %v1550
    %v1561 = vpack.c.b16 %v1553, %v1552
    %1570 = vmatpush.bf16.msra.mxu0 %v1561
    %1571 = vmatpush.bf16.msra.mxu0 %v1560
    %1572 = vmatpush.bf16.msra.mxu0 %v1559
    %1573 = vmatpush.bf16.msra.mxu0 %v1558
    %1574 = vmatpush.bf16.msra.mxu0 %v1557
    %1575 = vmatpush.bf16.msra.mxu0 %v1556
    %1576 = vmatpush.bf16.msra.mxu0 %v1555
    %1577 = vmatpush.bf16.msra.mxu0 %v1554
    %1578 = vmatmul.bf16.gmra.mxu0 %v1513
    %v1579 = vpop.f32.mrf.mxu0
    %v1580 = vadd.f32 %v1521, %v1579
    %v1581 = vpop.f32.mrf.mxu0
    %v1582 = vadd.f32 %v1521, %v1581
    %1583 = vmatmul.bf16.gmra.mxu0 %v1514
    %v1584 = vpop.f32.mrf.mxu0
    %v1585 = vadd.f32 %v1521, %v1584
    %v1586 = vpop.f32.mrf.mxu0
    %v1587 = vadd.f32 %v1521, %v1586
    %1588 = vmatmul.bf16.gmra.mxu0 %v1515
    %v1589 = vpop.f32.mrf.mxu0
    %v1590 = vadd.f32 %v1521, %v1589
    %v1591 = vpop.f32.mrf.mxu0
    %v1592 = vadd.f32 %v1521, %v1591
    %1593 = vmatmul.bf16.gmra.mxu0 %v1516
    %v1594 = vpop.f32.mrf.mxu0
    %v1595 = vadd.f32 %v1521, %v1594
    %v1596 = vpop.f32.mrf.mxu0
    %v1597 = vadd.f32 %v1521, %v1596
    %1598 = vmatmul.bf16.gmra.mxu0 %v1517
    %v1599 = vpop.f32.mrf.mxu0
    %v1600 = vadd.f32 %v1521, %v1599
    %v1601 = vpop.f32.mrf.mxu0
    %v1602 = vadd.f32 %v1521, %v1601
    %1603 = vmatmul.bf16.gmra.mxu0 %v1518
    %v1604 = vpop.f32.mrf.mxu0
    %v1605 = vadd.f32 %v1521, %v1604
    %v1606 = vpop.f32.mrf.mxu0
    %v1607 = vadd.f32 %v1521, %v1606
    %1608 = vmatmul.bf16.gmra.mxu0 %v1519
    %v1609 = vpop.f32.mrf.mxu0
    %v1610 = vadd.f32 %v1521, %v1609
    %v1611 = vpop.f32.mrf.mxu0
    %v1612 = vadd.f32 %v1521, %v1611
    %1613 = vmatmul.bf16.gmra.mxu0 %v1520
    %v1614 = vpop.f32.mrf.mxu0
    %v1615 = vadd.f32 %v1521, %v1614
    %v1616 = vpop.f32.mrf.mxu0
    %v1617 = vadd.f32 %v1521, %v1616
    %1618 = vdwg.mxu0
    %v1619 = vmax.f32 %v1580, 0.0
    %v1620 = vmax.f32 %v1582, 0.0
    %v1621 = vmax.f32 %v1585, 0.0
    %v1622 = vmax.f32 %v1587, 0.0
    %v1623 = vmax.f32 %v1590, 0.0
    %v1624 = vmax.f32 %v1592, 0.0
    %v1625 = vmax.f32 %v1595, 0.0
    %v1626 = vmax.f32 %v1597, 0.0
    %v1627 = vmax.f32 %v1600, 0.0
    %v1628 = vmax.f32 %v1602, 0.0
    %v1629 = vmax.f32 %v1605, 0.0
    %v1630 = vmax.f32 %v1607, 0.0
    %v1631 = vmax.f32 %v1610, 0.0
    %v1632 = vmax.f32 %v1612, 0.0
    %v1633 = vmax.f32 %v1615, 0.0
    %v1634 = vmax.f32 %v1617, 0.0
    %v1635 = vpack.c.bf16 %v1620, %v1619
    %v1636 = vpack.c.bf16 %v1622, %v1621
    %v1637 = vpack.c.bf16 %v1624, %v1623
    %v1638 = vpack.c.bf16 %v1626, %v1625
    %v1639 = vpack.c.bf16 %v1628, %v1627
    %v1640 = vpack.c.bf16 %v1630, %v1629
    %v1641 = vpack.c.bf16 %v1632, %v1631
    %v1642 = vpack.c.bf16 %v1634, %v1633
    %v1643 = vperm.slane %v303, 1
    %v1660 = vunpack.c.l.b16 %v1497
    %v1661 = vunpack.c.l.b16 %v1498
    %v1662 = vunpack.c.l.b16 %v1499
    %v1663 = vunpack.c.l.b16 %v1500
    %v1664 = vunpack.c.l.b16 %v1501
    %v1665 = vunpack.c.l.b16 %v1502
    %v1666 = vunpack.c.l.b16 %v1503
    %v1667 = vunpack.c.l.b16 %v1504
    %v1668 = vunpack.c.l.b16 %v1505
    %v1669 = vunpack.c.l.b16 %v1506
    %v1670 = vunpack.c.l.b16 %v1507
    %v1671 = vunpack.c.l.b16 %v1508
    %v1672 = vunpack.c.l.b16 %v1509
    %v1673 = vunpack.c.l.b16 %v1510
    %v1674 = vunpack.c.l.b16 %v1511
    %v1675 = vunpack.c.l.b16 %v1512
    %v1676 = vpack.c.b16 %v1661, %v1660
    %v1677 = vpack.c.b16 %v1663, %v1662
    %v1678 = vpack.c.b16 %v1665, %v1664
    %v1679 = vpack.c.b16 %v1667, %v1666
    %v1680 = vpack.c.b16 %v1669, %v1668
    %v1681 = vpack.c.b16 %v1671, %v1670
    %v1682 = vpack.c.b16 %v1673, %v1672
    %v1683 = vpack.c.b16 %v1675, %v1674
    %1692 = vmatpush.bf16.msra.mxu0 %v1683
    %1693 = vmatpush.bf16.msra.mxu0 %v1682
    %1694 = vmatpush.bf16.msra.mxu0 %v1681
    %1695 = vmatpush.bf16.msra.mxu0 %v1680
    %1696 = vmatpush.bf16.msra.mxu0 %v1679
    %1697 = vmatpush.bf16.msra.mxu0 %v1678
    %1698 = vmatpush.bf16.msra.mxu0 %v1677
    %1699 = vmatpush.bf16.msra.mxu0 %v1676
    %1700 = vmatmul.bf16.gmra.mxu0 %v1635
    %v1701 = vpop.f32.mrf.mxu0
    %v1702 = vadd.f32 %v1643, %v1701
    %v1703 = vpop.f32.mrf.mxu0
    %v1704 = vadd.f32 %v1643, %v1703
    %1705 = vmatmul.bf16.gmra.mxu0 %v1636
    %v1706 = vpop.f32.mrf.mxu0
    %v1707 = vadd.f32 %v1643, %v1706
    %v1708 = vpop.f32.mrf.mxu0
    %v1709 = vadd.f32 %v1643, %v1708
    %1710 = vmatmul.bf16.gmra.mxu0 %v1637
    %v1711 = vpop.f32.mrf.mxu0
    %v1712 = vadd.f32 %v1643, %v1711
    %v1713 = vpop.f32.mrf.mxu0
    %v1714 = vadd.f32 %v1643, %v1713
    %1715 = vmatmul.bf16.gmra.mxu0 %v1638
    %v1716 = vpop.f32.mrf.mxu0
    %v1717 = vadd.f32 %v1643, %v1716
    %v1718 = vpop.f32.mrf.mxu0
    %v1719 = vadd.f32 %v1643, %v1718
    %1720 = vmatmul.bf16.gmra.mxu0 %v1639
    %v1721 = vpop.f32.mrf.mxu0
    %v1722 = vadd.f32 %v1643, %v1721
    %v1723 = vpop.f32.mrf.mxu0
    %v1724 = vadd.f32 %v1643, %v1723
    %1725 = vmatmul.bf16.gmra.mxu0 %v1640
    %v1726 = vpop.f32.mrf.mxu0
    %v1727 = vadd.f32 %v1643, %v1726
    %v1728 = vpop.f32.mrf.mxu0
    %v1729 = vadd.f32 %v1643, %v1728
    %1730 = vmatmul.bf16.gmra.mxu0 %v1641
    %v1731 = vpop.f32.mrf.mxu0
    %v1732 = vadd.f32 %v1643, %v1731
    %v1733 = vpop.f32.mrf.mxu0
    %v1734 = vadd.f32 %v1643, %v1733
    %1735 = vmatmul.bf16.gmra.mxu0 %v1642
    %v1736 = vpop.f32.mrf.mxu0
    %v1737 = vadd.f32 %v1643, %v1736
    %v1738 = vpop.f32.mrf.mxu0
    %v1739 = vadd.f32 %v1643, %v1738
    %1740 = vdwg.mxu0
    %v1741 = vadd.f32 %v1702, %v1463
    %v1742 = vadd.f32 %v1704, %v1464
    %v1743 = vadd.f32 %v1707, %v1465
    %v1744 = vadd.f32 %v1709, %v1466
    %v1745 = vadd.f32 %v1712, %v1467
    %v1746 = vadd.f32 %v1714, %v1468
    %v1747 = vadd.f32 %v1717, %v1469
    %v1748 = vadd.f32 %v1719, %v1470
    %v1749 = vadd.f32 %v1722, %v1471
    %v1750 = vadd.f32 %v1724, %v1472
    %v1751 = vadd.f32 %v1727, %v1473
    %v1752 = vadd.f32 %v1729, %v1474
    %v1753 = vadd.f32 %v1732, %v1475
    %v1754 = vadd.f32 %v1734, %v1476
    %v1755 = vadd.f32 %v1737, %v1477
    %v1756 = vadd.f32 %v1739, %v1478
    %v1757 = vmax.f32 %v1741, 0.0
    %v1758 = vmax.f32 %v1742, 0.0
    %v1759 = vmax.f32 %v1743, 0.0
    %v1760 = vmax.f32 %v1744, 0.0
    %v1761 = vmax.f32 %v1745, 0.0
    %v1762 = vmax.f32 %v1746, 0.0
    %v1763 = vmax.f32 %v1747, 0.0
    %v1764 = vmax.f32 %v1748, 0.0
    %v1765 = vmax.f32 %v1749, 0.0
    %v1766 = vmax.f32 %v1750, 0.0
    %v1767 = vmax.f32 %v1751, 0.0
    %v1768 = vmax.f32 %v1752, 0.0
    %v1769 = vmax.f32 %v1753, 0.0
    %v1770 = vmax.f32 %v1754, 0.0
    %v1771 = vmax.f32 %v1755, 0.0
    %v1772 = vmax.f32 %v1756, 0.0
    %s1773 = scalar_lea.vmem [#allocation7], 640
    %v1774 = vld [vmem:[%s1773] sm:$0xf]
    %v1775 = vld [vmem:[%s1773 + $0x4] sm:$0xf]
    %v1776 = vld [vmem:[%s1773 + $0x8] sm:$0xf]
    %v1777 = vld [vmem:[%s1773 + $0xc] sm:$0xf]
    %v1778 = vld [vmem:[%s1773 + $0x10] sm:$0xf]
    %v1779 = vld [vmem:[%s1773 + $0x14] sm:$0xf]
    %v1780 = vld [vmem:[%s1773 + $0x18] sm:$0xf]
    %v1781 = vld [vmem:[%s1773 + $0x1c] sm:$0xf]
    %v1782 = vld [vmem:[%s1773 + $0x20] sm:$0xf]
    %v1783 = vld [vmem:[%s1773 + $0x24] sm:$0xf]
    %v1784 = vld [vmem:[%s1773 + $0x28] sm:$0xf]
    %v1785 = vld [vmem:[%s1773 + $0x2c] sm:$0xf]
    %v1786 = vld [vmem:[%s1773 + $0x30] sm:$0xf]
    %v1787 = vld [vmem:[%s1773 + $0x34] sm:$0xf]
    %v1788 = vld [vmem:[%s1773 + $0x38] sm:$0xf]
    %v1789 = vld [vmem:[%s1773 + $0x3c] sm:$0xf]
    %s1790 = scalar_lea.vmem [#allocation7], 704
    %v1791 = vld [vmem:[%s1790] sm:$0xf]
    %v1792 = vld [vmem:[%s1790 + $0x4] sm:$0xf]
    %v1793 = vld [vmem:[%s1790 + $0x8] sm:$0xf]
    %v1794 = vld [vmem:[%s1790 + $0xc] sm:$0xf]
    %v1795 = vld [vmem:[%s1790 + $0x10] sm:$0xf]
    %v1796 = vld [vmem:[%s1790 + $0x14] sm:$0xf]
    %v1797 = vld [vmem:[%s1790 + $0x18] sm:$0xf]
    %v1798 = vld [vmem:[%s1790 + $0x1c] sm:$0xf]
    %v1799 = vld [vmem:[%s1790 + $0x20] sm:$0xf]
    %v1800 = vld [vmem:[%s1790 + $0x24] sm:$0xf]
    %v1801 = vld [vmem:[%s1790 + $0x28] sm:$0xf]
    %v1802 = vld [vmem:[%s1790 + $0x2c] sm:$0xf]
    %v1803 = vld [vmem:[%s1790 + $0x30] sm:$0xf]
    %v1804 = vld [vmem:[%s1790 + $0x34] sm:$0xf]
    %v1805 = vld [vmem:[%s1790 + $0x38] sm:$0xf]
    %v1806 = vld [vmem:[%s1790 + $0x3c] sm:$0xf]
    %v1807 = vpack.c.bf16 %v1758, %v1757
    %v1808 = vpack.c.bf16 %v1760, %v1759
    %v1809 = vpack.c.bf16 %v1762, %v1761
    %v1810 = vpack.c.bf16 %v1764, %v1763
    %v1811 = vpack.c.bf16 %v1766, %v1765
    %v1812 = vpack.c.bf16 %v1768, %v1767
    %v1813 = vpack.c.bf16 %v1770, %v1769
    %v1814 = vpack.c.bf16 %v1772, %v1771
    %v1815 = vperm.slane %v303, 2
    %v1832 = vunpack.c.l.b16 %v1774
    %v1833 = vunpack.c.l.b16 %v1775
    %v1834 = vunpack.c.l.b16 %v1776
    %v1835 = vunpack.c.l.b16 %v1777
    %v1836 = vunpack.c.l.b16 %v1778
    %v1837 = vunpack.c.l.b16 %v1779
    %v1838 = vunpack.c.l.b16 %v1780
    %v1839 = vunpack.c.l.b16 %v1781
    %v1840 = vunpack.c.l.b16 %v1782
    %v1841 = vunpack.c.l.b16 %v1783
    %v1842 = vunpack.c.l.b16 %v1784
    %v1843 = vunpack.c.l.b16 %v1785
    %v1844 = vunpack.c.l.b16 %v1786
    %v1845 = vunpack.c.l.b16 %v1787
    %v1846 = vunpack.c.l.b16 %v1788
    %v1847 = vunpack.c.l.b16 %v1789
    %v1848 = vpack.c.b16 %v1833, %v1832
    %v1849 = vpack.c.b16 %v1835, %v1834
    %v1850 = vpack.c.b16 %v1837, %v1836
    %v1851 = vpack.c.b16 %v1839, %v1838
    %v1852 = vpack.c.b16 %v1841, %v1840
    %v1853 = vpack.c.b16 %v1843, %v1842
    %v1854 = vpack.c.b16 %v1845, %v1844
    %v1855 = vpack.c.b16 %v1847, %v1846
    %1864 = vmatpush.bf16.msra.mxu0 %v1855
    %1865 = vmatpush.bf16.msra.mxu0 %v1854
    %1866 = vmatpush.bf16.msra.mxu0 %v1853
    %1867 = vmatpush.bf16.msra.mxu0 %v1852
    %1868 = vmatpush.bf16.msra.mxu0 %v1851
    %1869 = vmatpush.bf16.msra.mxu0 %v1850
    %1870 = vmatpush.bf16.msra.mxu0 %v1849
    %1871 = vmatpush.bf16.msra.mxu0 %v1848
    %1872 = vmatmul.bf16.gmra.mxu0 %v1807
    %v1873 = vpop.f32.mrf.mxu0
    %v1874 = vadd.f32 %v1815, %v1873
    %v1875 = vpop.f32.mrf.mxu0
    %v1876 = vadd.f32 %v1815, %v1875
    %1877 = vmatmul.bf16.gmra.mxu0 %v1808
    %v1878 = vpop.f32.mrf.mxu0
    %v1879 = vadd.f32 %v1815, %v1878
    %v1880 = vpop.f32.mrf.mxu0
    %v1881 = vadd.f32 %v1815, %v1880
    %1882 = vmatmul.bf16.gmra.mxu0 %v1809
    %v1883 = vpop.f32.mrf.mxu0
    %v1884 = vadd.f32 %v1815, %v1883
    %v1885 = vpop.f32.mrf.mxu0
    %v1886 = vadd.f32 %v1815, %v1885
    %1887 = vmatmul.bf16.gmra.mxu0 %v1810
    %v1888 = vpop.f32.mrf.mxu0
    %v1889 = vadd.f32 %v1815, %v1888
    %v1890 = vpop.f32.mrf.mxu0
    %v1891 = vadd.f32 %v1815, %v1890
    %1892 = vmatmul.bf16.gmra.mxu0 %v1811
    %v1893 = vpop.f32.mrf.mxu0
    %v1894 = vadd.f32 %v1815, %v1893
    %v1895 = vpop.f32.mrf.mxu0
    %v1896 = vadd.f32 %v1815, %v1895
    %1897 = vmatmul.bf16.gmra.mxu0 %v1812
    %v1898 = vpop.f32.mrf.mxu0
    %v1899 = vadd.f32 %v1815, %v1898
    %v1900 = vpop.f32.mrf.mxu0
    %v1901 = vadd.f32 %v1815, %v1900
    %1902 = vmatmul.bf16.gmra.mxu0 %v1813
    %v1903 = vpop.f32.mrf.mxu0
    %v1904 = vadd.f32 %v1815, %v1903
    %v1905 = vpop.f32.mrf.mxu0
    %v1906 = vadd.f32 %v1815, %v1905
    %1907 = vmatmul.bf16.gmra.mxu0 %v1814
    %v1908 = vpop.f32.mrf.mxu0
    %v1909 = vadd.f32 %v1815, %v1908
    %v1910 = vpop.f32.mrf.mxu0
    %v1911 = vadd.f32 %v1815, %v1910
    %1912 = vdwg.mxu0
    %v1913 = vmax.f32 %v1874, 0.0
    %v1914 = vmax.f32 %v1876, 0.0
    %v1915 = vmax.f32 %v1879, 0.0
    %v1916 = vmax.f32 %v1881, 0.0
    %v1917 = vmax.f32 %v1884, 0.0
    %v1918 = vmax.f32 %v1886, 0.0
    %v1919 = vmax.f32 %v1889, 0.0
    %v1920 = vmax.f32 %v1891, 0.0
    %v1921 = vmax.f32 %v1894, 0.0
    %v1922 = vmax.f32 %v1896, 0.0
    %v1923 = vmax.f32 %v1899, 0.0
    %v1924 = vmax.f32 %v1901, 0.0
    %v1925 = vmax.f32 %v1904, 0.0
    %v1926 = vmax.f32 %v1906, 0.0
    %v1927 = vmax.f32 %v1909, 0.0
    %v1928 = vmax.f32 %v1911, 0.0
    %v1929 = vpack.c.bf16 %v1914, %v1913
    %v1930 = vpack.c.bf16 %v1916, %v1915
    %v1931 = vpack.c.bf16 %v1918, %v1917
    %v1932 = vpack.c.bf16 %v1920, %v1919
    %v1933 = vpack.c.bf16 %v1922, %v1921
    %v1934 = vpack.c.bf16 %v1924, %v1923
    %v1935 = vpack.c.bf16 %v1926, %v1925
    %v1936 = vpack.c.bf16 %v1928, %v1927
    %v1937 = vperm.slane %v303, 3
    %v1954 = vunpack.c.l.b16 %v1791
    %v1955 = vunpack.c.l.b16 %v1792
    %v1956 = vunpack.c.l.b16 %v1793
    %v1957 = vunpack.c.l.b16 %v1794
    %v1958 = vunpack.c.l.b16 %v1795
    %v1959 = vunpack.c.l.b16 %v1796
    %v1960 = vunpack.c.l.b16 %v1797
    %v1961 = vunpack.c.l.b16 %v1798
    %v1962 = vunpack.c.l.b16 %v1799
    %v1963 = vunpack.c.l.b16 %v1800
    %v1964 = vunpack.c.l.b16 %v1801
    %v1965 = vunpack.c.l.b16 %v1802
    %v1966 = vunpack.c.l.b16 %v1803
    %v1967 = vunpack.c.l.b16 %v1804
    %v1968 = vunpack.c.l.b16 %v1805
    %v1969 = vunpack.c.l.b16 %v1806
    %v1970 = vpack.c.b16 %v1955, %v1954
    %v1971 = vpack.c.b16 %v1957, %v1956
    %v1972 = vpack.c.b16 %v1959, %v1958
    %v1973 = vpack.c.b16 %v1961, %v1960
    %v1974 = vpack.c.b16 %v1963, %v1962
    %v1975 = vpack.c.b16 %v1965, %v1964
    %v1976 = vpack.c.b16 %v1967, %v1966
    %v1977 = vpack.c.b16 %v1969, %v1968
    %1986 = vmatpush.bf16.msra.mxu0 %v1977
    %1987 = vmatpush.bf16.msra.mxu0 %v1976
    %1988 = vmatpush.bf16.msra.mxu0 %v1975
    %1989 = vmatpush.bf16.msra.mxu0 %v1974
    %1990 = vmatpush.bf16.msra.mxu0 %v1973
    %1991 = vmatpush.bf16.msra.mxu0 %v1972
    %1992 = vmatpush.bf16.msra.mxu0 %v1971
    %1993 = vmatpush.bf16.msra.mxu0 %v1970
    %1994 = vmatmul.bf16.gmra.mxu0 %v1929
    %v1995 = vpop.f32.mrf.mxu0
    %v1996 = vadd.f32 %v1937, %v1995
    %v1997 = vpop.f32.mrf.mxu0
    %v1998 = vadd.f32 %v1937, %v1997
    %1999 = vmatmul.bf16.gmra.mxu0 %v1930
    %v2000 = vpop.f32.mrf.mxu0
    %v2001 = vadd.f32 %v1937, %v2000
    %v2002 = vpop.f32.mrf.mxu0
    %v2003 = vadd.f32 %v1937, %v2002
    %2004 = vmatmul.bf16.gmra.mxu0 %v1931
    %v2005 = vpop.f32.mrf.mxu0
    %v2006 = vadd.f32 %v1937, %v2005
    %v2007 = vpop.f32.mrf.mxu0
    %v2008 = vadd.f32 %v1937, %v2007
    %2009 = vmatmul.bf16.gmra.mxu0 %v1932
    %v2010 = vpop.f32.mrf.mxu0
    %v2011 = vadd.f32 %v1937, %v2010
    %v2012 = vpop.f32.mrf.mxu0
    %v2013 = vadd.f32 %v1937, %v2012
    %2014 = vmatmul.bf16.gmra.mxu0 %v1933
    %v2015 = vpop.f32.mrf.mxu0
    %v2016 = vadd.f32 %v1937, %v2015
    %v2017 = vpop.f32.mrf.mxu0
    %v2018 = vadd.f32 %v1937, %v2017
    %2019 = vmatmul.bf16.gmra.mxu0 %v1934
    %v2020 = vpop.f32.mrf.mxu0
    %v2021 = vadd.f32 %v1937, %v2020
    %v2022 = vpop.f32.mrf.mxu0
    %v2023 = vadd.f32 %v1937, %v2022
    %2024 = vmatmul.bf16.gmra.mxu0 %v1935
    %v2025 = vpop.f32.mrf.mxu0
    %v2026 = vadd.f32 %v1937, %v2025
    %v2027 = vpop.f32.mrf.mxu0
    %v2028 = vadd.f32 %v1937, %v2027
    %2029 = vmatmul.bf16.gmra.mxu0 %v1936
    %v2030 = vpop.f32.mrf.mxu0
    %v2031 = vadd.f32 %v1937, %v2030
    %v2032 = vpop.f32.mrf.mxu0
    %v2033 = vadd.f32 %v1937, %v2032
    %2034 = vdwg.mxu0
    %v2035 = vadd.f32 %v1996, %v1757
    %v2036 = vadd.f32 %v1998, %v1758
    %v2037 = vadd.f32 %v2001, %v1759
    %v2038 = vadd.f32 %v2003, %v1760
    %v2039 = vadd.f32 %v2006, %v1761
    %v2040 = vadd.f32 %v2008, %v1762
    %v2041 = vadd.f32 %v2011, %v1763
    %v2042 = vadd.f32 %v2013, %v1764
    %v2043 = vadd.f32 %v2016, %v1765
    %v2044 = vadd.f32 %v2018, %v1766
    %v2045 = vadd.f32 %v2021, %v1767
    %v2046 = vadd.f32 %v2023, %v1768
    %v2047 = vadd.f32 %v2026, %v1769
    %v2048 = vadd.f32 %v2028, %v1770
    %v2049 = vadd.f32 %v2031, %v1771
    %v2050 = vadd.f32 %v2033, %v1772
    %v2051 = vmax.f32 %v2035, 0.0
    %v2052 = vmax.f32 %v2036, 0.0
    %v2053 = vmax.f32 %v2037, 0.0
    %v2054 = vmax.f32 %v2038, 0.0
    %v2055 = vmax.f32 %v2039, 0.0
    %v2056 = vmax.f32 %v2040, 0.0
    %v2057 = vmax.f32 %v2041, 0.0
    %v2058 = vmax.f32 %v2042, 0.0
    %v2059 = vmax.f32 %v2043, 0.0
    %v2060 = vmax.f32 %v2044, 0.0
    %v2061 = vmax.f32 %v2045, 0.0
    %v2062 = vmax.f32 %v2046, 0.0
    %v2063 = vmax.f32 %v2047, 0.0
    %v2064 = vmax.f32 %v2048, 0.0
    %v2065 = vmax.f32 %v2049, 0.0
    %v2066 = vmax.f32 %v2050, 0.0
    %v2067 = vpack.c.bf16 %v2052, %v2051
    %v2068 = vpack.c.bf16 %v2054, %v2053
    %v2069 = vpack.c.bf16 %v2056, %v2055
    %v2070 = vpack.c.bf16 %v2058, %v2057
    %v2071 = vpack.c.bf16 %v2060, %v2059
    %v2072 = vpack.c.bf16 %v2062, %v2061
    %v2073 = vpack.c.bf16 %v2064, %v2063
    %v2074 = vpack.c.bf16 %v2066, %v2065
    %v2075 = vld [vmem:[#allocation10] sm:$0xf]
    %v2076 = vld [vmem:[#allocation10 + $0x4] sm:$0xf]
    %v2077 = vld [vmem:[#allocation10 + $0x8] sm:$0xf]
    %v2078 = vld [vmem:[#allocation10 + $0xc] sm:$0xf]
    %v2079 = vld [vmem:[#allocation10 + $0x10] sm:$0xf]
    %v2080 = vld [vmem:[#allocation10 + $0x14] sm:$0xf]
    %v2081 = vld [vmem:[#allocation10 + $0x18] sm:$0xf]
    %v2082 = vld [vmem:[#allocation10 + $0x1c] sm:$0xf]
    %v2083 = vld [vmem:[#allocation10 + $0x20] sm:$0xf]
    %v2084 = vld [vmem:[#allocation10 + $0x24] sm:$0xf]
    %v2085 = vld [vmem:[#allocation10 + $0x28] sm:$0xf]
    %v2086 = vld [vmem:[#allocation10 + $0x2c] sm:$0xf]
    %v2087 = vld [vmem:[#allocation10 + $0x30] sm:$0xf]
    %v2088 = vld [vmem:[#allocation10 + $0x34] sm:$0xf]
    %v2089 = vld [vmem:[#allocation10 + $0x38] sm:$0xf]
    %v2090 = vld [vmem:[#allocation10 + $0x3c] sm:$0xf]
    %v2091 = vld [vmem:[%s6] sm:$0x1]
    %v2093 = vperm.slane %v2091, 0
    %v2111 = vunpack.c.l.b16 %v2075
    %v2112 = vunpack.c.l.b16 %v2076
    %v2113 = vunpack.c.l.b16 %v2077
    %v2114 = vunpack.c.l.b16 %v2078
    %v2115 = vunpack.c.l.b16 %v2079
    %v2116 = vunpack.c.l.b16 %v2080
    %v2117 = vunpack.c.l.b16 %v2081
    %v2118 = vunpack.c.l.b16 %v2082
    %v2119 = vunpack.c.l.b16 %v2083
    %v2120 = vunpack.c.l.b16 %v2084
    %v2121 = vunpack.c.l.b16 %v2085
    %v2122 = vunpack.c.l.b16 %v2086
    %v2123 = vunpack.c.l.b16 %v2087
    %v2124 = vunpack.c.l.b16 %v2088
    %v2125 = vunpack.c.l.b16 %v2089
    %v2126 = vunpack.c.l.b16 %v2090
    %v2127 = vpack.c.b16 %v2112, %v2111
    %v2128 = vpack.c.b16 %v2114, %v2113
    %v2129 = vpack.c.b16 %v2116, %v2115
    %v2130 = vpack.c.b16 %v2118, %v2117
    %v2131 = vpack.c.b16 %v2120, %v2119
    %v2132 = vpack.c.b16 %v2122, %v2121
    %v2133 = vpack.c.b16 %v2124, %v2123
    %v2134 = vpack.c.b16 %v2126, %v2125
    %2143 = vmatpush.bf16.msra.mxu0 %v2134
    %2144 = vmatpush.bf16.msra.mxu0 %v2133
    %2145 = vmatpush.bf16.msra.mxu0 %v2132
    %2146 = vmatpush.bf16.msra.mxu0 %v2131
    %2147 = vmatpush.bf16.msra.mxu0 %v2130
    %2148 = vmatpush.bf16.msra.mxu0 %v2129
    %2149 = vmatpush.bf16.msra.mxu0 %v2128
    %2150 = vmatpush.bf16.msra.mxu0 %v2127
    %2151 = vmatmul.bf16.gmra.mxu0 %v2067
    %v2152 = vpop.f32.mrf.mxu0
    %v2153 = vadd.f32 %v2093, %v2152
    %v2154 = vpop.f32.mrf.mxu0
    %v2155 = vadd.f32 %v2093, %v2154
    %2156 = vmatmul.bf16.gmra.mxu0 %v2068
    %v2157 = vpop.f32.mrf.mxu0
    %v2158 = vadd.f32 %v2093, %v2157
    %v2159 = vpop.f32.mrf.mxu0
    %v2160 = vadd.f32 %v2093, %v2159
    %2161 = vmatmul.bf16.gmra.mxu0 %v2069
    %v2162 = vpop.f32.mrf.mxu0
    %v2163 = vadd.f32 %v2093, %v2162
    %v2164 = vpop.f32.mrf.mxu0
    %v2165 = vadd.f32 %v2093, %v2164
    %2166 = vmatmul.bf16.gmra.mxu0 %v2070
    %v2167 = vpop.f32.mrf.mxu0
    %v2168 = vadd.f32 %v2093, %v2167
    %v2169 = vpop.f32.mrf.mxu0
    %v2170 = vadd.f32 %v2093, %v2169
    %2171 = vmatmul.bf16.gmra.mxu0 %v2071
    %v2172 = vpop.f32.mrf.mxu0
    %v2173 = vadd.f32 %v2093, %v2172
    %v2174 = vpop.f32.mrf.mxu0
    %v2175 = vadd.f32 %v2093, %v2174
    %2176 = vmatmul.bf16.gmra.mxu0 %v2072
    %v2177 = vpop.f32.mrf.mxu0
    %v2178 = vadd.f32 %v2093, %v2177
    %v2179 = vpop.f32.mrf.mxu0
    %v2180 = vadd.f32 %v2093, %v2179
    %2181 = vmatmul.bf16.gmra.mxu0 %v2073
    %v2182 = vpop.f32.mrf.mxu0
    %v2183 = vadd.f32 %v2093, %v2182
    %v2184 = vpop.f32.mrf.mxu0
    %v2185 = vadd.f32 %v2093, %v2184
    %2186 = vmatmul.bf16.gmra.mxu0 %v2074
    %v2187 = vpop.f32.mrf.mxu0
    %v2188 = vadd.f32 %v2093, %v2187
    %v2189 = vpop.f32.mrf.mxu0
    %v2190 = vadd.f32 %v2093, %v2189
    %2191 = vdwg.mxu0
    %2192 = vst [vmem:[#allocation11] sm:$0xff] %v2153
    %2193 = vst [vmem:[#allocation11 + $0x8] sm:$0xff] %v2155
    %2194 = vst [vmem:[#allocation11 + $0x10] sm:$0xff] %v2158
    %2195 = vst [vmem:[#allocation11 + $0x18] sm:$0xff] %v2160
    %2196 = vst [vmem:[#allocation11 + $0x20] sm:$0xff] %v2163
    %2197 = vst [vmem:[#allocation11 + $0x28] sm:$0xff] %v2165
    %2198 = vst [vmem:[#allocation11 + $0x30] sm:$0xff] %v2168
    %2199 = vst [vmem:[#allocation11 + $0x38] sm:$0xff] %v2170
    %2200 = vst [vmem:[#allocation11 + $0x40] sm:$0xff] %v2173
    %2201 = vst [vmem:[#allocation11 + $0x48] sm:$0xff] %v2175
    %2202 = vst [vmem:[#allocation11 + $0x50] sm:$0xff] %v2178
    %2203 = vst [vmem:[#allocation11 + $0x58] sm:$0xff] %v2180
    %2204 = vst [vmem:[#allocation11 + $0x60] sm:$0xff] %v2183
    %2205 = vst [vmem:[#allocation11 + $0x68] sm:$0xff] %v2185
    %2206 = vst [vmem:[#allocation11 + $0x70] sm:$0xff] %v2188
    %2207 = vst [vmem:[#allocation11 + $0x78] sm:$0xff] %v2190
    // Predicated region
    $region50: #{tpu_custom_call.1} parent=1 // pred_check
      _
    $region51: #{tpu_custom_call.1} parent=1 // pred_check_branch
      %2209 = sbr.rel (0) target = $region53
    $region52: #{tpu_custom_call.1} parent=1 // pred_region
      %2211 = vsyncadd [#allocation4], 0
      %s2212 = sshll.u32 [#allocation11], 4
      %s2213 = int_to_ptr.vmem [resolvable:$true] %s2212
      %s2214 = sshll.u32 %s7, 4
      %s2215 = int_to_ptr.hbm [resolvable:$true] %s2214
      %2220 = dma.vmem_to_hbm [thread:$0]  %s2213, 2048, %s2215, [#allocation4], 128, 128, 8
    $region53: #{tpu_custom_call.1} parent=1 // pred_fallthru
      _
    // Predicated region
    $region54: #{tpu_custom_call.1} parent=1 // pred_check
      _
    $region55: #{tpu_custom_call.1} parent=1 // pred_check_branch
      %2222 = sbr.rel (0) target = $region57
    $region56: #{tpu_custom_call.1} parent=1 // pred_region
      %2224 = dma.done [#allocation4], 2048
    $region57: #{tpu_custom_call.1} parent=1 // pred_fallthru
      _
    %2225 = vsyncpa [#allocation3], 1
    %2226 = vsyncpa [#allocation6], 1
    %2227 = vsyncpa [#allocation9], 1
    %2228 = vsyncpa [#allocation4], 1

// kernel: tpu_custom_call.1
$region0: #{tpu_custom_call.1}
  #allocation0 [shape = 'u32[]', space=smem, size = 0x4, offset = 0x4, fixed_abs, tag = 'smem constant byte address 0x4 - core index']
  #allocation1 [shape = 'u32[72,128]{1,0:T(1,128)}', space=vmem, size = 0x9000, scoped, tag = 'internal scratch']
  %s0 = inlined_call_operand.hbm [shape: bf16[128,128], index: 0, kind: input, shape index: {}]
  %s1 = inlined_call_operand.hbm [shape: bf16[128,128], index: 1, kind: input, shape index: {}]
  %s2 = inlined_call_operand.vmem [shape: f32[1,128], index: 2, kind: input, shape index: {}]
  %s3 = inlined_call_operand.hbm [shape: bf16[12,128,128], index: 3, kind: input, shape index: {}]
  %s4 = inlined_call_operand.hbm [shape: f32[12,128], index: 4, kind: input, shape index: {}]
  %s5 = inlined_call_operand.hbm [shape: bf16[128,128], index: 5, kind: input, shape index: {}]
  %s6 = inlined_call_operand.vmem [shape: f32[1,128], index: 6, kind: input, shape index: {}]
  %s7 = inlined_call_operand.hbm [shape: f32[128,128], index: 7, kind: output, shape index: {}]
  %s8 = sld [smem:[#allocation0]]
  $region58: #{tpu_custom_call.1} parent=0
    _
  %s10 = ssub.s32 1, %s8
  %s11 = scalar_select 0, %s10, %s8
  $region1: #{tpu_custom_call.1} parent=0
    #allocation2 [shape = 'u8[32768]{0}', space=vmem, size = 0x8000, scoped, tag = 'input window, operand 0, single buffered']
    #allocation3 [shape = 's32[1]{0}', space=sflag, size = 0x4, scoped, tag = 'scoped memory for tpu_custom_call.1']
    #allocation4 [shape = 's32[1]{0}', space=sflag, size = 0x4, scoped, tag = 'scoped memory for tpu_custom_call.1']
    #allocation5 [shape = 'u8[32768]{0}', space=vmem, size = 0x8000, scoped, tag = 'input window, operand 1, single buffered']
    #allocation6 [shape = 's32[1]{0}', space=sflag, size = 0x4, scoped, tag = 'scoped memory for tpu_custom_call.1']
    #allocation7 [shape = 'u8[393216]{0}', space=vmem, size = 0x60000, scoped, tag = 'input window, operand 3, single buffered']
    #allocation8 [shape = 'u8[8192]{0}', space=vmem, size = 0x2000, scoped, tag = 'input window, operand 4, single buffered']
    #allocation9 [shape = 's32[1]{0}', space=sflag, size = 0x4, scoped, tag = 'scoped memory for tpu_custom_call.1']
    #allocation10 [shape = 'u8[32768]{0}', space=vmem, size = 0x8000, scoped, tag = 'input window, operand 5, single buffered']
    #allocation11 [shape = 'u8[65536]{0}', space=vmem, size = 0x10000, scoped, tag = 'output window, operand 0, single buffered']
    %12 = vsyncpa [#allocation3], 0
    %13 = vsyncpa [#allocation6], 0
    %14 = vsyncpa [#allocation9], 0
    %15 = vsyncpa [#allocation4], 0
    // Predicated region
    $region2: #{tpu_custom_call.1} parent=1 // pred_check
      _
    $region3: #{tpu_custom_call.1} parent=1 // pred_check_branch
      %17 = sbr.rel (0) target = $region5
    $region4: #{tpu_custom_call.1} parent=1 // pred_region
      %19 = vsyncadd [#allocation3], 0
      %s20 = sshll.u32 %s0, 4
      %s21 = int_to_ptr.hbm [resolvable:$true] %s20
      %s22 = sshll.u32 [#allocation2], 4
      %s23 = int_to_ptr.vmem [resolvable:$true] %s22
      %28 = dma.hbm_to_vmem [thread:$0]  %s21, 1024, %s23, [#allocation3], 64, 64, 4
    $region5: #{tpu_custom_call.1} parent=1 // pred_fallthru
      _
    // Predicated region
    $region6: #{tpu_custom_call.1} parent=1 // pred_check
      _
    $region7: #{tpu_custom_call.1} parent=1 // pred_check_branch
      %30 = sbr.rel (0) target = $region9
    $region8: #{tpu_custom_call.1} parent=1 // pred_region
      %32 = vsyncadd [#allocation6], 0
      %s33 = sshll.u32 %s1, 4
      %s34 = int_to_ptr.hbm [resolvable:$true] %s33
      %s35 = sshll.u32 [#allocation5], 4
      %s36 = int_to_ptr.vmem [resolvable:$true] %s35
      %41 = dma.hbm_to_vmem [thread:$0]  %s34, 1024, %s36, [#allocation6], 64, 64, 4
    $region9: #{tpu_custom_call.1} parent=1 // pred_fallthru
      _
    // Predicated region
    $region10: #{tpu_custom_call.1} parent=1 // pred_check
      _
    $region11: #{tpu_custom_call.1} parent=1 // pred_check_branch
      %43 = sbr.rel (0) target = $region13
    $region12: #{tpu_custom_call.1} parent=1 // pred_region
      _
    $region13: #{tpu_custom_call.1} parent=1 // pred_fallthru
      _
    // Predicated region
    $region14: #{tpu_custom_call.1} parent=1 // pred_check
      _
    $region15: #{tpu_custom_call.1} parent=1 // pred_check_branch
      %45 = sbr.rel (0) target = $region17
    $region16: #{tpu_custom_call.1} parent=1 // pred_region
      %47 = vsyncadd [#allocation6], 0
      %s48 = sshll.u32 %s3, 4
      %s49 = int_to_ptr.hbm [resolvable:$true] %s48
      %s50 = sshll.u32 [#allocation7], 4
      %s51 = int_to_ptr.vmem [resolvable:$true] %s50
      %56 = dma.hbm_to_vmem [thread:$0]  %s49, 12288, %s51, [#allocation6], 64, 64, 4
    $region17: #{tpu_custom_call.1} parent=1 // pred_fallthru
      _
    // Predicated region
    $region18: #{tpu_custom_call.1} parent=1 // pred_check
      _
    $region19: #{tpu_custom_call.1} parent=1 // pred_check_branch
      %58 = sbr.rel (0) target = $region21
    $region20: #{tpu_custom_call.1} parent=1 // pred_region
      %60 = vsyncadd [#allocation9], 0
      %s61 = sshll.u32 %s4, 4
      %s62 = int_to_ptr.hbm [resolvable:$true] %s61
      %s63 = sshll.u32 [#allocation8], 4
      %s64 = int_to_ptr.vmem [resolvable:$true] %s63
      %69 = dma.hbm_to_vmem [thread:$0]  %s62, 256, %s64, [#allocation9], 128, 128, 8
    $region21: #{tpu_custom_call.1} parent=1 // pred_fallthru
      _
    // Predicated region
    $region22: #{tpu_custom_call.1} parent=1 // pred_check
      _
    $region23: #{tpu_custom_call.1} parent=1 // pred_check_branch
      %71 = sbr.rel (0) target = $region25
    $region24: #{tpu_custom_call.1} parent=1 // pred_region
      %73 = vsyncadd [#allocation9], 0
      %s74 = sshll.u32 %s5, 4
      %s75 = int_to_ptr.hbm [resolvable:$true] %s74
      %s76 = sshll.u32 [#allocation10], 4
      %s77 = int_to_ptr.vmem [resolvable:$true] %s76
      %82 = dma.hbm_to_vmem [thread:$0]  %s75, 1024, %s77, [#allocation9], 64, 64, 4
    $region25: #{tpu_custom_call.1} parent=1 // pred_fallthru
      _
    // Predicated region
    $region26: #{tpu_custom_call.1} parent=1 // pred_check
      _
    $region27: #{tpu_custom_call.1} parent=1 // pred_check_branch
      %84 = sbr.rel (0) target = $region29
    $region28: #{tpu_custom_call.1} parent=1 // pred_region
      _
    $region29: #{tpu_custom_call.1} parent=1 // pred_fallthru
      _
    // Predicated region
    $region30: #{tpu_custom_call.1} parent=1 // pred_check
      _
    $region31: #{tpu_custom_call.1} parent=1 // pred_check_branch
      %86 = sbr.rel (0) target = $region33
    $region32: #{tpu_custom_call.1} parent=1 // pred_region
      %88 = dma.done [#allocation3], 1024
    $region33: #{tpu_custom_call.1} parent=1 // pred_fallthru
      _
    // Predicated region
    $region34: #{tpu_custom_call.1} parent=1 // pred_check
      _
    $region35: #{tpu_custom_call.1} parent=1 // pred_check_branch
      %90 = sbr.rel (0) target = $region37
    $region36: #{tpu_custom_call.1} parent=1 // pred_region
      %92 = dma.done [#allocation6], 1024
    $region37: #{tpu_custom_call.1} parent=1 // pred_fallthru
      _
    // Predicated region
    $region38: #{tpu_custom_call.1} parent=1 // pred_check
      _
    $region39: #{tpu_custom_call.1} parent=1 // pred_check_branch
      %94 = sbr.rel (0) target = $region41
    $region40: #{tpu_custom_call.1} parent=1 // pred_region
      %96 = dma.done [#allocation6], 12288
    $region41: #{tpu_custom_call.1} parent=1 // pred_fallthru
      _
    // Predicated region
    $region42: #{tpu_custom_call.1} parent=1 // pred_check
      _
    $region43: #{tpu_custom_call.1} parent=1 // pred_check_branch
      %98 = sbr.rel (0) target = $region45
    $region44: #{tpu_custom_call.1} parent=1 // pred_region
      %100 = dma.done [#allocation9], 256
    $region45: #{tpu_custom_call.1} parent=1 // pred_fallthru
      _
    // Predicated region
    $region46: #{tpu_custom_call.1} parent=1 // pred_check
      _
    $region47: #{tpu_custom_call.1} parent=1 // pred_check_branch
      %102 = sbr.rel (0) target = $region49
    $region48: #{tpu_custom_call.1} parent=1 // pred_region
      %104 = dma.done [#allocation9], 1024
    $region49: #{tpu_custom_call.1} parent=1 // pred_fallthru
      _
    %v105 = vld [vmem:[#allocation2] sm:$0xf]
    %v106 = vld [vmem:[#allocation2 + $0x4] sm:$0xf]
    %v107 = vld [vmem:[#allocation2 + $0x8] sm:$0xf]
    %v108 = vld [vmem:[#allocation2 + $0xc] sm:$0xf]
    %v109 = vld [vmem:[#allocation2 + $0x10] sm:$0xf]
    %v110 = vld [vmem:[#allocation2 + $0x14] sm:$0xf]
    %v111 = vld [vmem:[#allocation2 + $0x18] sm:$0xf]
    %v112 = vld [vmem:[#allocation2 + $0x1c] sm:$0xf]
    %v113 = vld [vmem:[#allocation2 + $0x20] sm:$0xf]
    %v114 = vld [vmem:[#allocation2 + $0x24] sm:$0xf]
    %v115 = vld [vmem:[#allocation2 + $0x28] sm:$0xf]
    %v116 = vld [vmem:[#allocation2 + $0x2c] sm:$0xf]
    %v117 = vld [vmem:[#allocation2 + $0x30] sm:$0xf]
    %v118 = vld [vmem:[#allocation2 + $0x34] sm:$0xf]
    %v119 = vld [vmem:[#allocation2 + $0x38] sm:$0xf]
    %v120 = vld [vmem:[#allocation2 + $0x3c] sm:$0xf]
    %v121 = vld [vmem:[#allocation5] sm:$0xf]
    %v122 = vld [vmem:[#allocation5 + $0x4] sm:$0xf]
    %v123 = vld [vmem:[#allocation5 + $0x8] sm:$0xf]
    %v124 = vld [vmem:[#allocation5 + $0xc] sm:$0xf]
    %v125 = vld [vmem:[#allocation5 + $0x10] sm:$0xf]
    %v126 = vld [vmem:[#allocation5 + $0x14] sm:$0xf]
    %v127 = vld [vmem:[#allocation5 + $0x18] sm:$0xf]
    %v128 = vld [vmem:[#allocation5 + $0x1c] sm:$0xf]
    %v129 = vld [vmem:[#allocation5 + $0x20] sm:$0xf]
    %v130 = vld [vmem:[#allocation5 + $0x24] sm:$0xf]
    %v131 = vld [vmem:[#allocation5 + $0x28] sm:$0xf]
    %v132 = vld [vmem:[#allocation5 + $0x2c] sm:$0xf]
    %v133 = vld [vmem:[#allocation5 + $0x30] sm:$0xf]
    %v134 = vld [vmem:[#allocation5 + $0x34] sm:$0xf]
    %v135 = vld [vmem:[#allocation5 + $0x38] sm:$0xf]
    %v136 = vld [vmem:[#allocation5 + $0x3c] sm:$0xf]
    %v137 = vld [vmem:[%s2] sm:$0x1]
    %v139 = vperm.slane %v137, 0
    %v157 = vunpack.c.l.b16 %v105
    %v158 = vunpack.c.l.b16 %v106
    %v159 = vunpack.c.l.b16 %v107
    %v160 = vunpack.c.l.b16 %v108
    %v161 = vunpack.c.l.b16 %v109
    %v162 = vunpack.c.l.b16 %v110
    %v163 = vunpack.c.l.b16 %v111
    %v164 = vunpack.c.l.b16 %v112
    %v165 = vunpack.c.l.b16 %v113
    %v166 = vunpack.c.l.b16 %v114
    %v167 = vunpack.c.l.b16 %v115
    %v168 = vunpack.c.l.b16 %v116
    %v169 = vunpack.c.l.b16 %v117
    %v170 = vunpack.c.l.b16 %v118
    %v171 = vunpack.c.l.b16 %v119
    %v172 = vunpack.c.l.b16 %v120
    %v173 = vpack.c.b16 %v158, %v157
    %v174 = vpack.c.b16 %v160, %v159
    %v175 = vpack.c.b16 %v162, %v161
    %v176 = vpack.c.b16 %v164, %v163
    %v177 = vpack.c.b16 %v166, %v165
    %v178 = vpack.c.b16 %v168, %v167
    %v179 = vpack.c.b16 %v170, %v169
    %v180 = vpack.c.b16 %v172, %v171
    %v205 = vunpack.c.l.b16 %v121
    %v206 = vunpack.c.l.b16 %v122
    %v207 = vunpack.c.l.b16 %v123
    %v208 = vunpack.c.l.b16 %v124
    %v209 = vunpack.c.l.b16 %v125
    %v210 = vunpack.c.l.b16 %v126
    %v211 = vunpack.c.l.b16 %v127
    %v212 = vunpack.c.l.b16 %v128
    %v213 = vunpack.c.l.b16 %v129
    %v214 = vunpack.c.l.b16 %v130
    %v215 = vunpack.c.l.b16 %v131
    %v216 = vunpack.c.l.b16 %v132
    %v217 = vunpack.c.l.b16 %v133
    %v218 = vunpack.c.l.b16 %v134
    %v219 = vunpack.c.l.b16 %v135
    %v220 = vunpack.c.l.b16 %v136
    %v221 = vpack.c.b16 %v206, %v205
    %v222 = vpack.c.b16 %v208, %v207
    %v223 = vpack.c.b16 %v210, %v209
    %v224 = vpack.c.b16 %v212, %v211
    %v225 = vpack.c.b16 %v214, %v213
    %v226 = vpack.c.b16 %v216, %v215
    %v227 = vpack.c.b16 %v218, %v217
    %v228 = vpack.c.b16 %v220, %v219
    %237 = vmatpush.bf16.msra.mxu0 %v228
    %238 = vmatpush.bf16.msra.mxu0 %v227
    %239 = vmatpush.bf16.msra.mxu0 %v226
    %240 = vmatpush.bf16.msra.mxu0 %v225
    %241 = vmatpush.bf16.msra.mxu0 %v224
    %242 = vmatpush.bf16.msra.mxu0 %v223
    %243 = vmatpush.bf16.msra.mxu0 %v222
    %244 = vmatpush.bf16.msra.mxu0 %v221
    %245 = vmatmul.bf16.gmra.mxu0 %v173
    %v246 = vpop.f32.mrf.mxu0
    %v247 = vadd.f32 %v139, %v246
    %v248 = vpop.f32.mrf.mxu0
    %v249 = vadd.f32 %v139, %v248
    %250 = vmatmul.bf16.gmra.mxu0 %v174
    %v251 = vpop.f32.mrf.mxu0
    %v252 = vadd.f32 %v139, %v251
    %v253 = vpop.f32.mrf.mxu0
    %v254 = vadd.f32 %v139, %v253
    %255 = vmatmul.bf16.gmra.mxu0 %v175
    %v256 = vpop.f32.mrf.mxu0
    %v257 = vadd.f32 %v139, %v256
    %v258 = vpop.f32.mrf.mxu0
    %v259 = vadd.f32 %v139, %v258
    %260 = vmatmul.bf16.gmra.mxu0 %v176
    %v261 = vpop.f32.mrf.mxu0
    %v262 = vadd.f32 %v139, %v261
    %v263 = vpop.f32.mrf.mxu0
    %v264 = vadd.f32 %v139, %v263
    %265 = vmatmul.bf16.gmra.mxu0 %v177
    %v266 = vpop.f32.mrf.mxu0
    %v267 = vadd.f32 %v139, %v266
    %v268 = vpop.f32.mrf.mxu0
    %v269 = vadd.f32 %v139, %v268
    %270 = vmatmul.bf16.gmra.mxu0 %v178
    %v271 = vpop.f32.mrf.mxu0
    %v272 = vadd.f32 %v139, %v271
    %v273 = vpop.f32.mrf.mxu0
    %v274 = vadd.f32 %v139, %v273
    %275 = vmatmul.bf16.gmra.mxu0 %v179
    %v276 = vpop.f32.mrf.mxu0
    %v277 = vadd.f32 %v139, %v276
    %v278 = vpop.f32.mrf.mxu0
    %v279 = vadd.f32 %v139, %v278
    %280 = vmatmul.bf16.gmra.mxu0 %v180
    %v281 = vpop.f32.mrf.mxu0
    %v282 = vadd.f32 %v139, %v281
    %v283 = vpop.f32.mrf.mxu0
    %v284 = vadd.f32 %v139, %v283
    %285 = vdwg.mxu0
    %v286 = vmax.f32 %v247, 0.0
    %v287 = vmax.f32 %v249, 0.0
    %v288 = vmax.f32 %v252, 0.0
    %v289 = vmax.f32 %v254, 0.0
    %v290 = vmax.f32 %v257, 0.0
    %v291 = vmax.f32 %v259, 0.0
    %v292 = vmax.f32 %v262, 0.0
    %v293 = vmax.f32 %v264, 0.0
    %v294 = vmax.f32 %v267, 0.0
    %v295 = vmax.f32 %v269, 0.0
    %v296 = vmax.f32 %v272, 0.0
    %v297 = vmax.f32 %v274, 0.0
    %v298 = vmax.f32 %v277, 0.0
    %v299 = vmax.f32 %v279, 0.0
    %v300 = vmax.f32 %v282, 0.0
    %v301 = vmax.f32 %v284, 0.0
    %v302 = vld [vmem:[#allocation8] sm:$0xff]
    %v303 = vld [vmem:[#allocation8 + $0x8] sm:$0xf]
    %v304 = vld [vmem:[#allocation7] sm:$0xf]
    %v305 = vld [vmem:[#allocation7 + $0x4] sm:$0xf]
    %v306 = vld [vmem:[#allocation7 + $0x8] sm:$0xf]
    %v307 = vld [vmem:[#allocation7 + $0xc] sm:$0xf]
    %v308 = vld [vmem:[#allocation7 + $0x10] sm:$0xf]
    %v309 = vld [vmem:[#allocation7 + $0x14] sm:$0xf]
    %v310 = vld [vmem:[#allocation7 + $0x18] sm:$0xf]
    %v311 = vld [vmem:[#allocation7 + $0x1c] sm:$0xf]
    %v312 = vld [vmem:[#allocation7 + $0x20] sm:$0xf]
    %v313 = vld [vmem:[#allocation7 + $0x24] sm:$0xf]
    %v314 = vld [vmem:[#allocation7 + $0x28] sm:$0xf]
    %v315 = vld [vmem:[#allocation7 + $0x2c] sm:$0xf]
    %v316 = vld [vmem:[#allocation7 + $0x30] sm:$0xf]
    %v317 = vld [vmem:[#allocation7 + $0x34] sm:$0xf]
    %v318 = vld [vmem:[#allocation7 + $0x38] sm:$0xf]
    %v319 = vld [vmem:[#allocation7 + $0x3c] sm:$0xf]
    %s320 = scalar_lea.vmem [#allocation7], 64
    %v321 = vld [vmem:[%s320] sm:$0xf]
    %v322 = vld [vmem:[%s320 + $0x4] sm:$0xf]
    %v323 = vld [vmem:[%s320 + $0x8] sm:$0xf]
    %v324 = vld [vmem:[%s320 + $0xc] sm:$0xf]
    %v325 = vld [vmem:[%s320 + $0x10] sm:$0xf]
    %v326 = vld [vmem:[%s320 + $0x14] sm:$0xf]
    %v327 = vld [vmem:[%s320 + $0x18] sm:$0xf]
    %v328 = vld [vmem:[%s320 + $0x1c] sm:$0xf]
    %v329 = vld [vmem:[%s320 + $0x20] sm:$0xf]
    %v330 = vld [vmem:[%s320 + $0x24] sm:$0xf]
    %v331 = vld [vmem:[%s320 + $0x28] sm:$0xf]
    %v332 = vld [vmem:[%s320 + $0x2c] sm:$0xf]
    %v333 = vld [vmem:[%s320 + $0x30] sm:$0xf]
    %v334 = vld [vmem:[%s320 + $0x34] sm:$0xf]
    %v335 = vld [vmem:[%s320 + $0x38] sm:$0xf]
    %v336 = vld [vmem:[%s320 + $0x3c] sm:$0xf]
    %v337 = vpack.c.bf16 %v287, %v286
    %v338 = vpack.c.bf16 %v289, %v288
    %v339 = vpack.c.bf16 %v291, %v290
    %v340 = vpack.c.bf16 %v293, %v292
    %v341 = vpack.c.bf16 %v295, %v294
    %v342 = vpack.c.bf16 %v297, %v296
    %v343 = vpack.c.bf16 %v299, %v298
    %v344 = vpack.c.bf16 %v301, %v300
    %v345 = vperm.slane %v302, 0
    %v362 = vunpack.c.l.b16 %v304
    %v363 = vunpack.c.l.b16 %v305
    %v364 = vunpack.c.l.b16 %v306
    %v365 = vunpack.c.l.b16 %v307
    %v366 = vunpack.c.l.b16 %v308
    %v367 = vunpack.c.l.b16 %v309
    %v368 = vunpack.c.l.b16 %v310
    %v369 = vunpack.c.l.b16 %v311
    %v370 = vunpack.c.l.b16 %v312
    %v371 = vunpack.c.l.b16 %v313
    %v372 = vunpack.c.l.b16 %v314
    %v373 = vunpack.c.l.b16 %v315
    %v374 = vunpack.c.l.b16 %v316
    %v375 = vunpack.c.l.b16 %v317
    %v376 = vunpack.c.l.b16 %v318
    %v377 = vunpack.c.l.b16 %v319
    %v378 = vpack.c.b16 %v363, %v362
    %v379 = vpack.c.b16 %v365, %v364
    %v380 = vpack.c.b16 %v367, %v366
    %v381 = vpack.c.b16 %v369, %v368
    %v382 = vpack.c.b16 %v371, %v370
    %v383 = vpack.c.b16 %v373, %v372
    %v384 = vpack.c.b16 %v375, %v374
    %v385 = vpack.c.b16 %v377, %v376
    %394 = vmatpush.bf16.msra.mxu0 %v385
    %395 = vmatpush.bf16.msra.mxu0 %v384
    %396 = vmatpush.bf16.msra.mxu0 %v383
    %397 = vmatpush.bf16.msra.mxu0 %v382
    %398 = vmatpush.bf16.msra.mxu0 %v381
    %399 = vmatpush.bf16.msra.mxu0 %v380
    %400 = vmatpush.bf16.msra.mxu0 %v379
    %401 = vmatpush.bf16.msra.mxu0 %v378
    %402 = vmatmul.bf16.gmra.mxu0 %v337
    %v403 = vpop.f32.mrf.mxu0
    %v404 = vadd.f32 %v345, %v403
    %v405 = vpop.f32.mrf.mxu0
    %v406 = vadd.f32 %v345, %v405
    %407 = vmatmul.bf16.gmra.mxu0 %v338
    %v408 = vpop.f32.mrf.mxu0
    %v409 = vadd.f32 %v345, %v408
    %v410 = vpop.f32.mrf.mxu0
    %v411 = vadd.f32 %v345, %v410
    %412 = vmatmul.bf16.gmra.mxu0 %v339
    %v413 = vpop.f32.mrf.mxu0
    %v414 = vadd.f32 %v345, %v413
    %v415 = vpop.f32.mrf.mxu0
    %v416 = vadd.f32 %v345, %v415
    %417 = vmatmul.bf16.gmra.mxu0 %v340
    %v418 = vpop.f32.mrf.mxu0
    %v419 = vadd.f32 %v345, %v418
    %v420 = vpop.f32.mrf.mxu0
    %v421 = vadd.f32 %v345, %v420
    %422 = vmatmul.bf16.gmra.mxu0 %v341
    %v423 = vpop.f32.mrf.mxu0
    %v424 = vadd.f32 %v345, %v423
    %v425 = vpop.f32.mrf.mxu0
    %v426 = vadd.f32 %v345, %v425
    %427 = vmatmul.bf16.gmra.mxu0 %v342
    %v428 = vpop.f32.mrf.mxu0
    %v429 = vadd.f32 %v345, %v428
    %v430 = vpop.f32.mrf.mxu0
    %v431 = vadd.f32 %v345, %v430
    %432 = vmatmul.bf16.gmra.mxu0 %v343
    %v433 = vpop.f32.mrf.mxu0
    %v434 = vadd.f32 %v345, %v433
    %v435 = vpop.f32.mrf.mxu0
    %v436 = vadd.f32 %v345, %v435
    %437 = vmatmul.bf16.gmra.mxu0 %v344
    %v438 = vpop.f32.mrf.mxu0
    %v439 = vadd.f32 %v345, %v438
    %v440 = vpop.f32.mrf.mxu0
    %v441 = vadd.f32 %v345, %v440
    %442 = vdwg.mxu0
    %v443 = vmax.f32 %v404, 0.0
    %v444 = vmax.f32 %v406, 0.0
    %v445 = vmax.f32 %v409, 0.0
    %v446 = vmax.f32 %v411, 0.0
    %v447 = vmax.f32 %v414, 0.0
    %v448 = vmax.f32 %v416, 0.0
    %v449 = vmax.f32 %v419, 0.0
    %v450 = vmax.f32 %v421, 0.0
    %v451 = vmax.f32 %v424, 0.0
    %v452 = vmax.f32 %v426, 0.0
    %v453 = vmax.f32 %v429, 0.0
    %v454 = vmax.f32 %v431, 0.0
    %v455 = vmax.f32 %v434, 0.0
    %v456 = vmax.f32 %v436, 0.0
    %v457 = vmax.f32 %v439, 0.0
    %v458 = vmax.f32 %v441, 0.0
    %v459 = vpack.c.bf16 %v444, %v443
    %v460 = vpack.c.bf16 %v446, %v445
    %v461 = vpack.c.bf16 %v448, %v447
    %v462 = vpack.c.bf16 %v450, %v449
    %v463 = vpack.c.bf16 %v452, %v451
    %v464 = vpack.c.bf16 %v454, %v453
    %v465 = vpack.c.bf16 %v456, %v455
    %v466 = vpack.c.bf16 %v458, %v457
    %v467 = vperm.slane %v302, 1
    %v484 = vunpack.c.l.b16 %v321
    %v485 = vunpack.c.l.b16 %v322
    %v486 = vunpack.c.l.b16 %v323
    %v487 = vunpack.c.l.b16 %v324
    %v488 = vunpack.c.l.b16 %v325
    %v489 = vunpack.c.l.b16 %v326
    %v490 = vunpack.c.l.b16 %v327
    %v491 = vunpack.c.l.b16 %v328
    %v492 = vunpack.c.l.b16 %v329
    %v493 = vunpack.c.l.b16 %v330
    %v494 = vunpack.c.l.b16 %v331
    %v495 = vunpack.c.l.b16 %v332
    %v496 = vunpack.c.l.b16 %v333
    %v497 = vunpack.c.l.b16 %v334
    %v498 = vunpack.c.l.b16 %v335
    %v499 = vunpack.c.l.b16 %v336
    %v500 = vpack.c.b16 %v485, %v484
    %v501 = vpack.c.b16 %v487, %v486
    %v502 = vpack.c.b16 %v489, %v488
    %v503 = vpack.c.b16 %v491, %v490
    %v504 = vpack.c.b16 %v493, %v492
    %v505 = vpack.c.b16 %v495, %v494
    %v506 = vpack.c.b16 %v497, %v496
    %v507 = vpack.c.b16 %v499, %v498
    %516 = vmatpush.bf16.msra.mxu0 %v507
    %517 = vmatpush.bf16.msra.mxu0 %v506
    %518 = vmatpush.bf16.msra.mxu0 %v505
    %519 = vmatpush.bf16.msra.mxu0 %v504
    %520 = vmatpush.bf16.msra.mxu0 %v503
    %521 = vmatpush.bf16.msra.mxu0 %v502
    %522 = vmatpush.bf16.msra.mxu0 %v501
    %523 = vmatpush.bf16.msra.mxu0 %v500
    %524 = vmatmul.bf16.gmra.mxu0 %v459
    %v525 = vpop.f32.mrf.mxu0
    %v526 = vadd.f32 %v467, %v525
    %v527 = vpop.f32.mrf.mxu0
    %v528 = vadd.f32 %v467, %v527
    %529 = vmatmul.bf16.gmra.mxu0 %v460
    %v530 = vpop.f32.mrf.mxu0
    %v531 = vadd.f32 %v467, %v530
    %v532 = vpop.f32.mrf.mxu0
    %v533 = vadd.f32 %v467, %v532
    %534 = vmatmul.bf16.gmra.mxu0 %v461
    %v535 = vpop.f32.mrf.mxu0
    %v536 = vadd.f32 %v467, %v535
    %v537 = vpop.f32.mrf.mxu0
    %v538 = vadd.f32 %v467, %v537
    %539 = vmatmul.bf16.gmra.mxu0 %v462
    %v540 = vpop.f32.mrf.mxu0
    %v541 = vadd.f32 %v467, %v540
    %v542 = vpop.f32.mrf.mxu0
    %v543 = vadd.f32 %v467, %v542
    %544 = vmatmul.bf16.gmra.mxu0 %v463
    %v545 = vpop.f32.mrf.mxu0
    %v546 = vadd.f32 %v467, %v545
    %v547 = vpop.f32.mrf.mxu0
    %v548 = vadd.f32 %v467, %v547
    %549 = vmatmul.bf16.gmra.mxu0 %v464
    %v550 = vpop.f32.mrf.mxu0
    %v551 = vadd.f32 %v467, %v550
    %v552 = vpop.f32.mrf.mxu0
    %v553 = vadd.f32 %v467, %v552
    %554 = vmatmul.bf16.gmra.mxu0 %v465
    %v555 = vpop.f32.mrf.mxu0
    %v556 = vadd.f32 %v467, %v555
    %v557 = vpop.f32.mrf.mxu0
    %v558 = vadd.f32 %v467, %v557
    %559 = vmatmul.bf16.gmra.mxu0 %v466
    %v560 = vpop.f32.mrf.mxu0
    %v561 = vadd.f32 %v467, %v560
    %v562 = vpop.f32.mrf.mxu0
    %v563 = vadd.f32 %v467, %v562
    %564 = vdwg.mxu0
    %v565 = vadd.f32 %v526, %v286
    %v566 = vadd.f32 %v528, %v287
    %v567 = vadd.f32 %v531, %v288
    %v568 = vadd.f32 %v533, %v289
    %v569 = vadd.f32 %v536, %v290
    %v570 = vadd.f32 %v538, %v291
    %v571 = vadd.f32 %v541, %v292
    %v572 = vadd.f32 %v543, %v293
    %v573 = vadd.f32 %v546, %v294
    %v574 = vadd.f32 %v548, %v295
    %v575 = vadd.f32 %v551, %v296
    %v576 = vadd.f32 %v553, %v297
    %v577 = vadd.f32 %v556, %v298
    %v578 = vadd.f32 %v558, %v299
    %v579 = vadd.f32 %v561, %v300
    %v580 = vadd.f32 %v563, %v301
    %v581 = vmax.f32 %v565, 0.0
    %v582 = vmax.f32 %v566, 0.0
    %v583 = vmax.f32 %v567, 0.0
    %v584 = vmax.f32 %v568, 0.0
    %v585 = vmax.f32 %v569, 0.0
    %v586 = vmax.f32 %v570, 0.0
    %v587 = vmax.f32 %v571, 0.0
    %v588 = vmax.f32 %v572, 0.0
    %v589 = vmax.f32 %v573, 0.0
    %v590 = vmax.f32 %v574, 0.0
    %v591 = vmax.f32 %v575, 0.0
    %v592 = vmax.f32 %v576, 0.0
    %v593 = vmax.f32 %v577, 0.0
    %v594 = vmax.f32 %v578, 0.0
    %v595 = vmax.f32 %v579, 0.0
    %v596 = vmax.f32 %v580, 0.0
    %s597 = scalar_lea.vmem [#allocation7], 128
    %v598 = vld [vmem:[%s597] sm:$0xf]
    %v599 = vld [vmem:[%s597 + $0x4] sm:$0xf]
    %v600 = vld [vmem:[%s597 + $0x8] sm:$0xf]
    %v601 = vld [vmem:[%s597 + $0xc] sm:$0xf]
    %v602 = vld [vmem:[%s597 + $0x10] sm:$0xf]
    %v603 = vld [vmem:[%s597 + $0x14] sm:$0xf]
    %v604 = vld [vmem:[%s597 + $0x18] sm:$0xf]
    %v605 = vld [vmem:[%s597 + $0x1c] sm:$0xf]
    %v606 = vld [vmem:[%s597 + $0x20] sm:$0xf]
    %v607 = vld [vmem:[%s597 + $0x24] sm:$0xf]
    %v608 = vld [vmem:[%s597 + $0x28] sm:$0xf]
    %v609 = vld [vmem:[%s597 + $0x2c] sm:$0xf]
    %v610 = vld [vmem:[%s597 + $0x30] sm:$0xf]
    %v611 = vld [vmem:[%s597 + $0x34] sm:$0xf]
    %v612 = vld [vmem:[%s597 + $0x38] sm:$0xf]
    %v613 = vld [vmem:[%s597 + $0x3c] sm:$0xf]
    %s614 = scalar_lea.vmem [#allocation7], 192
    %v615 = vld [vmem:[%s614] sm:$0xf]
    %v616 = vld [vmem:[%s614 + $0x4] sm:$0xf]
    %v617 = vld [vmem:[%s614 + $0x8] sm:$0xf]
    %v618 = vld [vmem:[%s614 + $0xc] sm:$0xf]
    %v619 = vld [vmem:[%s614 + $0x10] sm:$0xf]
    %v620 = vld [vmem:[%s614 + $0x14] sm:$0xf]
    %v621 = vld [vmem:[%s614 + $0x18] sm:$0xf]
    %v622 = vld [vmem:[%s614 + $0x1c] sm:$0xf]
    %v623 = vld [vmem:[%s614 + $0x20] sm:$0xf]
    %v624 = vld [vmem:[%s614 + $0x24] sm:$0xf]
    %v625 = vld [vmem:[%s614 + $0x28] sm:$0xf]
    %v626 = vld [vmem:[%s614 + $0x2c] sm:$0xf]
    %v627 = vld [vmem:[%s614 + $0x30] sm:$0xf]
    %v628 = vld [vmem:[%s614 + $0x34] sm:$0xf]
    %v629 = vld [vmem:[%s614 + $0x38] sm:$0xf]
    %v630 = vld [vmem:[%s614 + $0x3c] sm:$0xf]
    %v631 = vpack.c.bf16 %v582, %v581
    %v632 = vpack.c.bf16 %v584, %v583
    %v633 = vpack.c.bf16 %v586, %v585
    %v634 = vpack.c.bf16 %v588, %v587
    %v635 = vpack.c.bf16 %v590, %v589
    %v636 = vpack.c.bf16 %v592, %v591
    %v637 = vpack.c.bf16 %v594, %v593
    %v638 = vpack.c.bf16 %v596, %v595
    %v639 = vperm.slane %v302, 2
    %v656 = vunpack.c.l.b16 %v598
    %v657 = vunpack.c.l.b16 %v599
    %v658 = vunpack.c.l.b16 %v600
    %v659 = vunpack.c.l.b16 %v601
    %v660 = vunpack.c.l.b16 %v602
    %v661 = vunpack.c.l.b16 %v603
    %v662 = vunpack.c.l.b16 %v604
    %v663 = vunpack.c.l.b16 %v605
    %v664 = vunpack.c.l.b16 %v606
    %v665 = vunpack.c.l.b16 %v607
    %v666 = vunpack.c.l.b16 %v608
    %v667 = vunpack.c.l.b16 %v609
    %v668 = vunpack.c.l.b16 %v610
    %v669 = vunpack.c.l.b16 %v611
    %v670 = vunpack.c.l.b16 %v612
    %v671 = vunpack.c.l.b16 %v613
    %v672 = vpack.c.b16 %v657, %v656
    %v673 = vpack.c.b16 %v659, %v658
    %v674 = vpack.c.b16 %v661, %v660
    %v675 = vpack.c.b16 %v663, %v662
    %v676 = vpack.c.b16 %v665, %v664
    %v677 = vpack.c.b16 %v667, %v666
    %v678 = vpack.c.b16 %v669, %v668
    %v679 = vpack.c.b16 %v671, %v670
    %688 = vmatpush.bf16.msra.mxu0 %v679
    %689 = vmatpush.bf16.msra.mxu0 %v678
    %690 = vmatpush.bf16.msra.mxu0 %v677
    %691 = vmatpush.bf16.msra.mxu0 %v676
    %692 = vmatpush.bf16.msra.mxu0 %v675
    %693 = vmatpush.bf16.msra.mxu0 %v674
    %694 = vmatpush.bf16.msra.mxu0 %v673
    %695 = vmatpush.bf16.msra.mxu0 %v672
    %696 = vmatmul.bf16.gmra.mxu0 %v631
    %v697 = vpop.f32.mrf.mxu0
    %v698 = vadd.f32 %v639, %v697
    %v699 = vpop.f32.mrf.mxu0
    %v700 = vadd.f32 %v639, %v699
    %701 = vmatmul.bf16.gmra.mxu0 %v632
    %v702 = vpop.f32.mrf.mxu0
    %v703 = vadd.f32 %v639, %v702
    %v704 = vpop.f32.mrf.mxu0
    %v705 = vadd.f32 %v639, %v704
    %706 = vmatmul.bf16.gmra.mxu0 %v633
    %v707 = vpop.f32.mrf.mxu0
    %v708 = vadd.f32 %v639, %v707
    %v709 = vpop.f32.mrf.mxu0
    %v710 = vadd.f32 %v639, %v709
    %711 = vmatmul.bf16.gmra.mxu0 %v634
    %v712 = vpop.f32.mrf.mxu0
    %v713 = vadd.f32 %v639, %v712
    %v714 = vpop.f32.mrf.mxu0
    %v715 = vadd.f32 %v639, %v714
    %716 = vmatmul.bf16.gmra.mxu0 %v635
    %v717 = vpop.f32.mrf.mxu0
    %v718 = vadd.f32 %v639, %v717
    %v719 = vpop.f32.mrf.mxu0
    %v720 = vadd.f32 %v639, %v719
    %721 = vmatmul.bf16.gmra.mxu0 %v636
    %v722 = vpop.f32.mrf.mxu0
    %v723 = vadd.f32 %v639, %v722
    %v724 = vpop.f32.mrf.mxu0
    %v725 = vadd.f32 %v639, %v724
    %726 = vmatmul.bf16.gmra.mxu0 %v637
    %v727 = vpop.f32.mrf.mxu0
    %v728 = vadd.f32 %v639, %v727
    %v729 = vpop.f32.mrf.mxu0
    %v730 = vadd.f32 %v639, %v729
    %731 = vmatmul.bf16.gmra.mxu0 %v638
    %v732 = vpop.f32.mrf.mxu0
    %v733 = vadd.f32 %v639, %v732
    %v734 = vpop.f32.mrf.mxu0
    %v735 = vadd.f32 %v639, %v734
    %736 = vdwg.mxu0
    %v737 = vmax.f32 %v698, 0.0
    %v738 = vmax.f32 %v700, 0.0
    %v739 = vmax.f32 %v703, 0.0
    %v740 = vmax.f32 %v705, 0.0
    %v741 = vmax.f32 %v708, 0.0
    %v742 = vmax.f32 %v710, 0.0
    %v743 = vmax.f32 %v713, 0.0
    %v744 = vmax.f32 %v715, 0.0
    %v745 = vmax.f32 %v718, 0.0
    %v746 = vmax.f32 %v720, 0.0
    %v747 = vmax.f32 %v723, 0.0
    %v748 = vmax.f32 %v725, 0.0
    %v749 = vmax.f32 %v728, 0.0
    %v750 = vmax.f32 %v730, 0.0
    %v751 = vmax.f32 %v733, 0.0
    %v752 = vmax.f32 %v735, 0.0
    %v753 = vpack.c.bf16 %v738, %v737
    %v754 = vpack.c.bf16 %v740, %v739
    %v755 = vpack.c.bf16 %v742, %v741
    %v756 = vpack.c.bf16 %v744, %v743
    %v757 = vpack.c.bf16 %v746, %v745
    %v758 = vpack.c.bf16 %v748, %v747
    %v759 = vpack.c.bf16 %v750, %v749
    %v760 = vpack.c.bf16 %v752, %v751
    %v761 = vperm.slane %v302, 3
    %v778 = vunpack.c.l.b16 %v615
    %v779 = vunpack.c.l.b16 %v616
    %v780 = vunpack.c.l.b16 %v617
    %v781 = vunpack.c.l.b16 %v618
    %v782 = vunpack.c.l.b16 %v619
    %v783 = vunpack.c.l.b16 %v620
    %v784 = vunpack.c.l.b16 %v621
    %v785 = vunpack.c.l.b16 %v622
    %v786 = vunpack.c.l.b16 %v623
    %v787 = vunpack.c.l.b16 %v624
    %v788 = vunpack.c.l.b16 %v625
    %v789 = vunpack.c.l.b16 %v626
    %v790 = vunpack.c.l.b16 %v627
    %v791 = vunpack.c.l.b16 %v628
    %v792 = vunpack.c.l.b16 %v629
    %v793 = vunpack.c.l.b16 %v630
    %v794 = vpack.c.b16 %v779, %v778
    %v795 = vpack.c.b16 %v781, %v780
    %v796 = vpack.c.b16 %v783, %v782
    %v797 = vpack.c.b16 %v785, %v784
    %v798 = vpack.c.b16 %v787, %v786
    %v799 = vpack.c.b16 %v789, %v788
    %v800 = vpack.c.b16 %v791, %v790
    %v801 = vpack.c.b16 %v793, %v792
    %810 = vmatpush.bf16.msra.mxu0 %v801
    %811 = vmatpush.bf16.msra.mxu0 %v800
    %812 = vmatpush.bf16.msra.mxu0 %v799
    %813 = vmatpush.bf16.msra.mxu0 %v798
    %814 = vmatpush.bf16.msra.mxu0 %v797
    %815 = vmatpush.bf16.msra.mxu0 %v796
    %816 = vmatpush.bf16.msra.mxu0 %v795
    %817 = vmatpush.bf16.msra.mxu0 %v794
    %818 = vmatmul.bf16.gmra.mxu0 %v753
    %v819 = vpop.f32.mrf.mxu0
    %v820 = vadd.f32 %v761, %v819
    %v821 = vpop.f32.mrf.mxu0
    %v822 = vadd.f32 %v761, %v821
    %823 = vmatmul.bf16.gmra.mxu0 %v754
    %v824 = vpop.f32.mrf.mxu0
    %v825 = vadd.f32 %v761, %v824
    %v826 = vpop.f32.mrf.mxu0
    %v827 = vadd.f32 %v761, %v826
    %828 = vmatmul.bf16.gmra.mxu0 %v755
    %v829 = vpop.f32.mrf.mxu0
    %v830 = vadd.f32 %v761, %v829
    %v831 = vpop.f32.mrf.mxu0
    %v832 = vadd.f32 %v761, %v831
    %833 = vmatmul.bf16.gmra.mxu0 %v756
    %v834 = vpop.f32.mrf.mxu0
    %v835 = vadd.f32 %v761, %v834
    %v836 = vpop.f32.mrf.mxu0
    %v837 = vadd.f32 %v761, %v836
    %838 = vmatmul.bf16.gmra.mxu0 %v757
    %v839 = vpop.f32.mrf.mxu0
    %v840 = vadd.f32 %v761, %v839
    %v841 = vpop.f32.mrf.mxu0
    %v842 = vadd.f32 %v761, %v841
    %843 = vmatmul.bf16.gmra.mxu0 %v758
    %v844 = vpop.f32.mrf.mxu0
    %v845 = vadd.f32 %v761, %v844
    %v846 = vpop.f32.mrf.mxu0
    %v847 = vadd.f32 %v761, %v846
    %848 = vmatmul.bf16.gmra.mxu0 %v759
    %v849 = vpop.f32.mrf.mxu0
    %v850 = vadd.f32 %v761, %v849
    %v851 = vpop.f32.mrf.mxu0
    %v852 = vadd.f32 %v761, %v851
    %853 = vmatmul.bf16.gmra.mxu0 %v760
    %v854 = vpop.f32.mrf.mxu0
    %v855 = vadd.f32 %v761, %v854
    %v856 = vpop.f32.mrf.mxu0
    %v857 = vadd.f32 %v761, %v856
    %858 = vdwg.mxu0
    %v859 = vadd.f32 %v820, %v581
    %v860 = vadd.f32 %v822, %v582
    %v861 = vadd.f32 %v825, %v583
    %v862 = vadd.f32 %v827, %v584
    %v863 = vadd.f32 %v830, %v585
    %v864 = vadd.f32 %v832, %v586
    %v865 = vadd.f32 %v835, %v587
    %v866 = vadd.f32 %v837, %v588
    %v867 = vadd.f32 %v840, %v589
    %v868 = vadd.f32 %v842, %v590
    %v869 = vadd.f32 %v845, %v591
    %v870 = vadd.f32 %v847, %v592
    %v871 = vadd.f32 %v850, %v593
    %v872 = vadd.f32 %v852, %v594
    %v873 = vadd.f32 %v855, %v595
    %v874 = vadd.f32 %v857, %v596
    %v875 = vmax.f32 %v859, 0.0
    %v876 = vmax.f32 %v860, 0.0
    %v877 = vmax.f32 %v861, 0.0
    %v878 = vmax.f32 %v862, 0.0
    %v879 = vmax.f32 %v863, 0.0
    %v880 = vmax.f32 %v864, 0.0
    %v881 = vmax.f32 %v865, 0.0
    %v882 = vmax.f32 %v866, 0.0
    %v883 = vmax.f32 %v867, 0.0
    %v884 = vmax.f32 %v868, 0.0
    %v885 = vmax.f32 %v869, 0.0
    %v886 = vmax.f32 %v870, 0.0
    %v887 = vmax.f32 %v871, 0.0
    %v888 = vmax.f32 %v872, 0.0
    %v889 = vmax.f32 %v873, 0.0
    %v890 = vmax.f32 %v874, 0.0
    %s891 = scalar_lea.vmem [#allocation7], 256
    %v892 = vld [vmem:[%s891] sm:$0xf]
    %v893 = vld [vmem:[%s891 + $0x4] sm:$0xf]
    %v894 = vld [vmem:[%s891 + $0x8] sm:$0xf]
    %v895 = vld [vmem:[%s891 + $0xc] sm:$0xf]
    %v896 = vld [vmem:[%s891 + $0x10] sm:$0xf]
    %v897 = vld [vmem:[%s891 + $0x14] sm:$0xf]
    %v898 = vld [vmem:[%s891 + $0x18] sm:$0xf]
    %v899 = vld [vmem:[%s891 + $0x1c] sm:$0xf]
    %v900 = vld [vmem:[%s891 + $0x20] sm:$0xf]
    %v901 = vld [vmem:[%s891 + $0x24] sm:$0xf]
    %v902 = vld [vmem:[%s891 + $0x28] sm:$0xf]
    %v903 = vld [vmem:[%s891 + $0x2c] sm:$0xf]
    %v904 = vld [vmem:[%s891 + $0x30] sm:$0xf]
    %v905 = vld [vmem:[%s891 + $0x34] sm:$0xf]
    %v906 = vld [vmem:[%s891 + $0x38] sm:$0xf]
    %v907 = vld [vmem:[%s891 + $0x3c] sm:$0xf]
    %s908 = scalar_lea.vmem [#allocation7], 320
    %v909 = vld [vmem:[%s908] sm:$0xf]
    %v910 = vld [vmem:[%s908 + $0x4] sm:$0xf]
    %v911 = vld [vmem:[%s908 + $0x8] sm:$0xf]
    %v912 = vld [vmem:[%s908 + $0xc] sm:$0xf]
    %v913 = vld [vmem:[%s908 + $0x10] sm:$0xf]
    %v914 = vld [vmem:[%s908 + $0x14] sm:$0xf]
    %v915 = vld [vmem:[%s908 + $0x18] sm:$0xf]
    %v916 = vld [vmem:[%s908 + $0x1c] sm:$0xf]
    %v917 = vld [vmem:[%s908 + $0x20] sm:$0xf]
    %v918 = vld [vmem:[%s908 + $0x24] sm:$0xf]
    %v919 = vld [vmem:[%s908 + $0x28] sm:$0xf]
    %v920 = vld [vmem:[%s908 + $0x2c] sm:$0xf]
    %v921 = vld [vmem:[%s908 + $0x30] sm:$0xf]
    %v922 = vld [vmem:[%s908 + $0x34] sm:$0xf]
    %v923 = vld [vmem:[%s908 + $0x38] sm:$0xf]
    %v924 = vld [vmem:[%s908 + $0x3c] sm:$0xf]
    %v925 = vpack.c.bf16 %v876, %v875
    %v926 = vpack.c.bf16 %v878, %v877
    %v927 = vpack.c.bf16 %v880, %v879
    %v928 = vpack.c.bf16 %v882, %v881
    %v929 = vpack.c.bf16 %v884, %v883
    %v930 = vpack.c.bf16 %v886, %v885
    %v931 = vpack.c.bf16 %v888, %v887
    %v932 = vpack.c.bf16 %v890, %v889
    %v933 = vperm.slane %v302, 4
    %v950 = vunpack.c.l.b16 %v892
    %v951 = vunpack.c.l.b16 %v893
    %v952 = vunpack.c.l.b16 %v894
    %v953 = vunpack.c.l.b16 %v895
    %v954 = vunpack.c.l.b16 %v896
    %v955 = vunpack.c.l.b16 %v897
    %v956 = vunpack.c.l.b16 %v898
    %v957 = vunpack.c.l.b16 %v899
    %v958 = vunpack.c.l.b16 %v900
    %v959 = vunpack.c.l.b16 %v901
    %v960 = vunpack.c.l.b16 %v902
    %v961 = vunpack.c.l.b16 %v903
    %v962 = vunpack.c.l.b16 %v904
    %v963 = vunpack.c.l.b16 %v905
    %v964 = vunpack.c.l.b16 %v906
    %v965 = vunpack.c.l.b16 %v907
    %v966 = vpack.c.b16 %v951, %v950
    %v967 = vpack.c.b16 %v953, %v952
    %v968 = vpack.c.b16 %v955, %v954
    %v969 = vpack.c.b16 %v957, %v956
    %v970 = vpack.c.b16 %v959, %v958
    %v971 = vpack.c.b16 %v961, %v960
    %v972 = vpack.c.b16 %v963, %v962
    %v973 = vpack.c.b16 %v965, %v964
    %982 = vmatpush.bf16.msra.mxu0 %v973
    %983 = vmatpush.bf16.msra.mxu0 %v972
    %984 = vmatpush.bf16.msra.mxu0 %v971
    %985 = vmatpush.bf16.msra.mxu0 %v970
    %986 = vmatpush.bf16.msra.mxu0 %v969
    %987 = vmatpush.bf16.msra.mxu0 %v968
    %988 = vmatpush.bf16.msra.mxu0 %v967
    %989 = vmatpush.bf16.msra.mxu0 %v966
    %990 = vmatmul.bf16.gmra.mxu0 %v925
    %v991 = vpop.f32.mrf.mxu0
    %v992 = vadd.f32 %v933, %v991
    %v993 = vpop.f32.mrf.mxu0
    %v994 = vadd.f32 %v933, %v993
    %995 = vmatmul.bf16.gmra.mxu0 %v926
    %v996 = vpop.f32.mrf.mxu0
    %v997 = vadd.f32 %v933, %v996
    %v998 = vpop.f32.mrf.mxu0
    %v999 = vadd.f32 %v933, %v998
    %1000 = vmatmul.bf16.gmra.mxu0 %v927
    %v1001 = vpop.f32.mrf.mxu0
    %v1002 = vadd.f32 %v933, %v1001
    %v1003 = vpop.f32.mrf.mxu0
    %v1004 = vadd.f32 %v933, %v1003
    %1005 = vmatmul.bf16.gmra.mxu0 %v928
    %v1006 = vpop.f32.mrf.mxu0
    %v1007 = vadd.f32 %v933, %v1006
    %v1008 = vpop.f32.mrf.mxu0
    %v1009 = vadd.f32 %v933, %v1008
    %1010 = vmatmul.bf16.gmra.mxu0 %v929
    %v1011 = vpop.f32.mrf.mxu0
    %v1012 = vadd.f32 %v933, %v1011
    %v1013 = vpop.f32.mrf.mxu0
    %v1014 = vadd.f32 %v933, %v1013
    %1015 = vmatmul.bf16.gmra.mxu0 %v930
    %v1016 = vpop.f32.mrf.mxu0
    %v1017 = vadd.f32 %v933, %v1016
    %v1018 = vpop.f32.mrf.mxu0
    %v1019 = vadd.f32 %v933, %v1018
    %1020 = vmatmul.bf16.gmra.mxu0 %v931
    %v1021 = vpop.f32.mrf.mxu0
    %v1022 = vadd.f32 %v933, %v1021
    %v1023 = vpop.f32.mrf.mxu0
    %v1024 = vadd.f32 %v933, %v1023
    %1025 = vmatmul.bf16.gmra.mxu0 %v932
    %v1026 = vpop.f32.mrf.mxu0
    %v1027 = vadd.f32 %v933, %v1026
    %v1028 = vpop.f32.mrf.mxu0
    %v1029 = vadd.f32 %v933, %v1028
    %1030 = vdwg.mxu0
    %v1031 = vmax.f32 %v992, 0.0
    %v1032 = vmax.f32 %v994, 0.0
    %v1033 = vmax.f32 %v997, 0.0
    %v1034 = vmax.f32 %v999, 0.0
    %v1035 = vmax.f32 %v1002, 0.0
    %v1036 = vmax.f32 %v1004, 0.0
    %v1037 = vmax.f32 %v1007, 0.0
    %v1038 = vmax.f32 %v1009, 0.0
    %v1039 = vmax.f32 %v1012, 0.0
    %v1040 = vmax.f32 %v1014, 0.0
    %v1041 = vmax.f32 %v1017, 0.0
    %v1042 = vmax.f32 %v1019, 0.0
    %v1043 = vmax.f32 %v1022, 0.0
    %v1044 = vmax.f32 %v1024, 0.0
    %v1045 = vmax.f32 %v1027, 0.0
    %v1046 = vmax.f32 %v1029, 0.0
    %v1047 = vpack.c.bf16 %v1032, %v1031
    %v1048 = vpack.c.bf16 %v1034, %v1033
    %v1049 = vpack.c.bf16 %v1036, %v1035
    %v1050 = vpack.c.bf16 %v1038, %v1037
    %v1051 = vpack.c.bf16 %v1040, %v1039
    %v1052 = vpack.c.bf16 %v1042, %v1041
    %v1053 = vpack.c.bf16 %v1044, %v1043
    %v1054 = vpack.c.bf16 %v1046, %v1045
    %v1055 = vperm.slane %v302, 5
    %v1072 = vunpack.c.l.b16 %v909
    %v1073 = vunpack.c.l.b16 %v910
    %v1074 = vunpack.c.l.b16 %v911
    %v1075 = vunpack.c.l.b16 %v912
    %v1076 = vunpack.c.l.b16 %v913
    %v1077 = vunpack.c.l.b16 %v914
    %v1078 = vunpack.c.l.b16 %v915
    %v1079 = vunpack.c.l.b16 %v916
    %v1080 = vunpack.c.l.b16 %v917
    %v1081 = vunpack.c.l.b16 %v918
    %v1082 = vunpack.c.l.b16 %v919
    %v1083 = vunpack.c.l.b16 %v920
    %v1084 = vunpack.c.l.b16 %v921
    %v1085 = vunpack.c.l.b16 %v922
    %v1086 = vunpack.c.l.b16 %v923
    %v1087 = vunpack.c.l.b16 %v924
    %v1088 = vpack.c.b16 %v1073, %v1072
    %v1089 = vpack.c.b16 %v1075, %v1074
    %v1090 = vpack.c.b16 %v1077, %v1076
    %v1091 = vpack.c.b16 %v1079, %v1078
    %v1092 = vpack.c.b16 %v1081, %v1080
    %v1093 = vpack.c.b16 %v1083, %v1082
    %v1094 = vpack.c.b16 %v1085, %v1084
    %v1095 = vpack.c.b16 %v1087, %v1086
    %1104 = vmatpush.bf16.msra.mxu0 %v1095
    %1105 = vmatpush.bf16.msra.mxu0 %v1094
    %1106 = vmatpush.bf16.msra.mxu0 %v1093
    %1107 = vmatpush.bf16.msra.mxu0 %v1092
    %1108 = vmatpush.bf16.msra.mxu0 %v1091
    %1109 = vmatpush.bf16.msra.mxu0 %v1090
    %1110 = vmatpush.bf16.msra.mxu0 %v1089
    %1111 = vmatpush.bf16.msra.mxu0 %v1088
    %1112 = vmatmul.bf16.gmra.mxu0 %v1047
    %v1113 = vpop.f32.mrf.mxu0
    %v1114 = vadd.f32 %v1055, %v1113
    %v1115 = vpop.f32.mrf.mxu0
    %v1116 = vadd.f32 %v1055, %v1115
    %1117 = vmatmul.bf16.gmra.mxu0 %v1048
    %v1118 = vpop.f32.mrf.mxu0
    %v1119 = vadd.f32 %v1055, %v1118
    %v1120 = vpop.f32.mrf.mxu0
    %v1121 = vadd.f32 %v1055, %v1120
    %1122 = vmatmul.bf16.gmra.mxu0 %v1049
    %v1123 = vpop.f32.mrf.mxu0
    %v1124 = vadd.f32 %v1055, %v1123
    %v1125 = vpop.f32.mrf.mxu0
    %v1126 = vadd.f32 %v1055, %v1125
    %1127 = vmatmul.bf16.gmra.mxu0 %v1050
    %v1128 = vpop.f32.mrf.mxu0
    %v1129 = vadd.f32 %v1055, %v1128
    %v1130 = vpop.f32.mrf.mxu0
    %v1131 = vadd.f32 %v1055, %v1130
    %1132 = vmatmul.bf16.gmra.mxu0 %v1051
    %v1133 = vpop.f32.mrf.mxu0
    %v1134 = vadd.f32 %v1055, %v1133
    %v1135 = vpop.f32.mrf.mxu0
    %v1136 = vadd.f32 %v1055, %v1135
    %1137 = vmatmul.bf16.gmra.mxu0 %v1052
    %v1138 = vpop.f32.mrf.mxu0
    %v1139 = vadd.f32 %v1055, %v1138
    %v1140 = vpop.f32.mrf.mxu0
    %v1141 = vadd.f32 %v1055, %v1140
    %1142 = vmatmul.bf16.gmra.mxu0 %v1053
    %v1143 = vpop.f32.mrf.mxu0
    %v1144 = vadd.f32 %v1055, %v1143
    %v1145 = vpop.f32.mrf.mxu0
    %v1146 = vadd.f32 %v1055, %v1145
    %1147 = vmatmul.bf16.gmra.mxu0 %v1054
    %v1148 = vpop.f32.mrf.mxu0
    %v1149 = vadd.f32 %v1055, %v1148
    %v1150 = vpop.f32.mrf.mxu0
    %v1151 = vadd.f32 %v1055, %v1150
    %1152 = vdwg.mxu0
    %v1153 = vadd.f32 %v1114, %v875
    %v1154 = vadd.f32 %v1116, %v876
    %v1155 = vadd.f32 %v1119, %v877
    %v1156 = vadd.f32 %v1121, %v878
    %v1157 = vadd.f32 %v1124, %v879
    %v1158 = vadd.f32 %v1126, %v880
    %v1159 = vadd.f32 %v1129, %v881
    %v1160 = vadd.f32 %v1131, %v882
    %v1161 = vadd.f32 %v1134, %v883
    %v1162 = vadd.f32 %v1136, %v884
    %v1163 = vadd.f32 %v1139, %v885
    %v1164 = vadd.f32 %v1141, %v886
    %v1165 = vadd.f32 %v1144, %v887
    %v1166 = vadd.f32 %v1146, %v888
    %v1167 = vadd.f32 %v1149, %v889
    %v1168 = vadd.f32 %v1151, %v890
    %v1169 = vmax.f32 %v1153, 0.0
    %v1170 = vmax.f32 %v1154, 0.0
    %v1171 = vmax.f32 %v1155, 0.0
    %v1172 = vmax.f32 %v1156, 0.0
    %v1173 = vmax.f32 %v1157, 0.0
    %v1174 = vmax.f32 %v1158, 0.0
    %v1175 = vmax.f32 %v1159, 0.0
    %v1176 = vmax.f32 %v1160, 0.0
    %v1177 = vmax.f32 %v1161, 0.0
    %v1178 = vmax.f32 %v1162, 0.0
    %v1179 = vmax.f32 %v1163, 0.0
    %v1180 = vmax.f32 %v1164, 0.0
    %v1181 = vmax.f32 %v1165, 0.0
    %v1182 = vmax.f32 %v1166, 0.0
    %v1183 = vmax.f32 %v1167, 0.0
    %v1184 = vmax.f32 %v1168, 0.0
    %s1185 = scalar_lea.vmem [#allocation7], 384
    %v1186 = vld [vmem:[%s1185] sm:$0xf]
    %v1187 = vld [vmem:[%s1185 + $0x4] sm:$0xf]
    %v1188 = vld [vmem:[%s1185 + $0x8] sm:$0xf]
    %v1189 = vld [vmem:[%s1185 + $0xc] sm:$0xf]
    %v1190 = vld [vmem:[%s1185 + $0x10] sm:$0xf]
    %v1191 = vld [vmem:[%s1185 + $0x14] sm:$0xf]
    %v1192 = vld [vmem:[%s1185 + $0x18] sm:$0xf]
    %v1193 = vld [vmem:[%s1185 + $0x1c] sm:$0xf]
    %v1194 = vld [vmem:[%s1185 + $0x20] sm:$0xf]
    %v1195 = vld [vmem:[%s1185 + $0x24] sm:$0xf]
    %v1196 = vld [vmem:[%s1185 + $0x28] sm:$0xf]
    %v1197 = vld [vmem:[%s1185 + $0x2c] sm:$0xf]
    %v1198 = vld [vmem:[%s1185 + $0x30] sm:$0xf]
    %v1199 = vld [vmem:[%s1185 + $0x34] sm:$0xf]
    %v1200 = vld [vmem:[%s1185 + $0x38] sm:$0xf]
    %v1201 = vld [vmem:[%s1185 + $0x3c] sm:$0xf]
    %s1202 = scalar_lea.vmem [#allocation7], 448
    %v1203 = vld [vmem:[%s1202] sm:$0xf]
    %v1204 = vld [vmem:[%s1202 + $0x4] sm:$0xf]
    %v1205 = vld [vmem:[%s1202 + $0x8] sm:$0xf]
    %v1206 = vld [vmem:[%s1202 + $0xc] sm:$0xf]
    %v1207 = vld [vmem:[%s1202 + $0x10] sm:$0xf]
    %v1208 = vld [vmem:[%s1202 + $0x14] sm:$0xf]
    %v1209 = vld [vmem:[%s1202 + $0x18] sm:$0xf]
    %v1210 = vld [vmem:[%s1202 + $0x1c] sm:$0xf]
    %v1211 = vld [vmem:[%s1202 + $0x20] sm:$0xf]
    %v1212 = vld [vmem:[%s1202 + $0x24] sm:$0xf]
    %v1213 = vld [vmem:[%s1202 + $0x28] sm:$0xf]
    %v1214 = vld [vmem:[%s1202 + $0x2c] sm:$0xf]
    %v1215 = vld [vmem:[%s1202 + $0x30] sm:$0xf]
    %v1216 = vld [vmem:[%s1202 + $0x34] sm:$0xf]
    %v1217 = vld [vmem:[%s1202 + $0x38] sm:$0xf]
    %v1218 = vld [vmem:[%s1202 + $0x3c] sm:$0xf]
    %v1219 = vpack.c.bf16 %v1170, %v1169
    %v1220 = vpack.c.bf16 %v1172, %v1171
    %v1221 = vpack.c.bf16 %v1174, %v1173
    %v1222 = vpack.c.bf16 %v1176, %v1175
    %v1223 = vpack.c.bf16 %v1178, %v1177
    %v1224 = vpack.c.bf16 %v1180, %v1179
    %v1225 = vpack.c.bf16 %v1182, %v1181
    %v1226 = vpack.c.bf16 %v1184, %v1183
    %v1227 = vperm.slane %v302, 6
    %v1244 = vunpack.c.l.b16 %v1186
    %v1245 = vunpack.c.l.b16 %v1187
    %v1246 = vunpack.c.l.b16 %v1188
    %v1247 = vunpack.c.l.b16 %v1189
    %v1248 = vunpack.c.l.b16 %v1190
    %v1249 = vunpack.c.l.b16 %v1191
    %v1250 = vunpack.c.l.b16 %v1192
    %v1251 = vunpack.c.l.b16 %v1193
    %v1252 = vunpack.c.l.b16 %v1194
    %v1253 = vunpack.c.l.b16 %v1195
    %v1254 = vunpack.c.l.b16 %v1196
    %v1255 = vunpack.c.l.b16 %v1197
    %v1256 = vunpack.c.l.b16 %v1198
    %v1257 = vunpack.c.l.b16 %v1199
    %v1258 = vunpack.c.l.b16 %v1200
    %v1259 = vunpack.c.l.b16 %v1201
    %v1260 = vpack.c.b16 %v1245, %v1244
    %v1261 = vpack.c.b16 %v1247, %v1246
    %v1262 = vpack.c.b16 %v1249, %v1248
    %v1263 = vpack.c.b16 %v1251, %v1250
    %v1264 = vpack.c.b16 %v1253, %v1252
    %v1265 = vpack.c.b16 %v1255, %v1254
    %v1266 = vpack.c.b16 %v1257, %v1256
    %v1267 = vpack.c.b16 %v1259, %v1258
    %1276 = vmatpush.bf16.msra.mxu0 %v1267
    %1277 = vmatpush.bf16.msra.mxu0 %v1266
    %1278 = vmatpush.bf16.msra.mxu0 %v1265
    %1279 = vmatpush.bf16.msra.mxu0 %v1264
    %1280 = vmatpush.bf16.msra.mxu0 %v1263
    %1281 = vmatpush.bf16.msra.mxu0 %v1262
    %1282 = vmatpush.bf16.msra.mxu0 %v1261
    %1283 = vmatpush.bf16.msra.mxu0 %v1260
    %1284 = vmatmul.bf16.gmra.mxu0 %v1219
    %v1285 = vpop.f32.mrf.mxu0
    %v1286 = vadd.f32 %v1227, %v1285
    %v1287 = vpop.f32.mrf.mxu0
    %v1288 = vadd.f32 %v1227, %v1287
    %1289 = vmatmul.bf16.gmra.mxu0 %v1220
    %v1290 = vpop.f32.mrf.mxu0
    %v1291 = vadd.f32 %v1227, %v1290
    %v1292 = vpop.f32.mrf.mxu0
    %v1293 = vadd.f32 %v1227, %v1292
    %1294 = vmatmul.bf16.gmra.mxu0 %v1221
    %v1295 = vpop.f32.mrf.mxu0
    %v1296 = vadd.f32 %v1227, %v1295
    %v1297 = vpop.f32.mrf.mxu0
    %v1298 = vadd.f32 %v1227, %v1297
    %1299 = vmatmul.bf16.gmra.mxu0 %v1222
    %v1300 = vpop.f32.mrf.mxu0
    %v1301 = vadd.f32 %v1227, %v1300
    %v1302 = vpop.f32.mrf.mxu0
    %v1303 = vadd.f32 %v1227, %v1302
    %1304 = vmatmul.bf16.gmra.mxu0 %v1223
    %v1305 = vpop.f32.mrf.mxu0
    %v1306 = vadd.f32 %v1227, %v1305
    %v1307 = vpop.f32.mrf.mxu0
    %v1308 = vadd.f32 %v1227, %v1307
    %1309 = vmatmul.bf16.gmra.mxu0 %v1224
    %v1310 = vpop.f32.mrf.mxu0
    %v1311 = vadd.f32 %v1227, %v1310
    %v1312 = vpop.f32.mrf.mxu0
    %v1313 = vadd.f32 %v1227, %v1312
    %1314 = vmatmul.bf16.gmra.mxu0 %v1225
    %v1315 = vpop.f32.mrf.mxu0
    %v1316 = vadd.f32 %v1227, %v1315
    %v1317 = vpop.f32.mrf.mxu0
    %v1318 = vadd.f32 %v1227, %v1317
    %1319 = vmatmul.bf16.gmra.mxu0 %v1226
    %v1320 = vpop.f32.mrf.mxu0
    %v1321 = vadd.f32 %v1227, %v1320
    %v1322 = vpop.f32.mrf.mxu0
    %v1323 = vadd.f32 %v1227, %v1322
    %1324 = vdwg.mxu0
    %v1325 = vmax.f32 %v1286, 0.0
    %v1326 = vmax.f32 %v1288, 0.0
    %v1327 = vmax.f32 %v1291, 0.0
    %v1328 = vmax.f32 %v1293, 0.0
    %v1329 = vmax.f32 %v1296, 0.0
    %v1330 = vmax.f32 %v1298, 0.0
    %v1331 = vmax.f32 %v1301, 0.0
    %v1332 = vmax.f32 %v1303, 0.0
    %v1333 = vmax.f32 %v1306, 0.0
    %v1334 = vmax.f32 %v1308, 0.0
    %v1335 = vmax.f32 %v1311, 0.0
    %v1336 = vmax.f32 %v1313, 0.0
    %v1337 = vmax.f32 %v1316, 0.0
    %v1338 = vmax.f32 %v1318, 0.0
    %v1339 = vmax.f32 %v1321, 0.0
    %v1340 = vmax.f32 %v1323, 0.0
    %v1341 = vpack.c.bf16 %v1326, %v1325
    %v1342 = vpack.c.bf16 %v1328, %v1327
    %v1343 = vpack.c.bf16 %v1330, %v1329
    %v1344 = vpack.c.bf16 %v1332, %v1331
    %v1345 = vpack.c.bf16 %v1334, %v1333
    %v1346 = vpack.c.bf16 %v1336, %v1335
    %v1347 = vpack.c.bf16 %v1338, %v1337
    %v1348 = vpack.c.bf16 %v1340, %v1339
    %v1349 = vperm.slane %v302, 7
    %v1366 = vunpack.c.l.b16 %v1203
    %v1367 = vunpack.c.l.b16 %v1204
    %v1368 = vunpack.c.l.b16 %v1205
    %v1369 = vunpack.c.l.b16 %v1206
    %v1370 = vunpack.c.l.b16 %v1207
    %v1371 = vunpack.c.l.b16 %v1208
    %v1372 = vunpack.c.l.b16 %v1209
    %v1373 = vunpack.c.l.b16 %v1210
    %v1374 = vunpack.c.l.b16 %v1211
    %v1375 = vunpack.c.l.b16 %v1212
    %v1376 = vunpack.c.l.b16 %v1213
    %v1377 = vunpack.c.l.b16 %v1214
    %v1378 = vunpack.c.l.b16 %v1215
    %v1379 = vunpack.c.l.b16 %v1216
    %v1380 = vunpack.c.l.b16 %v1217
    %v1381 = vunpack.c.l.b16 %v1218
    %v1382 = vpack.c.b16 %v1367, %v1366
    %v1383 = vpack.c.b16 %v1369, %v1368
    %v1384 = vpack.c.b16 %v1371, %v1370
    %v1385 = vpack.c.b16 %v1373, %v1372
    %v1386 = vpack.c.b16 %v1375, %v1374
    %v1387 = vpack.c.b16 %v1377, %v1376
    %v1388 = vpack.c.b16 %v1379, %v1378
    %v1389 = vpack.c.b16 %v1381, %v1380
    %1398 = vmatpush.bf16.msra.mxu0 %v1389
    %1399 = vmatpush.bf16.msra.mxu0 %v1388
    %1400 = vmatpush.bf16.msra.mxu0 %v1387
    %1401 = vmatpush.bf16.msra.mxu0 %v1386
    %1402 = vmatpush.bf16.msra.mxu0 %v1385
    %1403 = vmatpush.bf16.msra.mxu0 %v1384
    %1404 = vmatpush.bf16.msra.mxu0 %v1383
    %1405 = vmatpush.bf16.msra.mxu0 %v1382
    %1406 = vmatmul.bf16.gmra.mxu0 %v1341
    %v1407 = vpop.f32.mrf.mxu0
    %v1408 = vadd.f32 %v1349, %v1407
    %v1409 = vpop.f32.mrf.mxu0
    %v1410 = vadd.f32 %v1349, %v1409
    %1411 = vmatmul.bf16.gmra.mxu0 %v1342
    %v1412 = vpop.f32.mrf.mxu0
    %v1413 = vadd.f32 %v1349, %v1412
    %v1414 = vpop.f32.mrf.mxu0
    %v1415 = vadd.f32 %v1349, %v1414
    %1416 = vmatmul.bf16.gmra.mxu0 %v1343
    %v1417 = vpop.f32.mrf.mxu0
    %v1418 = vadd.f32 %v1349, %v1417
    %v1419 = vpop.f32.mrf.mxu0
    %v1420 = vadd.f32 %v1349, %v1419
    %1421 = vmatmul.bf16.gmra.mxu0 %v1344
    %v1422 = vpop.f32.mrf.mxu0
    %v1423 = vadd.f32 %v1349, %v1422
    %v1424 = vpop.f32.mrf.mxu0
    %v1425 = vadd.f32 %v1349, %v1424
    %1426 = vmatmul.bf16.gmra.mxu0 %v1345
    %v1427 = vpop.f32.mrf.mxu0
    %v1428 = vadd.f32 %v1349, %v1427
    %v1429 = vpop.f32.mrf.mxu0
    %v1430 = vadd.f32 %v1349, %v1429
    %1431 = vmatmul.bf16.gmra.mxu0 %v1346
    %v1432 = vpop.f32.mrf.mxu0
    %v1433 = vadd.f32 %v1349, %v1432
    %v1434 = vpop.f32.mrf.mxu0
    %v1435 = vadd.f32 %v1349, %v1434
    %1436 = vmatmul.bf16.gmra.mxu0 %v1347
    %v1437 = vpop.f32.mrf.mxu0
    %v1438 = vadd.f32 %v1349, %v1437
    %v1439 = vpop.f32.mrf.mxu0
    %v1440 = vadd.f32 %v1349, %v1439
    %1441 = vmatmul.bf16.gmra.mxu0 %v1348
    %v1442 = vpop.f32.mrf.mxu0
    %v1443 = vadd.f32 %v1349, %v1442
    %v1444 = vpop.f32.mrf.mxu0
    %v1445 = vadd.f32 %v1349, %v1444
    %1446 = vdwg.mxu0
    %v1447 = vadd.f32 %v1408, %v1169
    %v1448 = vadd.f32 %v1410, %v1170
    %v1449 = vadd.f32 %v1413, %v1171
    %v1450 = vadd.f32 %v1415, %v1172
    %v1451 = vadd.f32 %v1418, %v1173
    %v1452 = vadd.f32 %v1420, %v1174
    %v1453 = vadd.f32 %v1423, %v1175
    %v1454 = vadd.f32 %v1425, %v1176
    %v1455 = vadd.f32 %v1428, %v1177
    %v1456 = vadd.f32 %v1430, %v1178
    %v1457 = vadd.f32 %v1433, %v1179
    %v1458 = vadd.f32 %v1435, %v1180
    %v1459 = vadd.f32 %v1438, %v1181
    %v1460 = vadd.f32 %v1440, %v1182
    %v1461 = vadd.f32 %v1443, %v1183
    %v1462 = vadd.f32 %v1445, %v1184
    %v1463 = vmax.f32 %v1447, 0.0
    %v1464 = vmax.f32 %v1448, 0.0
    %v1465 = vmax.f32 %v1449, 0.0
    %v1466 = vmax.f32 %v1450, 0.0
    %v1467 = vmax.f32 %v1451, 0.0
    %v1468 = vmax.f32 %v1452, 0.0
    %v1469 = vmax.f32 %v1453, 0.0
    %v1470 = vmax.f32 %v1454, 0.0
    %v1471 = vmax.f32 %v1455, 0.0
    %v1472 = vmax.f32 %v1456, 0.0
    %v1473 = vmax.f32 %v1457, 0.0
    %v1474 = vmax.f32 %v1458, 0.0
    %v1475 = vmax.f32 %v1459, 0.0
    %v1476 = vmax.f32 %v1460, 0.0
    %v1477 = vmax.f32 %v1461, 0.0
    %v1478 = vmax.f32 %v1462, 0.0
    %s1479 = scalar_lea.vmem [#allocation7], 512
    %v1480 = vld [vmem:[%s1479] sm:$0xf]
    %v1481 = vld [vmem:[%s1479 + $0x4] sm:$0xf]
    %v1482 = vld [vmem:[%s1479 + $0x8] sm:$0xf]
    %v1483 = vld [vmem:[%s1479 + $0xc] sm:$0xf]
    %v1484 = vld [vmem:[%s1479 + $0x10] sm:$0xf]
    %v1485 = vld [vmem:[%s1479 + $0x14] sm:$0xf]
    %v1486 = vld [vmem:[%s1479 + $0x18] sm:$0xf]
    %v1487 = vld [vmem:[%s1479 + $0x1c] sm:$0xf]
    %v1488 = vld [vmem:[%s1479 + $0x20] sm:$0xf]
    %v1489 = vld [vmem:[%s1479 + $0x24] sm:$0xf]
    %v1490 = vld [vmem:[%s1479 + $0x28] sm:$0xf]
    %v1491 = vld [vmem:[%s1479 + $0x2c] sm:$0xf]
    %v1492 = vld [vmem:[%s1479 + $0x30] sm:$0xf]
    %v1493 = vld [vmem:[%s1479 + $0x34] sm:$0xf]
    %v1494 = vld [vmem:[%s1479 + $0x38] sm:$0xf]
    %v1495 = vld [vmem:[%s1479 + $0x3c] sm:$0xf]
    %s1496 = scalar_lea.vmem [#allocation7], 576
    %v1497 = vld [vmem:[%s1496] sm:$0xf]
    %v1498 = vld [vmem:[%s1496 + $0x4] sm:$0xf]
    %v1499 = vld [vmem:[%s1496 + $0x8] sm:$0xf]
    %v1500 = vld [vmem:[%s1496 + $0xc] sm:$0xf]
    %v1501 = vld [vmem:[%s1496 + $0x10] sm:$0xf]
    %v1502 = vld [vmem:[%s1496 + $0x14] sm:$0xf]
    %v1503 = vld [vmem:[%s1496 + $0x18] sm:$0xf]
    %v1504 = vld [vmem:[%s1496 + $0x1c] sm:$0xf]
    %v1505 = vld [vmem:[%s1496 + $0x20] sm:$0xf]
    %v1506 = vld [vmem:[%s1496 + $0x24] sm:$0xf]
    %v1507 = vld [vmem:[%s1496 + $0x28] sm:$0xf]
    %v1508 = vld [vmem:[%s1496 + $0x2c] sm:$0xf]
    %v1509 = vld [vmem:[%s1496 + $0x30] sm:$0xf]
    %v1510 = vld [vmem:[%s1496 + $0x34] sm:$0xf]
    %v1511 = vld [vmem:[%s1496 + $0x38] sm:$0xf]
    %v1512 = vld [vmem:[%s1496 + $0x3c] sm:$0xf]
    %v1513 = vpack.c.bf16 %v1464, %v1463
    %v1514 = vpack.c.bf16 %v1466, %v1465
    %v1515 = vpack.c.bf16 %v1468, %v1467
    %v1516 = vpack.c.bf16 %v1470, %v1469
    %v1517 = vpack.c.bf16 %v1472, %v1471
    %v1518 = vpack.c.bf16 %v1474, %v1473
    %v1519 = vpack.c.bf16 %v1476, %v1475
    %v1520 = vpack.c.bf16 %v1478, %v1477
    %v1521 = vperm.slane %v303, 0
    %v1538 = vunpack.c.l.b16 %v1480
    %v1539 = vunpack.c.l.b16 %v1481
    %v1540 = vunpack.c.l.b16 %v1482
    %v1541 = vunpack.c.l.b16 %v1483
    %v1542 = vunpack.c.l.b16 %v1484
    %v1543 = vunpack.c.l.b16 %v1485
    %v1544 = vunpack.c.l.b16 %v1486
    %v1545 = vunpack.c.l.b16 %v1487
    %v1546 = vunpack.c.l.b16 %v1488
    %v1547 = vunpack.c.l.b16 %v1489
    %v1548 = vunpack.c.l.b16 %v1490
    %v1549 = vunpack.c.l.b16 %v1491
    %v1550 = vunpack.c.l.b16 %v1492
    %v1551 = vunpack.c.l.b16 %v1493
    %v1552 = vunpack.c.l.b16 %v1494
    %v1553 = vunpack.c.l.b16 %v1495
    %v1554 = vpack.c.b16 %v1539, %v1538
    %v1555 = vpack.c.b16 %v1541, %v1540
    %v1556 = vpack.c.b16 %v1543, %v1542
    %v1557 = vpack.c.b16 %v1545, %v1544
    %v1558 = vpack.c.b16 %v1547, %v1546
    %v1559 = vpack.c.b16 %v1549, %v1548
    %v1560 = vpack.c.b16 %v1551, %v1550
    %v1561 = vpack.c.b16 %v1553, %v1552
    %1570 = vmatpush.bf16.msra.mxu0 %v1561
    %1571 = vmatpush.bf16.msra.mxu0 %v1560
    %1572 = vmatpush.bf16.msra.mxu0 %v1559
    %1573 = vmatpush.bf16.msra.mxu0 %v1558
    %1574 = vmatpush.bf16.msra.mxu0 %v1557
    %1575 = vmatpush.bf16.msra.mxu0 %v1556
    %1576 = vmatpush.bf16.msra.mxu0 %v1555
    %1577 = vmatpush.bf16.msra.mxu0 %v1554
    %1578 = vmatmul.bf16.gmra.mxu0 %v1513
    %v1579 = vpop.f32.mrf.mxu0
    %v1580 = vadd.f32 %v1521, %v1579
    %v1581 = vpop.f32.mrf.mxu0
    %v1582 = vadd.f32 %v1521, %v1581
    %1583 = vmatmul.bf16.gmra.mxu0 %v1514
    %v1584 = vpop.f32.mrf.mxu0
    %v1585 = vadd.f32 %v1521, %v1584
    %v1586 = vpop.f32.mrf.mxu0
    %v1587 = vadd.f32 %v1521, %v1586
    %1588 = vmatmul.bf16.gmra.mxu0 %v1515
    %v1589 = vpop.f32.mrf.mxu0
    %v1590 = vadd.f32 %v1521, %v1589
    %v1591 = vpop.f32.mrf.mxu0
    %v1592 = vadd.f32 %v1521, %v1591
    %1593 = vmatmul.bf16.gmra.mxu0 %v1516
    %v1594 = vpop.f32.mrf.mxu0
    %v1595 = vadd.f32 %v1521, %v1594
    %v1596 = vpop.f32.mrf.mxu0
    %v1597 = vadd.f32 %v1521, %v1596
    %1598 = vmatmul.bf16.gmra.mxu0 %v1517
    %v1599 = vpop.f32.mrf.mxu0
    %v1600 = vadd.f32 %v1521, %v1599
    %v1601 = vpop.f32.mrf.mxu0
    %v1602 = vadd.f32 %v1521, %v1601
    %1603 = vmatmul.bf16.gmra.mxu0 %v1518
    %v1604 = vpop.f32.mrf.mxu0
    %v1605 = vadd.f32 %v1521, %v1604
    %v1606 = vpop.f32.mrf.mxu0
    %v1607 = vadd.f32 %v1521, %v1606
    %1608 = vmatmul.bf16.gmra.mxu0 %v1519
    %v1609 = vpop.f32.mrf.mxu0
    %v1610 = vadd.f32 %v1521, %v1609
    %v1611 = vpop.f32.mrf.mxu0
    %v1612 = vadd.f32 %v1521, %v1611
    %1613 = vmatmul.bf16.gmra.mxu0 %v1520
    %v1614 = vpop.f32.mrf.mxu0
    %v1615 = vadd.f32 %v1521, %v1614
    %v1616 = vpop.f32.mrf.mxu0
    %v1617 = vadd.f32 %v1521, %v1616
    %1618 = vdwg.mxu0
    %v1619 = vmax.f32 %v1580, 0.0
    %v1620 = vmax.f32 %v1582, 0.0
    %v1621 = vmax.f32 %v1585, 0.0
    %v1622 = vmax.f32 %v1587, 0.0
    %v1623 = vmax.f32 %v1590, 0.0
    %v1624 = vmax.f32 %v1592, 0.0
    %v1625 = vmax.f32 %v1595, 0.0
    %v1626 = vmax.f32 %v1597, 0.0
    %v1627 = vmax.f32 %v1600, 0.0
    %v1628 = vmax.f32 %v1602, 0.0
    %v1629 = vmax.f32 %v1605, 0.0
    %v1630 = vmax.f32 %v1607, 0.0
    %v1631 = vmax.f32 %v1610, 0.0
    %v1632 = vmax.f32 %v1612, 0.0
    %v1633 = vmax.f32 %v1615, 0.0
    %v1634 = vmax.f32 %v1617, 0.0
    %v1635 = vpack.c.bf16 %v1620, %v1619
    %v1636 = vpack.c.bf16 %v1622, %v1621
    %v1637 = vpack.c.bf16 %v1624, %v1623
    %v1638 = vpack.c.bf16 %v1626, %v1625
    %v1639 = vpack.c.bf16 %v1628, %v1627
    %v1640 = vpack.c.bf16 %v1630, %v1629
    %v1641 = vpack.c.bf16 %v1632, %v1631
    %v1642 = vpack.c.bf16 %v1634, %v1633
    %v1643 = vperm.slane %v303, 1
    %v1660 = vunpack.c.l.b16 %v1497
    %v1661 = vunpack.c.l.b16 %v1498
    %v1662 = vunpack.c.l.b16 %v1499
    %v1663 = vunpack.c.l.b16 %v1500
    %v1664 = vunpack.c.l.b16 %v1501
    %v1665 = vunpack.c.l.b16 %v1502
    %v1666 = vunpack.c.l.b16 %v1503
    %v1667 = vunpack.c.l.b16 %v1504
    %v1668 = vunpack.c.l.b16 %v1505
    %v1669 = vunpack.c.l.b16 %v1506
    %v1670 = vunpack.c.l.b16 %v1507
    %v1671 = vunpack.c.l.b16 %v1508
    %v1672 = vunpack.c.l.b16 %v1509
    %v1673 = vunpack.c.l.b16 %v1510
    %v1674 = vunpack.c.l.b16 %v1511
    %v1675 = vunpack.c.l.b16 %v1512
    %v1676 = vpack.c.b16 %v1661, %v1660
    %v1677 = vpack.c.b16 %v1663, %v1662
    %v1678 = vpack.c.b16 %v1665, %v1664
    %v1679 = vpack.c.b16 %v1667, %v1666
    %v1680 = vpack.c.b16 %v1669, %v1668
    %v1681 = vpack.c.b16 %v1671, %v1670
    %v1682 = vpack.c.b16 %v1673, %v1672
    %v1683 = vpack.c.b16 %v1675, %v1674
    %1692 = vmatpush.bf16.msra.mxu0 %v1683
    %1693 = vmatpush.bf16.msra.mxu0 %v1682
    %1694 = vmatpush.bf16.msra.mxu0 %v1681
    %1695 = vmatpush.bf16.msra.mxu0 %v1680
    %1696 = vmatpush.bf16.msra.mxu0 %v1679
    %1697 = vmatpush.bf16.msra.mxu0 %v1678
    %1698 = vmatpush.bf16.msra.mxu0 %v1677
    %1699 = vmatpush.bf16.msra.mxu0 %v1676
    %1700 = vmatmul.bf16.gmra.mxu0 %v1635
    %v1701 = vpop.f32.mrf.mxu0
    %v1702 = vadd.f32 %v1643, %v1701
    %v1703 = vpop.f32.mrf.mxu0
    %v1704 = vadd.f32 %v1643, %v1703
    %1705 = vmatmul.bf16.gmra.mxu0 %v1636
    %v1706 = vpop.f32.mrf.mxu0
    %v1707 = vadd.f32 %v1643, %v1706
    %v1708 = vpop.f32.mrf.mxu0
    %v1709 = vadd.f32 %v1643, %v1708
    %1710 = vmatmul.bf16.gmra.mxu0 %v1637
    %v1711 = vpop.f32.mrf.mxu0
    %v1712 = vadd.f32 %v1643, %v1711
    %v1713 = vpop.f32.mrf.mxu0
    %v1714 = vadd.f32 %v1643, %v1713
    %1715 = vmatmul.bf16.gmra.mxu0 %v1638
    %v1716 = vpop.f32.mrf.mxu0
    %v1717 = vadd.f32 %v1643, %v1716
    %v1718 = vpop.f32.mrf.mxu0
    %v1719 = vadd.f32 %v1643, %v1718
    %1720 = vmatmul.bf16.gmra.mxu0 %v1639
    %v1721 = vpop.f32.mrf.mxu0
    %v1722 = vadd.f32 %v1643, %v1721
    %v1723 = vpop.f32.mrf.mxu0
    %v1724 = vadd.f32 %v1643, %v1723
    %1725 = vmatmul.bf16.gmra.mxu0 %v1640
    %v1726 = vpop.f32.mrf.mxu0
    %v1727 = vadd.f32 %v1643, %v1726
    %v1728 = vpop.f32.mrf.mxu0
    %v1729 = vadd.f32 %v1643, %v1728
    %1730 = vmatmul.bf16.gmra.mxu0 %v1641
    %v1731 = vpop.f32.mrf.mxu0
    %v1732 = vadd.f32 %v1643, %v1731
    %v1733 = vpop.f32.mrf.mxu0
    %v1734 = vadd.f32 %v1643, %v1733
    %1735 = vmatmul.bf16.gmra.mxu0 %v1642
    %v1736 = vpop.f32.mrf.mxu0
    %v1737 = vadd.f32 %v1643, %v1736
    %v1738 = vpop.f32.mrf.mxu0
    %v1739 = vadd.f32 %v1643, %v1738
    %1740 = vdwg.mxu0
    %v1741 = vadd.f32 %v1702, %v1463
    %v1742 = vadd.f32 %v1704, %v1464
    %v1743 = vadd.f32 %v1707, %v1465
    %v1744 = vadd.f32 %v1709, %v1466
    %v1745 = vadd.f32 %v1712, %v1467
    %v1746 = vadd.f32 %v1714, %v1468
    %v1747 = vadd.f32 %v1717, %v1469
    %v1748 = vadd.f32 %v1719, %v1470
    %v1749 = vadd.f32 %v1722, %v1471
    %v1750 = vadd.f32 %v1724, %v1472
    %v1751 = vadd.f32 %v1727, %v1473
    %v1752 = vadd.f32 %v1729, %v1474
    %v1753 = vadd.f32 %v1732, %v1475
    %v1754 = vadd.f32 %v1734, %v1476
    %v1755 = vadd.f32 %v1737, %v1477
    %v1756 = vadd.f32 %v1739, %v1478
    %v1757 = vmax.f32 %v1741, 0.0
    %v1758 = vmax.f32 %v1742, 0.0
    %v1759 = vmax.f32 %v1743, 0.0
    %v1760 = vmax.f32 %v1744, 0.0
    %v1761 = vmax.f32 %v1745, 0.0
    %v1762 = vmax.f32 %v1746, 0.0
    %v1763 = vmax.f32 %v1747, 0.0
    %v1764 = vmax.f32 %v1748, 0.0
    %v1765 = vmax.f32 %v1749, 0.0
    %v1766 = vmax.f32 %v1750, 0.0
    %v1767 = vmax.f32 %v1751, 0.0
    %v1768 = vmax.f32 %v1752, 0.0
    %v1769 = vmax.f32 %v1753, 0.0
    %v1770 = vmax.f32 %v1754, 0.0
    %v1771 = vmax.f32 %v1755, 0.0
    %v1772 = vmax.f32 %v1756, 0.0
    %s1773 = scalar_lea.vmem [#allocation7], 640
    %v1774 = vld [vmem:[%s1773] sm:$0xf]
    %v1775 = vld [vmem:[%s1773 + $0x4] sm:$0xf]
    %v1776 = vld [vmem:[%s1773 + $0x8] sm:$0xf]
    %v1777 = vld [vmem:[%s1773 + $0xc] sm:$0xf]
    %v1778 = vld [vmem:[%s1773 + $0x10] sm:$0xf]
    %v1779 = vld [vmem:[%s1773 + $0x14] sm:$0xf]
    %v1780 = vld [vmem:[%s1773 + $0x18] sm:$0xf]
    %v1781 = vld [vmem:[%s1773 + $0x1c] sm:$0xf]
    %v1782 = vld [vmem:[%s1773 + $0x20] sm:$0xf]
    %v1783 = vld [vmem:[%s1773 + $0x24] sm:$0xf]
    %v1784 = vld [vmem:[%s1773 + $0x28] sm:$0xf]
    %v1785 = vld [vmem:[%s1773 + $0x2c] sm:$0xf]
    %v1786 = vld [vmem:[%s1773 + $0x30] sm:$0xf]
    %v1787 = vld [vmem:[%s1773 + $0x34] sm:$0xf]
    %v1788 = vld [vmem:[%s1773 + $0x38] sm:$0xf]
    %v1789 = vld [vmem:[%s1773 + $0x3c] sm:$0xf]
    %s1790 = scalar_lea.vmem [#allocation7], 704
    %v1791 = vld [vmem:[%s1790] sm:$0xf]
    %v1792 = vld [vmem:[%s1790 + $0x4] sm:$0xf]
    %v1793 = vld [vmem:[%s1790 + $0x8] sm:$0xf]
    %v1794 = vld [vmem:[%s1790 + $0xc] sm:$0xf]
    %v1795 = vld [vmem:[%s1790 + $0x10] sm:$0xf]
    %v1796 = vld [vmem:[%s1790 + $0x14] sm:$0xf]
    %v1797 = vld [vmem:[%s1790 + $0x18] sm:$0xf]
    %v1798 = vld [vmem:[%s1790 + $0x1c] sm:$0xf]
    %v1799 = vld [vmem:[%s1790 + $0x20] sm:$0xf]
    %v1800 = vld [vmem:[%s1790 + $0x24] sm:$0xf]
    %v1801 = vld [vmem:[%s1790 + $0x28] sm:$0xf]
    %v1802 = vld [vmem:[%s1790 + $0x2c] sm:$0xf]
    %v1803 = vld [vmem:[%s1790 + $0x30] sm:$0xf]
    %v1804 = vld [vmem:[%s1790 + $0x34] sm:$0xf]
    %v1805 = vld [vmem:[%s1790 + $0x38] sm:$0xf]
    %v1806 = vld [vmem:[%s1790 + $0x3c] sm:$0xf]
    %v1807 = vpack.c.bf16 %v1758, %v1757
    %v1808 = vpack.c.bf16 %v1760, %v1759
    %v1809 = vpack.c.bf16 %v1762, %v1761
    %v1810 = vpack.c.bf16 %v1764, %v1763
    %v1811 = vpack.c.bf16 %v1766, %v1765
    %v1812 = vpack.c.bf16 %v1768, %v1767
    %v1813 = vpack.c.bf16 %v1770, %v1769
    %v1814 = vpack.c.bf16 %v1772, %v1771
    %v1815 = vperm.slane %v303, 2
    %v1832 = vunpack.c.l.b16 %v1774
    %v1833 = vunpack.c.l.b16 %v1775
    %v1834 = vunpack.c.l.b16 %v1776
    %v1835 = vunpack.c.l.b16 %v1777
    %v1836 = vunpack.c.l.b16 %v1778
    %v1837 = vunpack.c.l.b16 %v1779
    %v1838 = vunpack.c.l.b16 %v1780
    %v1839 = vunpack.c.l.b16 %v1781
    %v1840 = vunpack.c.l.b16 %v1782
    %v1841 = vunpack.c.l.b16 %v1783
    %v1842 = vunpack.c.l.b16 %v1784
    %v1843 = vunpack.c.l.b16 %v1785
    %v1844 = vunpack.c.l.b16 %v1786
    %v1845 = vunpack.c.l.b16 %v1787
    %v1846 = vunpack.c.l.b16 %v1788
    %v1847 = vunpack.c.l.b16 %v1789
    %v1848 = vpack.c.b16 %v1833, %v1832
    %v1849 = vpack.c.b16 %v1835, %v1834
    %v1850 = vpack.c.b16 %v1837, %v1836
    %v1851 = vpack.c.b16 %v1839, %v1838
    %v1852 = vpack.c.b16 %v1841, %v1840
    %v1853 = vpack.c.b16 %v1843, %v1842
    %v1854 = vpack.c.b16 %v1845, %v1844
    %v1855 = vpack.c.b16 %v1847, %v1846
    %1864 = vmatpush.bf16.msra.mxu0 %v1855
    %1865 = vmatpush.bf16.msra.mxu0 %v1854
    %1866 = vmatpush.bf16.msra.mxu0 %v1853
    %1867 = vmatpush.bf16.msra.mxu0 %v1852
    %1868 = vmatpush.bf16.msra.mxu0 %v1851
    %1869 = vmatpush.bf16.msra.mxu0 %v1850
    %1870 = vmatpush.bf16.msra.mxu0 %v1849
    %1871 = vmatpush.bf16.msra.mxu0 %v1848
    %1872 = vmatmul.bf16.gmra.mxu0 %v1807
    %v1873 = vpop.f32.mrf.mxu0
    %v1874 = vadd.f32 %v1815, %v1873
    %v1875 = vpop.f32.mrf.mxu0
    %v1876 = vadd.f32 %v1815, %v1875
    %1877 = vmatmul.bf16.gmra.mxu0 %v1808
    %v1878 = vpop.f32.mrf.mxu0
    %v1879 = vadd.f32 %v1815, %v1878
    %v1880 = vpop.f32.mrf.mxu0
    %v1881 = vadd.f32 %v1815, %v1880
    %1882 = vmatmul.bf16.gmra.mxu0 %v1809
    %v1883 = vpop.f32.mrf.mxu0
    %v1884 = vadd.f32 %v1815, %v1883
    %v1885 = vpop.f32.mrf.mxu0
    %v1886 = vadd.f32 %v1815, %v1885
    %1887 = vmatmul.bf16.gmra.mxu0 %v1810
    %v1888 = vpop.f32.mrf.mxu0
    %v1889 = vadd.f32 %v1815, %v1888
    %v1890 = vpop.f32.mrf.mxu0
    %v1891 = vadd.f32 %v1815, %v1890
    %1892 = vmatmul.bf16.gmra.mxu0 %v1811
    %v1893 = vpop.f32.mrf.mxu0
    %v1894 = vadd.f32 %v1815, %v1893
    %v1895 = vpop.f32.mrf.mxu0
    %v1896 = vadd.f32 %v1815, %v1895
    %1897 = vmatmul.bf16.gmra.mxu0 %v1812
    %v1898 = vpop.f32.mrf.mxu0
    %v1899 = vadd.f32 %v1815, %v1898
    %v1900 = vpop.f32.mrf.mxu0
    %v1901 = vadd.f32 %v1815, %v1900
    %1902 = vmatmul.bf16.gmra.mxu0 %v1813
    %v1903 = vpop.f32.mrf.mxu0
    %v1904 = vadd.f32 %v1815, %v1903
    %v1905 = vpop.f32.mrf.mxu0
    %v1906 = vadd.f32 %v1815, %v1905
    %1907 = vmatmul.bf16.gmra.mxu0 %v1814
    %v1908 = vpop.f32.mrf.mxu0
    %v1909 = vadd.f32 %v1815, %v1908
    %v1910 = vpop.f32.mrf.mxu0
    %v1911 = vadd.f32 %v1815, %v1910
    %1912 = vdwg.mxu0
    %v1913 = vmax.f32 %v1874, 0.0
    %v1914 = vmax.f32 %v1876, 0.0
    %v1915 = vmax.f32 %v1879, 0.0
    %v1916 = vmax.f32 %v1881, 0.0
    %v1917 = vmax.f32 %v1884, 0.0
    %v1918 = vmax.f32 %v1886, 0.0
    %v1919 = vmax.f32 %v1889, 0.0
    %v1920 = vmax.f32 %v1891, 0.0
    %v1921 = vmax.f32 %v1894, 0.0
    %v1922 = vmax.f32 %v1896, 0.0
    %v1923 = vmax.f32 %v1899, 0.0
    %v1924 = vmax.f32 %v1901, 0.0
    %v1925 = vmax.f32 %v1904, 0.0
    %v1926 = vmax.f32 %v1906, 0.0
    %v1927 = vmax.f32 %v1909, 0.0
    %v1928 = vmax.f32 %v1911, 0.0
    %v1929 = vpack.c.bf16 %v1914, %v1913
    %v1930 = vpack.c.bf16 %v1916, %v1915
    %v1931 = vpack.c.bf16 %v1918, %v1917
    %v1932 = vpack.c.bf16 %v1920, %v1919
    %v1933 = vpack.c.bf16 %v1922, %v1921
    %v1934 = vpack.c.bf16 %v1924, %v1923
    %v1935 = vpack.c.bf16 %v1926, %v1925
    %v1936 = vpack.c.bf16 %v1928, %v1927
    %v1937 = vperm.slane %v303, 3
    %v1954 = vunpack.c.l.b16 %v1791
    %v1955 = vunpack.c.l.b16 %v1792
    %v1956 = vunpack.c.l.b16 %v1793
    %v1957 = vunpack.c.l.b16 %v1794
    %v1958 = vunpack.c.l.b16 %v1795
    %v1959 = vunpack.c.l.b16 %v1796
    %v1960 = vunpack.c.l.b16 %v1797
    %v1961 = vunpack.c.l.b16 %v1798
    %v1962 = vunpack.c.l.b16 %v1799
    %v1963 = vunpack.c.l.b16 %v1800
    %v1964 = vunpack.c.l.b16 %v1801
    %v1965 = vunpack.c.l.b16 %v1802
    %v1966 = vunpack.c.l.b16 %v1803
    %v1967 = vunpack.c.l.b16 %v1804
    %v1968 = vunpack.c.l.b16 %v1805
    %v1969 = vunpack.c.l.b16 %v1806
    %v1970 = vpack.c.b16 %v1955, %v1954
    %v1971 = vpack.c.b16 %v1957, %v1956
    %v1972 = vpack.c.b16 %v1959, %v1958
    %v1973 = vpack.c.b16 %v1961, %v1960
    %v1974 = vpack.c.b16 %v1963, %v1962
    %v1975 = vpack.c.b16 %v1965, %v1964
    %v1976 = vpack.c.b16 %v1967, %v1966
    %v1977 = vpack.c.b16 %v1969, %v1968
    %1986 = vmatpush.bf16.msra.mxu0 %v1977
    %1987 = vmatpush.bf16.msra.mxu0 %v1976
    %1988 = vmatpush.bf16.msra.mxu0 %v1975
    %1989 = vmatpush.bf16.msra.mxu0 %v1974
    %1990 = vmatpush.bf16.msra.mxu0 %v1973
    %1991 = vmatpush.bf16.msra.mxu0 %v1972
    %1992 = vmatpush.bf16.msra.mxu0 %v1971
    %1993 = vmatpush.bf16.msra.mxu0 %v1970
    %1994 = vmatmul.bf16.gmra.mxu0 %v1929
    %v1995 = vpop.f32.mrf.mxu0
    %v1996 = vadd.f32 %v1937, %v1995
    %v1997 = vpop.f32.mrf.mxu0
    %v1998 = vadd.f32 %v1937, %v1997
    %1999 = vmatmul.bf16.gmra.mxu0 %v1930
    %v2000 = vpop.f32.mrf.mxu0
    %v2001 = vadd.f32 %v1937, %v2000
    %v2002 = vpop.f32.mrf.mxu0
    %v2003 = vadd.f32 %v1937, %v2002
    %2004 = vmatmul.bf16.gmra.mxu0 %v1931
    %v2005 = vpop.f32.mrf.mxu0
    %v2006 = vadd.f32 %v1937, %v2005
    %v2007 = vpop.f32.mrf.mxu0
    %v2008 = vadd.f32 %v1937, %v2007
    %2009 = vmatmul.bf16.gmra.mxu0 %v1932
    %v2010 = vpop.f32.mrf.mxu0
    %v2011 = vadd.f32 %v1937, %v2010
    %v2012 = vpop.f32.mrf.mxu0
    %v2013 = vadd.f32 %v1937, %v2012
    %2014 = vmatmul.bf16.gmra.mxu0 %v1933
    %v2015 = vpop.f32.mrf.mxu0
    %v2016 = vadd.f32 %v1937, %v2015
    %v2017 = vpop.f32.mrf.mxu0
    %v2018 = vadd.f32 %v1937, %v2017
    %2019 = vmatmul.bf16.gmra.mxu0 %v1934
    %v2020 = vpop.f32.mrf.mxu0
    %v2021 = vadd.f32 %v1937, %v2020
    %v2022 = vpop.f32.mrf.mxu0
    %v2023 = vadd.f32 %v1937, %v2022
    %2024 = vmatmul.bf16.gmra.mxu0 %v1935
    %v2025 = vpop.f32.mrf.mxu0
    %v2026 = vadd.f32 %v1937, %v2025
    %v2027 = vpop.f32.mrf.mxu0
    %v2028 = vadd.f32 %v1937, %v2027
    %2029 = vmatmul.bf16.gmra.mxu0 %v1936
    %v2030 = vpop.f32.mrf.mxu0
    %v2031 = vadd.f32 %v1937, %v2030
    %v2032 = vpop.f32.mrf.mxu0
    %v2033 = vadd.f32 %v1937, %v2032
    %2034 = vdwg.mxu0
    %v2035 = vadd.f32 %v1996, %v1757
    %v2036 = vadd.f32 %v1998, %v1758
    %v2037 = vadd.f32 %v2001, %v1759
    %v2038 = vadd.f32 %v2003, %v1760
    %v2039 = vadd.f32 %v2006, %v1761
    %v2040 = vadd.f32 %v2008, %v1762
    %v2041 = vadd.f32 %v2011, %v1763
    %v2042 = vadd.f32 %v2013, %v1764
    %v2043 = vadd.f32 %v2016, %v1765
    %v2044 = vadd.f32 %v2018, %v1766
    %v2045 = vadd.f32 %v2021, %v1767
    %v2046 = vadd.f32 %v2023, %v1768
    %v2047 = vadd.f32 %v2026, %v1769
    %v2048 = vadd.f32 %v2028, %v1770
    %v2049 = vadd.f32 %v2031, %v1771
    %v2050 = vadd.f32 %v2033, %v1772
    %v2051 = vmax.f32 %v2035, 0.0
    %v2052 = vmax.f32 %v2036, 0.0
    %v2053 = vmax.f32 %v2037, 0.0
    %v2054 = vmax.f32 %v2038, 0.0
    %v2055 = vmax.f32 %v2039, 0.0
    %v2056 = vmax.f32 %v2040, 0.0
    %v2057 = vmax.f32 %v2041, 0.0
    %v2058 = vmax.f32 %v2042, 0.0
    %v2059 = vmax.f32 %v2043, 0.0
    %v2060 = vmax.f32 %v2044, 0.0
    %v2061 = vmax.f32 %v2045, 0.0
    %v2062 = vmax.f32 %v2046, 0.0
    %v2063 = vmax.f32 %v2047, 0.0
    %v2064 = vmax.f32 %v2048, 0.0
    %v2065 = vmax.f32 %v2049, 0.0
    %v2066 = vmax.f32 %v2050, 0.0
    %v2067 = vpack.c.bf16 %v2052, %v2051
    %v2068 = vpack.c.bf16 %v2054, %v2053
    %v2069 = vpack.c.bf16 %v2056, %v2055
    %v2070 = vpack.c.bf16 %v2058, %v2057
    %v2071 = vpack.c.bf16 %v2060, %v2059
    %v2072 = vpack.c.bf16 %v2062, %v2061
    %v2073 = vpack.c.bf16 %v2064, %v2063
    %v2074 = vpack.c.bf16 %v2066, %v2065
    %v2075 = vld [vmem:[#allocation10] sm:$0xf]
    %v2076 = vld [vmem:[#allocation10 + $0x4] sm:$0xf]
    %v2077 = vld [vmem:[#allocation10 + $0x8] sm:$0xf]
    %v2078 = vld [vmem:[#allocation10 + $0xc] sm:$0xf]
    %v2079 = vld [vmem:[#allocation10 + $0x10] sm:$0xf]
    %v2080 = vld [vmem:[#allocation10 + $0x14] sm:$0xf]
    %v2081 = vld [vmem:[#allocation10 + $0x18] sm:$0xf]
    %v2082 = vld [vmem:[#allocation10 + $0x1c] sm:$0xf]
    %v2083 = vld [vmem:[#allocation10 + $0x20] sm:$0xf]
    %v2084 = vld [vmem:[#allocation10 + $0x24] sm:$0xf]
    %v2085 = vld [vmem:[#allocation10 + $0x28] sm:$0xf]
    %v2086 = vld [vmem:[#allocation10 + $0x2c] sm:$0xf]
    %v2087 = vld [vmem:[#allocation10 + $0x30] sm:$0xf]
    %v2088 = vld [vmem:[#allocation10 + $0x34] sm:$0xf]
    %v2089 = vld [vmem:[#allocation10 + $0x38] sm:$0xf]
    %v2090 = vld [vmem:[#allocation10 + $0x3c] sm:$0xf]
    %v2091 = vld [vmem:[%s6] sm:$0x1]
    %v2093 = vperm.slane %v2091, 0
    %v2111 = vunpack.c.l.b16 %v2075
    %v2112 = vunpack.c.l.b16 %v2076
    %v2113 = vunpack.c.l.b16 %v2077
    %v2114 = vunpack.c.l.b16 %v2078
    %v2115 = vunpack.c.l.b16 %v2079
    %v2116 = vunpack.c.l.b16 %v2080
    %v2117 = vunpack.c.l.b16 %v2081
    %v2118 = vunpack.c.l.b16 %v2082
    %v2119 = vunpack.c.l.b16 %v2083
    %v2120 = vunpack.c.l.b16 %v2084
    %v2121 = vunpack.c.l.b16 %v2085
    %v2122 = vunpack.c.l.b16 %v2086
    %v2123 = vunpack.c.l.b16 %v2087
    %v2124 = vunpack.c.l.b16 %v2088
    %v2125 = vunpack.c.l.b16 %v2089
    %v2126 = vunpack.c.l.b16 %v2090
    %v2127 = vpack.c.b16 %v2112, %v2111
    %v2128 = vpack.c.b16 %v2114, %v2113
    %v2129 = vpack.c.b16 %v2116, %v2115
    %v2130 = vpack.c.b16 %v2118, %v2117
    %v2131 = vpack.c.b16 %v2120, %v2119
    %v2132 = vpack.c.b16 %v2122, %v2121
    %v2133 = vpack.c.b16 %v2124, %v2123
    %v2134 = vpack.c.b16 %v2126, %v2125
    %2143 = vmatpush.bf16.msra.mxu0 %v2134
    %2144 = vmatpush.bf16.msra.mxu0 %v2133
    %2145 = vmatpush.bf16.msra.mxu0 %v2132
    %2146 = vmatpush.bf16.msra.mxu0 %v2131
    %2147 = vmatpush.bf16.msra.mxu0 %v2130
    %2148 = vmatpush.bf16.msra.mxu0 %v2129
    %2149 = vmatpush.bf16.msra.mxu0 %v2128
    %2150 = vmatpush.bf16.msra.mxu0 %v2127
    %2151 = vmatmul.bf16.gmra.mxu0 %v2067
    %v2152 = vpop.f32.mrf.mxu0
    %v2153 = vadd.f32 %v2093, %v2152
    %v2154 = vpop.f32.mrf.mxu0
    %v2155 = vadd.f32 %v2093, %v2154
    %2156 = vmatmul.bf16.gmra.mxu0 %v2068
    %v2157 = vpop.f32.mrf.mxu0
    %v2158 = vadd.f32 %v2093, %v2157
    %v2159 = vpop.f32.mrf.mxu0
    %v2160 = vadd.f32 %v2093, %v2159
    %2161 = vmatmul.bf16.gmra.mxu0 %v2069
    %v2162 = vpop.f32.mrf.mxu0
    %v2163 = vadd.f32 %v2093, %v2162
    %v2164 = vpop.f32.mrf.mxu0
    %v2165 = vadd.f32 %v2093, %v2164
    %2166 = vmatmul.bf16.gmra.mxu0 %v2070
    %v2167 = vpop.f32.mrf.mxu0
    %v2168 = vadd.f32 %v2093, %v2167
    %v2169 = vpop.f32.mrf.mxu0
    %v2170 = vadd.f32 %v2093, %v2169
    %2171 = vmatmul.bf16.gmra.mxu0 %v2071
    %v2172 = vpop.f32.mrf.mxu0
    %v2173 = vadd.f32 %v2093, %v2172
    %v2174 = vpop.f32.mrf.mxu0
    %v2175 = vadd.f32 %v2093, %v2174
    %2176 = vmatmul.bf16.gmra.mxu0 %v2072
    %v2177 = vpop.f32.mrf.mxu0
    %v2178 = vadd.f32 %v2093, %v2177
    %v2179 = vpop.f32.mrf.mxu0
    %v2180 = vadd.f32 %v2093, %v2179
    %2181 = vmatmul.bf16.gmra.mxu0 %v2073
    %v2182 = vpop.f32.mrf.mxu0
    %v2183 = vadd.f32 %v2093, %v2182
    %v2184 = vpop.f32.mrf.mxu0
    %v2185 = vadd.f32 %v2093, %v2184
    %2186 = vmatmul.bf16.gmra.mxu0 %v2074
    %v2187 = vpop.f32.mrf.mxu0
    %v2188 = vadd.f32 %v2093, %v2187
    %v2189 = vpop.f32.mrf.mxu0
    %v2190 = vadd.f32 %v2093, %v2189
    %2191 = vdwg.mxu0
    %2192 = vst [vmem:[#allocation11] sm:$0xff] %v2153
    %2193 = vst [vmem:[#allocation11 + $0x8] sm:$0xff] %v2155
    %2194 = vst [vmem:[#allocation11 + $0x10] sm:$0xff] %v2158
    %2195 = vst [vmem:[#allocation11 + $0x18] sm:$0xff] %v2160
    %2196 = vst [vmem:[#allocation11 + $0x20] sm:$0xff] %v2163
    %2197 = vst [vmem:[#allocation11 + $0x28] sm:$0xff] %v2165
    %2198 = vst [vmem:[#allocation11 + $0x30] sm:$0xff] %v2168
    %2199 = vst [vmem:[#allocation11 + $0x38] sm:$0xff] %v2170
    %2200 = vst [vmem:[#allocation11 + $0x40] sm:$0xff] %v2173
    %2201 = vst [vmem:[#allocation11 + $0x48] sm:$0xff] %v2175
    %2202 = vst [vmem:[#allocation11 + $0x50] sm:$0xff] %v2178
    %2203 = vst [vmem:[#allocation11 + $0x58] sm:$0xff] %v2180
    %2204 = vst [vmem:[#allocation11 + $0x60] sm:$0xff] %v2183
    %2205 = vst [vmem:[#allocation11 + $0x68] sm:$0xff] %v2185
    %2206 = vst [vmem:[#allocation11 + $0x70] sm:$0xff] %v2188
    %2207 = vst [vmem:[#allocation11 + $0x78] sm:$0xff] %v2190
    // Predicated region
    $region50: #{tpu_custom_call.1} parent=1 // pred_check
      _
    $region51: #{tpu_custom_call.1} parent=1 // pred_check_branch
      %2209 = sbr.rel (0) target = $region53
    $region52: #{tpu_custom_call.1} parent=1 // pred_region
      %2211 = vsyncadd [#allocation4], 0
      %s2212 = sshll.u32 [#allocation11], 4
      %s2213 = int_to_ptr.vmem [resolvable:$true] %s2212
      %s2214 = sshll.u32 %s7, 4
      %s2215 = int_to_ptr.hbm [resolvable:$true] %s2214
      %2220 = dma.vmem_to_hbm [thread:$0]  %s2213, 2048, %s2215, [#allocation4], 128, 128, 8
    $region53: #{tpu_custom_call.1} parent=1 // pred_fallthru
      _
    // Predicated region
    $region54: #{tpu_custom_call.1} parent=1 // pred_check
      _
    $region55: #{tpu_custom_call.1} parent=1 // pred_check_branch
      %2222 = sbr.rel (0) target = $region57
    $region56: #{tpu_custom_call.1} parent=1 // pred_region
      %2224 = dma.done [#allocation4], 2048
    $region57: #{tpu_custom_call.1} parent=1 // pred_fallthru
      _
    %2225 = vsyncpa [#allocation3], 1
    %2226 = vsyncpa [#allocation6], 1
    %2227 = vsyncpa [#allocation9], 1
    %2228 = vsyncpa [#allocation4], 1

</llo_original>
